<compile_context>
chip_gen: v6e
topology: v6e:2x2x1
jax: 0.10.0
libtpu: 0.0.40
codegen_flags: <defaults>
</compile_context>

<pallas_src>
import math

import jax
import jax.numpy as jnp
from jax import lax
from jax.experimental import pallas as pl
from jax.experimental.pallas import tpu as pltpu


# ----------------------------------------------------------------------------
# Parameter setup (plain JAX glue): gaussian orthogonal random projection matrix
# ----------------------------------------------------------------------------
def _orthogonal_matrix_chunk(key, cols):
    unstructured_block = jax.random.normal(key, (cols, cols), dtype=jnp.float32)
    q, _ = jnp.linalg.qr(unstructured_block)
    return q.T


def gaussian_orthogonal_random_matrix(key, nb_rows, nb_columns, scaling=0):
    nb_full_blocks = nb_rows // nb_columns
    keys = jax.random.split(key, nb_full_blocks + 2)
    block_list = []
    for i in range(nb_full_blocks):
        block_list.append(_orthogonal_matrix_chunk(keys[i], nb_columns))
    remaining_rows = nb_rows - nb_full_blocks * nb_columns
    if remaining_rows > 0:
        q = _orthogonal_matrix_chunk(keys[nb_full_blocks], nb_columns)
        block_list.append(q[:remaining_rows])
    final_matrix = jnp.concatenate(block_list, axis=0)
    if scaling == 0:
        multiplier = jnp.linalg.norm(
            jax.random.normal(keys[-1], (nb_rows, nb_columns), dtype=jnp.float32), axis=1
        )
    elif scaling == 1:
        multiplier = math.sqrt(float(nb_columns)) * jnp.ones((nb_rows,), jnp.float32)
    else:
        raise ValueError(f"Invalid scaling {scaling}")
    return multiplier[:, None] * final_matrix  # == diag(multiplier) @ final_matrix


# ----------------------------------------------------------------------------
# Pallas kernel: one batch (all heads fused) per grid step
# ----------------------------------------------------------------------------
def _fast_attention_kernel(q_ref, v_ref, proj_ref, o_ref):
    # q_ref, v_ref: (1, H, N, D); proj_ref: (M, D); o_ref: (1, H, D, N)
    eps = 1e-4
    _, H, N, D = q_ref.shape
    M = proj_ref.shape[0]
    data_normalizer = float(D) ** (-0.25)
    ratio = float(M) ** (-0.5)

    q = q_ref[0].astype(jnp.float32)          # (H, N, D)
    v = v_ref[0].astype(jnp.float32)          # (H, N, D)   (k = v in the module)
    # Fold the data normalizer into the (tiny) projection operand instead of q/v.
    proj_s = proj_ref[...] * data_normalizer  # (M, D), already f32

    # ---- fused feature-map projection: one (2*H*N, D) x (M, D)^T MXU matmul ----
    qk = jnp.concatenate([q.reshape(H * N, D), v.reshape(H * N, D)], axis=0)
    qk_dash = lax.dot_general(qk, proj_s, (((1,), (1,)), ((), ())),
                              preferred_element_type=jnp.float32)       # (2HN, M)
    q_dash = qk_dash[:H * N].reshape(H, N, M)
    k_dash = qk_dash[H * N:].reshape(H, N, M)

    half_dn2 = 0.5 * data_normalizer * data_normalizer
    q_diag = jnp.sum(q * q, axis=-1, keepdims=True) * half_dn2          # (H, N, 1)
    k_diag = jnp.sum(v * v, axis=-1, keepdims=True) * half_dn2          # (H, N, 1)

    # softmax_kernel: q uses a per-row max; k uses a per-(batch, head) global max.
    q_max = jnp.max(q_dash, axis=-1, keepdims=True)                     # (H, N, 1)
    k_max = jnp.max(jnp.max(k_dash, axis=-1, keepdims=True),
                    axis=-2, keepdims=True)                             # (H, 1, 1)
    q_prime = ratio * (jnp.exp(q_dash - q_diag - q_max) + eps)          # (H, N, M)
    k_prime = ratio * (jnp.exp(k_dash - k_diag - k_max) + eps)          # (H, N, M)

    # ---- per-head linear attention, emitted transposed so stores are lane-dense ----
    for h in range(H):                       # H is small & static -> unrolled
        q_p = q_prime[h]                     # (N, M)
        k_p = k_prime[h]                     # (N, M)
        v_h = v[h]                           # (N, D)

        # context^T = v^T @ k'  -> (D, M)
        ctx_t = lax.dot_general(v_h, k_p, (((0,), (0,)), ((), ())),
                                preferred_element_type=jnp.float32)
        # Append k_cumsum as an extra row so the output matmul also yields the
        # denominator as a lane-dense (1, N) row for free.
        kc_row = jnp.sum(k_p, axis=0, keepdims=True)                    # (1, M)
        ctx_aug = jnp.concatenate([ctx_t, kc_row], axis=0)              # (D+1, M)

        # [out^T ; denom] = ctx_aug @ q'^T  -> (D+1, N)
        out_aug = lax.dot_general(ctx_aug, q_p, (((1,), (1,)), ((), ())),
                                  preferred_element_type=jnp.float32)
        den = out_aug[D:D + 1]                                          # (1, N)
        r = pl.reciprocal(den, approx=True)       # EUP vrcp (its own VLIW slot)
        d_inv = r * (2.0 - den * r)               # one Newton step -> ~f32 accuracy

        o_ref[0, h] = (out_aug[:D] * d_inv).astype(o_ref.dtype)         # (D, N)


def fast_attention(q, v, projection_matrix):
    """q, v: (B, H, N, D); projection_matrix: (M, D). Returns (B, D, H, N)."""
    b, h, n, d = q.shape
    m = projection_matrix.shape[0]

    flops = b * (2 * (2 * h * n) * d * m            # fused projection matmul
                 + h * (2 * n * d * m               # context^T per head
                        + 2 * (d + 1) * m * n))     # output (+denominator) matmul
    cost = pl.CostEstimate(
        flops=flops,
        transcendentals=b * 2 * h * n * m,
        bytes_accessed=4 * (3 * b * h * n * d + m * d),
    )

    out_bhdn = pl.pallas_call(
        _fast_attention_kernel,
        out_shape=jax.ShapeDtypeStruct((b, h, d, n), q.dtype),
        grid_spec=pltpu.PrefetchScalarGridSpec(
            num_scalar_prefetch=0,
            grid=(b,),                              # >= 2 parallel steps (v7x: 2 TCs)
            in_specs=[
                pl.BlockSpec((1, h, n, d), lambda bi: (bi, 0, 0, 0)),
                pl.BlockSpec((1, h, n, d), lambda bi: (bi, 0, 0, 0)),
                pl.BlockSpec((m, d), lambda bi: (0, 0)),
            ],
            out_specs=pl.BlockSpec((1, h, d, n), lambda bi: (bi, 0, 0, 0)),
        ),
        compiler_params=pltpu.CompilerParams(dimension_semantics=("parallel",)),
        cost_estimate=cost,
    )(q, v, projection_matrix)

    # PyTorch: out.permute(0, 3, 1, 2) on (B, H, N, D) == (B, D, H, N).
    # We already emitted (B, H, D, N); only the non-minor axes 1 and 2 swap remains.
    return jnp.transpose(out_bhdn, (0, 2, 1, 3))


# ----------------------------------------------------------------------------
# Pure-JAX reference (mirrors the PyTorch math) for a correctness check
# ----------------------------------------------------------------------------
def _softmax_kernel_ref(data, projection_matrix, is_query, eps=1e-4):
    d = data.shape[-1]
    data_normalizer = d ** (-0.25)
    ratio = projection_matrix.shape[0] ** (-0.5)
    data_dash = jnp.einsum("bhid,jd->bhij", data_normalizer * data, projection_matrix)
    diag_data = (jnp.sum(data ** 2, axis=-1) / 2.0 * data_normalizer ** 2)[..., None]
    if is_query:
        mx = jnp.max(data_dash, axis=-1, keepdims=True)
    else:
        mx = jnp.max(data_dash, axis=(-1, -2), keepdims=True)
    return ratio * (jnp.exp(data_dash - diag_data - mx) + eps)


def _fast_attention_ref(q, v, projection_matrix):
    k = v
    qp = _softmax_kernel_ref(q, projection_matrix, is_query=True)
    kp = _softmax_kernel_ref(k, projection_matrix, is_query=False)
    k_cumsum = kp.sum(axis=-2)
    d_inv = 1.0 / jnp.einsum("bhnd,bhd->bhn", qp, k_cumsum)
    context = jnp.einsum("bhnd,bhne->bhde", kp, v)
    out = jnp.einsum("bhde,bhnd,bhn->bhne", context, qp, d_inv)
    return jnp.transpose(out, (0, 3, 1, 2))


# ----------------------------------------------------------------------------
if __name__ == "__main__":
    # Small shapes consistent with the module: dim_heads=32, nb_features=128
    # (multiple of 128 for full lane utilization), batch=2, heads=4, seq=128.
    B, H, N, D, M = 2, 4, 128, 32, 128

    key = jax.random.PRNGKey(0)
    k_proj, k_q, k_v = jax.random.split(key, 3)

    projection_matrix = gaussian_orthogonal_random_matrix(
        k_proj, nb_rows=M, nb_columns=D, scaling=0
    )
    q = jax.random.normal(k_q, (B, H, N, D), dtype=jnp.float32)
    v = jax.random.normal(k_v, (B, H, N, D), dtype=jnp.float32)

    out = jax.block_until_ready(fast_attention(q, v, projection_matrix))
    ref = jax.block_until_ready(_fast_attention_ref(q, v, projection_matrix))

    assert out.shape == (B, D, H, N), out.shape
    assert jnp.allclose(out, ref, atol=2e-4, rtol=2e-4), float(jnp.max(jnp.abs(out - ref)))

    print("KERNEL_OK")
</pallas_src>

<mosaic_0001>
module attributes {stable_mosaic.version = 11 : i64} {
  func.func @_fast_attention_kernel(%arg0: i32, %arg1: memref<1x4x128x32xf32, #tpu.memory_space<vmem>>, %arg2: memref<1x4x128x32xf32, #tpu.memory_space<vmem>>, %arg3: memref<128x32xf32, #tpu.memory_space<vmem>>, %arg4: memref<1x4x32x128xf32, #tpu.memory_space<vmem>>) attributes {dimension_semantics = [#tpu.dimension_semantics<parallel>], iteration_bounds = array<i64: 2>, scalar_prefetch = 0 : i64, scratch_operands = 0 : i64, tpu.core_type = #tpu.core_type<tc>, window_params = [{transform_indices = @transform_0, window_bounds = array<i64: 1, 4, 128, 32>}, {transform_indices = @transform_1, window_bounds = array<i64: 1, 4, 128, 32>}, {pipeline_mode = #tpu.pipeline_mode<synchronous>, transform_indices = @transform_2, window_bounds = array<i64: 128, 32>}, {transform_indices = @transform_3, window_bounds = array<i64: 1, 4, 32, 128>}]} {
    %c0 = arith.constant 0 : index
    %c0_0 = arith.constant 0 : index
    %c0_1 = arith.constant 0 : index
    %c0_2 = arith.constant 0 : index
    %0 = vector.load %arg1[%c0, %c0_0, %c0_1, %c0_2] : memref<1x4x128x32xf32, #tpu.memory_space<vmem>>, vector<1x4x128x32xf32>
    %1 = vector.shape_cast %0 : vector<1x4x128x32xf32> to vector<4x128x32xf32>
    %c0_3 = arith.constant 0 : index
    %c0_4 = arith.constant 0 : index
    %c0_5 = arith.constant 0 : index
    %c0_6 = arith.constant 0 : index
    %2 = vector.load %arg2[%c0_3, %c0_4, %c0_5, %c0_6] : memref<1x4x128x32xf32, #tpu.memory_space<vmem>>, vector<1x4x128x32xf32>
    %3 = vector.shape_cast %2 : vector<1x4x128x32xf32> to vector<4x128x32xf32>
    %c0_7 = arith.constant 0 : index
    %c0_8 = arith.constant 0 : index
    %4 = vector.load %arg3[%c0_7, %c0_8] : memref<128x32xf32, #tpu.memory_space<vmem>>, vector<128x32xf32>
    %cst = arith.constant 0.420448214 : f32
    %5 = vector.broadcast %cst : f32 to vector<128x32xf32>
    %6 = arith.mulf %4, %5 : vector<128x32xf32>
    %7 = vector.shape_cast %1 : vector<4x128x32xf32> to vector<512x32xf32>
    %8 = vector.shape_cast %3 : vector<4x128x32xf32> to vector<512x32xf32>
    %9 = tpu.concatenate %7, %8 in 0 : vector<512x32xf32>, vector<512x32xf32> -> vector<1024x32xf32>
    %cst_9 = arith.constant dense<0.000000e+00> : vector<1024x128xf32>
    %10 = tpu.matmul %9, %6, %cst_9 {dimension_numbers = #tpu.dot_dimension_numbers<[1], [1], [0], [0], [0, 0, 1, 0], [], []>} : vector<1024x32xf32>, vector<128x32xf32>, vector<1024x128xf32> -> vector<1024x128xf32>
    %11 = vector.extract_strided_slice %10 {offsets = [0, 0], sizes = [512, 128], strides = [1, 1]} : vector<1024x128xf32> to vector<512x128xf32>
    %12 = vector.shape_cast %11 : vector<512x128xf32> to vector<4x128x128xf32>
    %13 = vector.extract_strided_slice %10 {offsets = [512, 0], sizes = [512, 128], strides = [1, 1]} : vector<1024x128xf32> to vector<512x128xf32>
    %14 = vector.shape_cast %13 : vector<512x128xf32> to vector<4x128x128xf32>
    %15 = arith.mulf %1, %1 : vector<4x128x32xf32>
    %cst_10 = arith.constant dense<0.000000e+00> : vector<4x128xf32>
    %16 = vector.multi_reduction <add>, %15, %cst_10 [2] : vector<4x128x32xf32> to vector<4x128xf32>
    %17 = vector.shape_cast %16 : vector<4x128xf32> to vector<4x128x1xf32>
    %cst_11 = arith.constant 0.0883883461 : f32
    %18 = vector.broadcast %cst_11 : f32 to vector<4x128x1xf32>
    %19 = arith.mulf %17, %18 : vector<4x128x1xf32>
    %20 = arith.mulf %3, %3 : vector<4x128x32xf32>
    %cst_12 = arith.constant dense<0.000000e+00> : vector<4x128xf32>
    %21 = vector.multi_reduction <add>, %20, %cst_12 [2] : vector<4x128x32xf32> to vector<4x128xf32>
    %22 = vector.shape_cast %21 : vector<4x128xf32> to vector<4x128x1xf32>
    %cst_13 = arith.constant 0.0883883461 : f32
    %23 = vector.broadcast %cst_13 : f32 to vector<4x128x1xf32>
    %24 = arith.mulf %22, %23 : vector<4x128x1xf32>
    %cst_14 = arith.constant dense<0xFF800000> : vector<4x128xf32>
    %25 = vector.multi_reduction <maximumf>, %12, %cst_14 [2] : vector<4x128x128xf32> to vector<4x128xf32>
    %26 = vector.shape_cast %25 : vector<4x128xf32> to vector<4x128x1xf32>
    %cst_15 = arith.constant dense<0xFF800000> : vector<4x128xf32>
    %27 = vector.multi_reduction <maximumf>, %14, %cst_15 [2] : vector<4x128x128xf32> to vector<4x128xf32>
    %28 = vector.shape_cast %27 : vector<4x128xf32> to vector<4x128x1xf32>
    %cst_16 = arith.constant dense<0xFF800000> : vector<4x1xf32>
    %29 = vector.multi_reduction <maximumf>, %28, %cst_16 [1] : vector<4x128x1xf32> to vector<4x1xf32>
    %30 = vector.shape_cast %29 : vector<4x1xf32> to vector<4x1x1xf32>
    %31 = vector.broadcast %19 : vector<4x128x1xf32> to vector<4x128x128xf32>
    %32 = arith.subf %12, %31 : vector<4x128x128xf32>
    %33 = vector.broadcast %26 : vector<4x128x1xf32> to vector<4x128x128xf32>
    %34 = arith.subf %32, %33 : vector<4x128x128xf32>
    %35 = math.exp %34 : vector<4x128x128xf32>
    %cst_17 = arith.constant 9.99999974E-5 : f32
    %36 = vector.broadcast %cst_17 : f32 to vector<4x128x128xf32>
    %37 = arith.addf %35, %36 : vector<4x128x128xf32>
    %cst_18 = arith.constant 0.0883883461 : f32
    %38 = vector.broadcast %cst_18 : f32 to vector<4x128x128xf32>
    %39 = arith.mulf %38, %37 : vector<4x128x128xf32>
    %40 = vector.broadcast %24 : vector<4x128x1xf32> to vector<4x128x128xf32>
    %41 = arith.subf %14, %40 : vector<4x128x128xf32>
    %42 = vector.broadcast %30 : vector<4x1x1xf32> to vector<4x128x128xf32>
    %43 = arith.subf %41, %42 : vector<4x128x128xf32>
    %44 = math.exp %43 : vector<4x128x128xf32>
    %cst_19 = arith.constant 9.99999974E-5 : f32
    %45 = vector.broadcast %cst_19 : f32 to vector<4x128x128xf32>
    %46 = arith.addf %44, %45 : vector<4x128x128xf32>
    %cst_20 = arith.constant 0.0883883461 : f32
    %47 = vector.broadcast %cst_20 : f32 to vector<4x128x128xf32>
    %48 = arith.mulf %47, %46 : vector<4x128x128xf32>
    %49 = vector.extract_strided_slice %39 {offsets = [0, 0, 0], sizes = [1, 128, 128], strides = [1, 1, 1]} : vector<4x128x128xf32> to vector<1x128x128xf32>
    %50 = vector.shape_cast %49 : vector<1x128x128xf32> to vector<128x128xf32>
    %51 = vector.extract_strided_slice %48 {offsets = [0, 0, 0], sizes = [1, 128, 128], strides = [1, 1, 1]} : vector<4x128x128xf32> to vector<1x128x128xf32>
    %52 = vector.shape_cast %51 : vector<1x128x128xf32> to vector<128x128xf32>
    %53 = vector.extract_strided_slice %3 {offsets = [0, 0, 0], sizes = [1, 128, 32], strides = [1, 1, 1]} : vector<4x128x32xf32> to vector<1x128x32xf32>
    %54 = vector.shape_cast %53 : vector<1x128x32xf32> to vector<128x32xf32>
    %cst_21 = arith.constant dense<0.000000e+00> : vector<32x128xf32>
    %55 = tpu.matmul %54, %52, %cst_21 {dimension_numbers = #tpu.dot_dimension_numbers<[0], [0], [1], [1], [0, 1, 1, 1], [], []>} : vector<128x32xf32>, vector<128x128xf32>, vector<32x128xf32> -> vector<32x128xf32>
    %cst_22 = arith.constant dense<0.000000e+00> : vector<128xf32>
    %56 = vector.multi_reduction <add>, %52, %cst_22 [0] : vector<128x128xf32> to vector<128xf32>
    %57 = vector.shape_cast %56 : vector<128xf32> to vector<1x128xf32>
    %58 = tpu.concatenate %55, %57 in 0 : vector<32x128xf32>, vector<1x128xf32> -> vector<33x128xf32>
    %cst_23 = arith.constant dense<0.000000e+00> : vector<33x128xf32>
    %59 = tpu.matmul %58, %50, %cst_23 {dimension_numbers = #tpu.dot_dimension_numbers<[1], [1], [0], [0], [0, 0, 1, 0], [], []>} : vector<33x128xf32>, vector<128x128xf32>, vector<33x128xf32> -> vector<33x128xf32>
    %60 = vector.extract_strided_slice %59 {offsets = [32, 0], sizes = [1, 128], strides = [1, 1]} : vector<33x128xf32> to vector<1x128xf32>
    %61 = tpu.reciprocal %60 {approx = true} : vector<1x128xf32> -> vector<1x128xf32>
    %62 = arith.mulf %60, %61 : vector<1x128xf32>
    %cst_24 = arith.constant 2.000000e+00 : f32
    %63 = vector.broadcast %cst_24 : f32 to vector<1x128xf32>
    %64 = arith.subf %63, %62 : vector<1x128xf32>
    %65 = arith.mulf %61, %64 : vector<1x128xf32>
    %66 = vector.extract_strided_slice %59 {offsets = [0, 0], sizes = [32, 128], strides = [1, 1]} : vector<33x128xf32> to vector<32x128xf32>
    %67 = vector.broadcast %65 : vector<1x128xf32> to vector<32x128xf32>
    %68 = arith.mulf %66, %67 : vector<32x128xf32>
    %c0_25 = arith.constant 0 : index
    %c0_26 = arith.constant 0 : index
    %c0_27 = arith.constant 0 : index
    %c0_28 = arith.constant 0 : index
    %69 = vector.load %arg4[%c0_25, %c0_26, %c0_27, %c0_28] : memref<1x4x32x128xf32, #tpu.memory_space<vmem>>, vector<1x1x32x128xf32>
    %70 = vector.shape_cast %69 : vector<1x1x32x128xf32> to vector<32x128xf32>
    %71 = vector.shape_cast %68 : vector<32x128xf32> to vector<1x1x32x128xf32>
    tpu.vector_store %arg4[%c0_25, %c0_26, %c0_27, %c0_28], %71 {strides = array<i32>} : memref<1x4x32x128xf32, #tpu.memory_space<vmem>>, vector<1x1x32x128xf32>,
    %72 = vector.extract_strided_slice %39 {offsets = [1, 0, 0], sizes = [1, 128, 128], strides = [1, 1, 1]} : vector<4x128x128xf32> to vector<1x128x128xf32>
    %73 = vector.shape_cast %72 : vector<1x128x128xf32> to vector<128x128xf32>
    %74 = vector.extract_strided_slice %48 {offsets = [1, 0, 0], sizes = [1, 128, 128], strides = [1, 1, 1]} : vector<4x128x128xf32> to vector<1x128x128xf32>
    %75 = vector.shape_cast %74 : vector<1x128x128xf32> to vector<128x128xf32>
    %76 = vector.extract_strided_slice %3 {offsets = [1, 0, 0], sizes = [1, 128, 32], strides = [1, 1, 1]} : vector<4x128x32xf32> to vector<1x128x32xf32>
    %77 = vector.shape_cast %76 : vector<1x128x32xf32> to vector<128x32xf32>
    %cst_29 = arith.constant dense<0.000000e+00> : vector<32x128xf32>
    %78 = tpu.matmul %77, %75, %cst_29 {dimension_numbers = #tpu.dot_dimension_numbers<[0], [0], [1], [1], [0, 1, 1, 1], [], []>} : vector<128x32xf32>, vector<128x128xf32>, vector<32x128xf32> -> vector<32x128xf32>
    %cst_30 = arith.constant dense<0.000000e+00> : vector<128xf32>
    %79 = vector.multi_reduction <add>, %75, %cst_30 [0] : vector<128x128xf32> to vector<128xf32>
    %80 = vector.shape_cast %79 : vector<128xf32> to vector<1x128xf32>
    %81 = tpu.concatenate %78, %80 in 0 : vector<32x128xf32>, vector<1x128xf32> -> vector<33x128xf32>
    %cst_31 = arith.constant dense<0.000000e+00> : vector<33x128xf32>
    %82 = tpu.matmul %81, %73, %cst_31 {dimension_numbers = #tpu.dot_dimension_numbers<[1], [1], [0], [0], [0, 0, 1, 0], [], []>} : vector<33x128xf32>, vector<128x128xf32>, vector<33x128xf32> -> vector<33x128xf32>
    %83 = vector.extract_strided_slice %82 {offsets = [32, 0], sizes = [1, 128], strides = [1, 1]} : vector<33x128xf32> to vector<1x128xf32>
    %84 = tpu.reciprocal %83 {approx = true} : vector<1x128xf32> -> vector<1x128xf32>
    %85 = arith.mulf %83, %84 : vector<1x128xf32>
    %cst_32 = arith.constant 2.000000e+00 : f32
    %86 = vector.broadcast %cst_32 : f32 to vector<1x128xf32>
    %87 = arith.subf %86, %85 : vector<1x128xf32>
    %88 = arith.mulf %84, %87 : vector<1x128xf32>
    %89 = vector.extract_strided_slice %82 {offsets = [0, 0], sizes = [32, 128], strides = [1, 1]} : vector<33x128xf32> to vector<32x128xf32>
    %90 = vector.broadcast %88 : vector<1x128xf32> to vector<32x128xf32>
    %91 = arith.mulf %89, %90 : vector<32x128xf32>
    %c0_33 = arith.constant 0 : index
    %c1 = arith.constant 1 : index
    %c0_34 = arith.constant 0 : index
    %c0_35 = arith.constant 0 : index
    %92 = vector.load %arg4[%c0_33, %c1, %c0_34, %c0_35] : memref<1x4x32x128xf32, #tpu.memory_space<vmem>>, vector<1x1x32x128xf32>
    %93 = vector.shape_cast %92 : vector<1x1x32x128xf32> to vector<32x128xf32>
    %94 = vector.shape_cast %91 : vector<32x128xf32> to vector<1x1x32x128xf32>
    tpu.vector_store %arg4[%c0_33, %c1, %c0_34, %c0_35], %94 {strides = array<i32>} : memref<1x4x32x128xf32, #tpu.memory_space<vmem>>, vector<1x1x32x128xf32>,
    %95 = vector.extract_strided_slice %39 {offsets = [2, 0, 0], sizes = [1, 128, 128], strides = [1, 1, 1]} : vector<4x128x128xf32> to vector<1x128x128xf32>
    %96 = vector.shape_cast %95 : vector<1x128x128xf32> to vector<128x128xf32>
    %97 = vector.extract_strided_slice %48 {offsets = [2, 0, 0], sizes = [1, 128, 128], strides = [1, 1, 1]} : vector<4x128x128xf32> to vector<1x128x128xf32>
    %98 = vector.shape_cast %97 : vector<1x128x128xf32> to vector<128x128xf32>
    %99 = vector.extract_strided_slice %3 {offsets = [2, 0, 0], sizes = [1, 128, 32], strides = [1, 1, 1]} : vector<4x128x32xf32> to vector<1x128x32xf32>
    %100 = vector.shape_cast %99 : vector<1x128x32xf32> to vector<128x32xf32>
    %cst_36 = arith.constant dense<0.000000e+00> : vector<32x128xf32>
    %101 = tpu.matmul %100, %98, %cst_36 {dimension_numbers = #tpu.dot_dimension_numbers<[0], [0], [1], [1], [0, 1, 1, 1], [], []>} : vector<128x32xf32>, vector<128x128xf32>, vector<32x128xf32> -> vector<32x128xf32>
    %cst_37 = arith.constant dense<0.000000e+00> : vector<128xf32>
    %102 = vector.multi_reduction <add>, %98, %cst_37 [0] : vector<128x128xf32> to vector<128xf32>
    %103 = vector.shape_cast %102 : vector<128xf32> to vector<1x128xf32>
    %104 = tpu.concatenate %101, %103 in 0 : vector<32x128xf32>, vector<1x128xf32> -> vector<33x128xf32>
    %cst_38 = arith.constant dense<0.000000e+00> : vector<33x128xf32>
    %105 = tpu.matmul %104, %96, %cst_38 {dimension_numbers = #tpu.dot_dimension_numbers<[1], [1], [0], [0], [0, 0, 1, 0], [], []>} : vector<33x128xf32>, vector<128x128xf32>, vector<33x128xf32> -> vector<33x128xf32>
    %106 = vector.extract_strided_slice %105 {offsets = [32, 0], sizes = [1, 128], strides = [1, 1]} : vector<33x128xf32> to vector<1x128xf32>
    %107 = tpu.reciprocal %106 {approx = true} : vector<1x128xf32> -> vector<1x128xf32>
    %108 = arith.mulf %106, %107 : vector<1x128xf32>
    %cst_39 = arith.constant 2.000000e+00 : f32
    %109 = vector.broadcast %cst_39 : f32 to vector<1x128xf32>
    %110 = arith.subf %109, %108 : vector<1x128xf32>
    %111 = arith.mulf %107, %110 : vector<1x128xf32>
    %112 = vector.extract_strided_slice %105 {offsets = [0, 0], sizes = [32, 128], strides = [1, 1]} : vector<33x128xf32> to vector<32x128xf32>
    %113 = vector.broadcast %111 : vector<1x128xf32> to vector<32x128xf32>
    %114 = arith.mulf %112, %113 : vector<32x128xf32>
    %c0_40 = arith.constant 0 : index
    %c2 = arith.constant 2 : index
    %c0_41 = arith.constant 0 : index
    %c0_42 = arith.constant 0 : index
    %115 = vector.load %arg4[%c0_40, %c2, %c0_41, %c0_42] : memref<1x4x32x128xf32, #tpu.memory_space<vmem>>, vector<1x1x32x128xf32>
    %116 = vector.shape_cast %115 : vector<1x1x32x128xf32> to vector<32x128xf32>
    %117 = vector.shape_cast %114 : vector<32x128xf32> to vector<1x1x32x128xf32>
    tpu.vector_store %arg4[%c0_40, %c2, %c0_41, %c0_42], %117 {strides = array<i32>} : memref<1x4x32x128xf32, #tpu.memory_space<vmem>>, vector<1x1x32x128xf32>,
    %118 = vector.extract_strided_slice %39 {offsets = [3, 0, 0], sizes = [1, 128, 128], strides = [1, 1, 1]} : vector<4x128x128xf32> to vector<1x128x128xf32>
    %119 = vector.shape_cast %118 : vector<1x128x128xf32> to vector<128x128xf32>
    %120 = vector.extract_strided_slice %48 {offsets = [3, 0, 0], sizes = [1, 128, 128], strides = [1, 1, 1]} : vector<4x128x128xf32> to vector<1x128x128xf32>
    %121 = vector.shape_cast %120 : vector<1x128x128xf32> to vector<128x128xf32>
    %122 = vector.extract_strided_slice %3 {offsets = [3, 0, 0], sizes = [1, 128, 32], strides = [1, 1, 1]} : vector<4x128x32xf32> to vector<1x128x32xf32>
    %123 = vector.shape_cast %122 : vector<1x128x32xf32> to vector<128x32xf32>
    %cst_43 = arith.constant dense<0.000000e+00> : vector<32x128xf32>
    %124 = tpu.matmul %123, %121, %cst_43 {dimension_numbers = #tpu.dot_dimension_numbers<[0], [0], [1], [1], [0, 1, 1, 1], [], []>} : vector<128x32xf32>, vector<128x128xf32>, vector<32x128xf32> -> vector<32x128xf32>
    %cst_44 = arith.constant dense<0.000000e+00> : vector<128xf32>
    %125 = vector.multi_reduction <add>, %121, %cst_44 [0] : vector<128x128xf32> to vector<128xf32>
    %126 = vector.shape_cast %125 : vector<128xf32> to vector<1x128xf32>
    %127 = tpu.concatenate %124, %126 in 0 : vector<32x128xf32>, vector<1x128xf32> -> vector<33x128xf32>
    %cst_45 = arith.constant dense<0.000000e+00> : vector<33x128xf32>
    %128 = tpu.matmul %127, %119, %cst_45 {dimension_numbers = #tpu.dot_dimension_numbers<[1], [1], [0], [0], [0, 0, 1, 0], [], []>} : vector<33x128xf32>, vector<128x128xf32>, vector<33x128xf32> -> vector<33x128xf32>
    %129 = vector.extract_strided_slice %128 {offsets = [32, 0], sizes = [1, 128], strides = [1, 1]} : vector<33x128xf32> to vector<1x128xf32>
    %130 = tpu.reciprocal %129 {approx = true} : vector<1x128xf32> -> vector<1x128xf32>
    %131 = arith.mulf %129, %130 : vector<1x128xf32>
    %cst_46 = arith.constant 2.000000e+00 : f32
    %132 = vector.broadcast %cst_46 : f32 to vector<1x128xf32>
    %133 = arith.subf %132, %131 : vector<1x128xf32>
    %134 = arith.mulf %130, %133 : vector<1x128xf32>
    %135 = vector.extract_strided_slice %128 {offsets = [0, 0], sizes = [32, 128], strides = [1, 1]} : vector<33x128xf32> to vector<32x128xf32>
    %136 = vector.broadcast %134 : vector<1x128xf32> to vector<32x128xf32>
    %137 = arith.mulf %135, %136 : vector<32x128xf32>
    %c0_47 = arith.constant 0 : index
    %c3 = arith.constant 3 : index
    %c0_48 = arith.constant 0 : index
    %c0_49 = arith.constant 0 : index
    %138 = vector.load %arg4[%c0_47, %c3, %c0_48, %c0_49] : memref<1x4x32x128xf32, #tpu.memory_space<vmem>>, vector<1x1x32x128xf32>
    %139 = vector.shape_cast %138 : vector<1x1x32x128xf32> to vector<32x128xf32>
    %140 = vector.shape_cast %137 : vector<32x128xf32> to vector<1x1x32x128xf32>
    tpu.vector_store %arg4[%c0_47, %c3, %c0_48, %c0_49], %140 {strides = array<i32>} : memref<1x4x32x128xf32, #tpu.memory_space<vmem>>, vector<1x1x32x128xf32>,
    return
  }
  func.func @transform_0(%arg0: i32) -> (i32, i32, i32, i32) {
    %c0_i32 = arith.constant 0 : i32
    %c0_i32_0 = arith.constant 0 : i32
    %c0_i32_1 = arith.constant 0 : i32
    %c0_i32_2 = arith.constant 0 : i32
    return %arg0, %c0_i32, %c0_i32_0, %c0_i32_1 : i32, i32, i32, i32
  }
  func.func @transform_1(%arg0: i32) -> (i32, i32, i32, i32) {
    %c0_i32 = arith.constant 0 : i32
    %c0_i32_0 = arith.constant 0 : i32
    %c0_i32_1 = arith.constant 0 : i32
    %c0_i32_2 = arith.constant 0 : i32
    return %arg0, %c0_i32, %c0_i32_0, %c0_i32_1 : i32, i32, i32, i32
  }
  func.func @transform_2(%arg0: i32) -> (i32, i32) {
    %c0_i32 = arith.constant 0 : i32
    %c0_i32_0 = arith.constant 0 : i32
    %c0_i32_1 = arith.constant 0 : i32
    return %c0_i32, %c0_i32_0 : i32, i32
  }
  func.func @transform_3(%arg0: i32) -> (i32, i32, i32, i32) {
    %c0_i32 = arith.constant 0 : i32
    %c0_i32_0 = arith.constant 0 : i32
    %c0_i32_1 = arith.constant 0 : i32
    %c0_i32_2 = arith.constant 0 : i32
    return %arg0, %c0_i32, %c0_i32_0, %c0_i32_1 : i32, i32, i32, i32
  }
}

</mosaic_0001>

<llo_original>
// kernel: tpu_custom_call.1
$region0: #{tpu_custom_call.1}
  #allocation0 [shape = 'u32[]', space=smem, size = 0x4, offset = 0x4, fixed_abs, tag = 'smem constant byte address 0x4 - core index']
  #allocation1 [shape = 'u32[144,128]{1,0:T(1,128)}', space=vmem, size = 0x12000, scoped, tag = 'internal scratch']
  %s0 = inlined_call_operand.vmem [shape: f32[2,4,128,32], index: 0, kind: input, shape index: {}]
  %s1 = inlined_call_operand.vmem [shape: f32[2,4,128,32], index: 1, kind: input, shape index: {}]
  %s2 = inlined_call_operand.vmem [shape: f32[128,32], index: 2, kind: input, shape index: {}]
  %s3 = inlined_call_operand.hbm [shape: f32[2,4,32,128], index: 3, kind: output, shape index: {}]
  %s4 = sld [smem:[#allocation0]]
  $region45: #{tpu_custom_call.1} parent=0
    _
  %s6 = ssub.s32 1, %s4
  %s7 = scalar_select 0, %s6, %s4
  $region1: #{tpu_custom_call.1} parent=0
    #allocation2 [shape = 'u8[131072]{0}', space=vmem, size = 0x20000, scoped, tag = 'output window, operand 0']
    #allocation3 [shape = 's32[2]{0}', space=sflag, size = 0x8, scoped, tag = 'scoped memory for tpu_custom_call.1']
    %8 = vsyncpa [#allocation3], 0
    %s9 = scalar_lea.sflag [#allocation3], 1
    %10 = vsyncpa %s9, 0
    loop: start=0, step=1, limit=4
    $region2: #{tpu_custom_call.1} parent=1 // loop_pre_header
      _
    $region3: #{tpu_custom_call.1} parent=1 // loop_header
      %s12 = sphi 0, %s16
      %p13 = scmp.ge.s32.totalorder %s12, 4
      %s22 = sphi 0, %s24
      %s25 = sphi 0, %s22
      %s26 = sphi 0, %s25
      %s42 = sphi 0, %s26
      %s48 = sphi 0, %s50
      %s51 = sphi 0, %s48
      %s52 = sphi 0, %s51
      %s68 = sphi 0, %s52
      %s72 = sphi 0, %s72
      %s74 = sphi 0, %s72
      %s75 = sphi 0, %s74
      %s89 = sphi 0, %s75
      %s95 = sphi 0, %s97
      %s98 = sphi 0, %s95
      %s99 = sphi 0, %s98
      %s115 = sphi 0, %s99
    $region4: #{tpu_custom_call.1} parent=1 // loop_header_branch
      %15 = sbr.rel (%p13) target = $region8
    $region5: #{tpu_custom_call.1} parent=1 // loop_body
      %s17 = ssub.s32 %s12, 1
      %s18 = ssub.s32 %s12, 2
      %s19 = sadd.s32 %s12, 1
      %s20 = ssub.s32 %s12, %s19
      %p21 = scmp.eq.s32.totalorder %s20, 0
      %s23 = sadd.s32 %s22, 1
      %s24 = scalar_select %p21, %s22, %s23
      %p27 = pneg %p21
      %p28 = scmp.eq.s32.totalorder %s12, 1
      %p29 = por %p27, %p28
      %p30 = scmp.ne.s32.totalorder %s22, %s25
      %p31 = scmp.eq.s32.totalorder %s12, 0
      %p32 = por %p30, %p31
      %p33 = scmp.ne.s32.totalorder %s22, %s25
      %p34 = scmp.eq.s32.totalorder %s17, 1
      %p35 = por %p33, %p34
      %p36 = scmp.ne.s32.totalorder %s25, %s26
      %p37 = scmp.eq.s32.totalorder %s17, 0
      %p38 = por %p36, %p37
      %p39 = scmp.ne.s32.totalorder %s25, %s26
      %p40 = scmp.eq.s32.totalorder %s18, 1
      %p41 = por %p39, %p40
      %p43 = scmp.ne.s32.totalorder %s26, %s42
      %p44 = scmp.eq.s32.totalorder %s18, 0
      %p45 = por %p43, %p44
      %s46 = ssub.s32 %s12, %s19
      %p47 = scmp.eq.s32.totalorder %s46, 0
      %s49 = sadd.s32 %s48, 1
      %s50 = scalar_select %p47, %s48, %s49
      %p53 = pneg %p47
      %p54 = scmp.eq.s32.totalorder %s12, 1
      %p55 = por %p53, %p54
      %p56 = scmp.ne.s32.totalorder %s48, %s51
      %p57 = scmp.eq.s32.totalorder %s12, 0
      %p58 = por %p56, %p57
      %p59 = scmp.ne.s32.totalorder %s48, %s51
      %p60 = scmp.eq.s32.totalorder %s17, 1
      %p61 = por %p59, %p60
      %p62 = scmp.ne.s32.totalorder %s51, %s52
      %p63 = scmp.eq.s32.totalorder %s17, 0
      %p64 = por %p62, %p63
      %p65 = scmp.ne.s32.totalorder %s51, %s52
      %p66 = scmp.eq.s32.totalorder %s18, 1
      %p67 = por %p65, %p66
      %p69 = scmp.ne.s32.totalorder %s52, %s68
      %p70 = scmp.eq.s32.totalorder %s18, 0
      %p71 = por %p69, %p70
      %s73 = sadd.s32 %s72, 1
      %p76 = scmp.eq.s32.totalorder %s12, 1
      %p77 = scmp.ne.s32.totalorder %s72, %s74
      %p78 = scmp.eq.s32.totalorder %s12, 0
      %p79 = por %p77, %p78
      %p80 = scmp.ne.s32.totalorder %s72, %s74
      %p81 = scmp.eq.s32.totalorder %s17, 1
      %p82 = por %p80, %p81
      %p83 = scmp.ne.s32.totalorder %s74, %s75
      %p84 = scmp.eq.s32.totalorder %s17, 0
      %p85 = por %p83, %p84
      %p86 = scmp.ne.s32.totalorder %s74, %s75
      %p87 = scmp.eq.s32.totalorder %s18, 1
      %p88 = por %p86, %p87
      %p90 = scmp.ne.s32.totalorder %s75, %s89
      %p91 = scmp.eq.s32.totalorder %s18, 0
      %p92 = por %p90, %p91
      %s93 = ssub.s32 %s12, %s19
      %p94 = scmp.eq.s32.totalorder %s93, 0
      %s96 = sadd.s32 %s95, 1
      %s97 = scalar_select %p94, %s95, %s96
      %p100 = pneg %p94
      %p101 = scmp.eq.s32.totalorder %s12, 1
      %p102 = por %p100, %p101
      %p103 = scmp.ne.s32.totalorder %s95, %s98
      %p104 = scmp.eq.s32.totalorder %s12, 0
      %p105 = por %p103, %p104
      %p106 = scmp.ne.s32.totalorder %s95, %s98
      %p107 = scmp.eq.s32.totalorder %s17, 1
      %p108 = por %p106, %p107
      %p109 = scmp.ne.s32.totalorder %s98, %s99
      %p110 = scmp.eq.s32.totalorder %s17, 0
      %p111 = por %p109, %p110
      %p112 = scmp.ne.s32.totalorder %s98, %s99
      %p113 = scmp.eq.s32.totalorder %s18, 1
      %p114 = por %p112, %p113
      %p116 = scmp.ne.s32.totalorder %s99, %s115
      %p117 = scmp.eq.s32.totalorder %s18, 0
      %p118 = por %p116, %p117
      %p119 = scmp.le.s32.totalorder 1, %s12
      %p120 = scmp.lt.s32.totalorder %s12, 3
      %p121 = pnand %p119, %p120
      %p122 = pneg %p121
      // Predicated region
      $region9: #{tpu_custom_call.1} parent=5 // pred_check
        _
      $region10: #{tpu_custom_call.1} parent=5 // pred_check_branch
        %124 = sbr.rel (%p121) target = $region12
      $region11: #{tpu_custom_call.1} parent=5 // pred_region
        %s125 = ssub.s32 %s12, 1
        // Predicated region
        $region13: #{tpu_custom_call.1} parent=11 // pred_check
          %p126 = pneg %p85
        $region14: #{tpu_custom_call.1} parent=11 // pred_check_branch
          %128 = sbr.rel (%p126) target = $region16
        $region15: #{tpu_custom_call.1} parent=11 // pred_region
          _
        $region16: #{tpu_custom_call.1} parent=11 // pred_fallthru
          _
      $region12: #{tpu_custom_call.1} parent=5 // pred_fallthru
        _
      %p129 = scmp.lt.s32.totalorder %s12, 2
      // Predicated region
      $region17: #{tpu_custom_call.1} parent=5 // pred_check
        %p130 = pneg %p129
      $region18: #{tpu_custom_call.1} parent=5 // pred_check_branch
        %132 = sbr.rel (%p130) target = $region20
      $region19: #{tpu_custom_call.1} parent=5 // pred_region
        // Predicated region
        $region21: #{tpu_custom_call.1} parent=19 // pred_check
          %p133 = pneg %p32
        $region22: #{tpu_custom_call.1} parent=19 // pred_check_branch
          %135 = sbr.rel (%p133) target = $region24
        $region23: #{tpu_custom_call.1} parent=19 // pred_region
          %p136 = scmp.lt.s32.totalorder %s12, 1
          %s137 = scalar_select %p136, %s12, 1
          %s138 = smul.addr %s137, 64
          %s139 = smul.addr %s138, 8
          %s140 = scalar_lea.vmem %s0, %s139
        $region24: #{tpu_custom_call.1} parent=19 // pred_fallthru
          _
        // Predicated region
        $region25: #{tpu_custom_call.1} parent=19 // pred_check
          %p141 = pneg %p58
        $region26: #{tpu_custom_call.1} parent=19 // pred_check_branch
          %143 = sbr.rel (%p141) target = $region28
        $region27: #{tpu_custom_call.1} parent=19 // pred_region
          %p144 = scmp.lt.s32.totalorder %s12, 1
          %s145 = scalar_select %p144, %s12, 1
          %s146 = smul.addr %s145, 64
          %s147 = smul.addr %s146, 8
          %s148 = scalar_lea.vmem %s1, %s147
        $region28: #{tpu_custom_call.1} parent=19 // pred_fallthru
          _
      $region20: #{tpu_custom_call.1} parent=5 // pred_fallthru
        _
      %p149 = scmp.le.s32.totalorder 1, %s12
      %p150 = scmp.lt.s32.totalorder %s12, 3
      %p151 = pnand %p149, %p150
      %p152 = pneg %p151
      // Predicated region
      $region29: #{tpu_custom_call.1} parent=5 // pred_check
        _
      $region30: #{tpu_custom_call.1} parent=5 // pred_check_branch
        %154 = sbr.rel (%p151) target = $region32
      $region31: #{tpu_custom_call.1} parent=5 // pred_region
        %s155 = ssub.s32 %s12, 1
        %p156 = scmp.lt.s32.totalorder %s17, 1
        %s157 = scalar_select %p156, %s17, 1
        %s158 = smul.addr %s157, 64
        %s159 = smul.addr %s158, 8
        %s160 = scalar_lea.vmem %s0, %s159
        %p161 = pneg %p38
        %p162 = pneg %p35
        %p163 = scmp.lt.s32.totalorder %s17, 1
        %s164 = scalar_select %p163, %s17, 1
        %s165 = smul.addr %s164, 64
        %s166 = smul.addr %s165, 8
        %s167 = scalar_lea.vmem %s1, %s166
        %p168 = pneg %p64
        %p169 = pneg %p61
        %p170 = pneg %p85
        %p171 = pneg %p82
        %p172 = pneg %p111
        %p173 = pneg %p108
        %s174 = sand.u32 %s98, 1
        %s175 = scalar_lea.sflag [#allocation3], %s174
        %s176 = sand.u32 %s98, 1
        %s177 = smul.addr %s176, 128
        %s178 = scalar_lea.vmem [#allocation2], %s177
        %p179 = scmp.lt.s32.totalorder %s17, 1
        %s180 = scalar_select %p179, %s17, 1
        %s181 = smul.addr %s180, 64
        %s182 = smul.addr %s181, 8
        %s183 = scalar_lea.vmem %s0, %s182
        %p184 = scmp.lt.s32.totalorder %s17, 1
        %s185 = scalar_select %p184, %s17, 1
        %s186 = smul.addr %s185, 64
        %s187 = smul.addr %s186, 8
        %s188 = scalar_lea.vmem %s1, %s187
        %v189 = vld [vmem:[%s183] sm:$0xff]
        %v190 = vld [vmem:[%s183 + $0x8] sm:$0xff]
        %v191 = vld [vmem:[%s183 + $0x10] sm:$0xff]
        %v192 = vld [vmem:[%s183 + $0x18] sm:$0xff]
        %v193 = vld [vmem:[%s183 + $0x20] sm:$0xff]
        %v194 = vld [vmem:[%s183 + $0x28] sm:$0xff]
        %v195 = vld [vmem:[%s183 + $0x30] sm:$0xff]
        %v196 = vld [vmem:[%s183 + $0x38] sm:$0xff]
        %v197 = vld [vmem:[%s183 + $0x40] sm:$0xff]
        %v198 = vld [vmem:[%s183 + $0x48] sm:$0xff]
        %v199 = vld [vmem:[%s183 + $0x50] sm:$0xff]
        %v200 = vld [vmem:[%s183 + $0x58] sm:$0xff]
        %v201 = vld [vmem:[%s183 + $0x60] sm:$0xff]
        %v202 = vld [vmem:[%s183 + $0x68] sm:$0xff]
        %v203 = vld [vmem:[%s183 + $0x70] sm:$0xff]
        %v204 = vld [vmem:[%s183 + $0x78] sm:$0xff]
        %v205 = vld [vmem:[%s183 + $0x80] sm:$0xff]
        %v206 = vld [vmem:[%s183 + $0x88] sm:$0xff]
        %v207 = vld [vmem:[%s183 + $0x90] sm:$0xff]
        %v208 = vld [vmem:[%s183 + $0x98] sm:$0xff]
        %v209 = vld [vmem:[%s183 + $0xa0] sm:$0xff]
        %v210 = vld [vmem:[%s183 + $0xa8] sm:$0xff]
        %v211 = vld [vmem:[%s183 + $0xb0] sm:$0xff]
        %v212 = vld [vmem:[%s183 + $0xb8] sm:$0xff]
        %v213 = vld [vmem:[%s183 + $0xc0] sm:$0xff]
        %v214 = vld [vmem:[%s183 + $0xc8] sm:$0xff]
        %v215 = vld [vmem:[%s183 + $0xd0] sm:$0xff]
        %v216 = vld [vmem:[%s183 + $0xd8] sm:$0xff]
        %v217 = vld [vmem:[%s183 + $0xe0] sm:$0xff]
        %v218 = vld [vmem:[%s183 + $0xe8] sm:$0xff]
        %v219 = vld [vmem:[%s183 + $0xf0] sm:$0xff]
        %v220 = vld [vmem:[%s183 + $0xf8] sm:$0xff]
        %v221 = vld [vmem:[%s183 + $0x100] sm:$0xff]
        %v222 = vld [vmem:[%s183 + $0x108] sm:$0xff]
        %v223 = vld [vmem:[%s183 + $0x110] sm:$0xff]
        %v224 = vld [vmem:[%s183 + $0x118] sm:$0xff]
        %v225 = vld [vmem:[%s183 + $0x120] sm:$0xff]
        %v226 = vld [vmem:[%s183 + $0x128] sm:$0xff]
        %v227 = vld [vmem:[%s183 + $0x130] sm:$0xff]
        %v228 = vld [vmem:[%s183 + $0x138] sm:$0xff]
        %v229 = vld [vmem:[%s183 + $0x140] sm:$0xff]
        %v230 = vld [vmem:[%s183 + $0x148] sm:$0xff]
        %v231 = vld [vmem:[%s183 + $0x150] sm:$0xff]
        %v232 = vld [vmem:[%s183 + $0x158] sm:$0xff]
        %v233 = vld [vmem:[%s183 + $0x160] sm:$0xff]
        %v234 = vld [vmem:[%s183 + $0x168] sm:$0xff]
        %v235 = vld [vmem:[%s183 + $0x170] sm:$0xff]
        %v236 = vld [vmem:[%s183 + $0x178] sm:$0xff]
        %v237 = vld [vmem:[%s183 + $0x180] sm:$0xff]
        %v238 = vld [vmem:[%s183 + $0x188] sm:$0xff]
        %v239 = vld [vmem:[%s183 + $0x190] sm:$0xff]
        %v240 = vld [vmem:[%s183 + $0x198] sm:$0xff]
        %v241 = vld [vmem:[%s183 + $0x1a0] sm:$0xff]
        %v242 = vld [vmem:[%s183 + $0x1a8] sm:$0xff]
        %v243 = vld [vmem:[%s183 + $0x1b0] sm:$0xff]
        %v244 = vld [vmem:[%s183 + $0x1b8] sm:$0xff]
        %v245 = vld [vmem:[%s183 + $0x1c0] sm:$0xff]
        %v246 = vld [vmem:[%s183 + $0x1c8] sm:$0xff]
        %v247 = vld [vmem:[%s183 + $0x1d0] sm:$0xff]
        %v248 = vld [vmem:[%s183 + $0x1d8] sm:$0xff]
        %v249 = vld [vmem:[%s183 + $0x1e0] sm:$0xff]
        %v250 = vld [vmem:[%s183 + $0x1e8] sm:$0xff]
        %v251 = vld [vmem:[%s183 + $0x1f0] sm:$0xff]
        %v252 = vld [vmem:[%s183 + $0x1f8] sm:$0xff]
        %v253 = vld [vmem:[%s188] sm:$0xff]
        %v254 = vld [vmem:[%s188 + $0x8] sm:$0xff]
        %v255 = vld [vmem:[%s188 + $0x10] sm:$0xff]
        %v256 = vld [vmem:[%s188 + $0x18] sm:$0xff]
        %v257 = vld [vmem:[%s188 + $0x20] sm:$0xff]
        %v258 = vld [vmem:[%s188 + $0x28] sm:$0xff]
        %v259 = vld [vmem:[%s188 + $0x30] sm:$0xff]
        %v260 = vld [vmem:[%s188 + $0x38] sm:$0xff]
        %v261 = vld [vmem:[%s188 + $0x40] sm:$0xff]
        %v262 = vld [vmem:[%s188 + $0x48] sm:$0xff]
        %v263 = vld [vmem:[%s188 + $0x50] sm:$0xff]
        %v264 = vld [vmem:[%s188 + $0x58] sm:$0xff]
        %v265 = vld [vmem:[%s188 + $0x60] sm:$0xff]
        %v266 = vld [vmem:[%s188 + $0x68] sm:$0xff]
        %v267 = vld [vmem:[%s188 + $0x70] sm:$0xff]
        %v268 = vld [vmem:[%s188 + $0x78] sm:$0xff]
        %v269 = vld [vmem:[%s188 + $0x80] sm:$0xff]
        %v270 = vld [vmem:[%s188 + $0x88] sm:$0xff]
        %v271 = vld [vmem:[%s188 + $0x90] sm:$0xff]
        %v272 = vld [vmem:[%s188 + $0x98] sm:$0xff]
        %v273 = vld [vmem:[%s188 + $0xa0] sm:$0xff]
        %v274 = vld [vmem:[%s188 + $0xa8] sm:$0xff]
        %v275 = vld [vmem:[%s188 + $0xb0] sm:$0xff]
        %v276 = vld [vmem:[%s188 + $0xb8] sm:$0xff]
        %v277 = vld [vmem:[%s188 + $0xc0] sm:$0xff]
        %v278 = vld [vmem:[%s188 + $0xc8] sm:$0xff]
        %v279 = vld [vmem:[%s188 + $0xd0] sm:$0xff]
        %v280 = vld [vmem:[%s188 + $0xd8] sm:$0xff]
        %v281 = vld [vmem:[%s188 + $0xe0] sm:$0xff]
        %v282 = vld [vmem:[%s188 + $0xe8] sm:$0xff]
        %v283 = vld [vmem:[%s188 + $0xf0] sm:$0xff]
        %v284 = vld [vmem:[%s188 + $0xf8] sm:$0xff]
        %v285 = vld [vmem:[%s188 + $0x100] sm:$0xff]
        %v286 = vld [vmem:[%s188 + $0x108] sm:$0xff]
        %v287 = vld [vmem:[%s188 + $0x110] sm:$0xff]
        %v288 = vld [vmem:[%s188 + $0x118] sm:$0xff]
        %v289 = vld [vmem:[%s188 + $0x120] sm:$0xff]
        %v290 = vld [vmem:[%s188 + $0x128] sm:$0xff]
        %v291 = vld [vmem:[%s188 + $0x130] sm:$0xff]
        %v292 = vld [vmem:[%s188 + $0x138] sm:$0xff]
        %v293 = vld [vmem:[%s188 + $0x140] sm:$0xff]
        %v294 = vld [vmem:[%s188 + $0x148] sm:$0xff]
        %v295 = vld [vmem:[%s188 + $0x150] sm:$0xff]
        %v296 = vld [vmem:[%s188 + $0x158] sm:$0xff]
        %v297 = vld [vmem:[%s188 + $0x160] sm:$0xff]
        %v298 = vld [vmem:[%s188 + $0x168] sm:$0xff]
        %v299 = vld [vmem:[%s188 + $0x170] sm:$0xff]
        %v300 = vld [vmem:[%s188 + $0x178] sm:$0xff]
        %v301 = vld [vmem:[%s188 + $0x180] sm:$0xff]
        %v302 = vld [vmem:[%s188 + $0x188] sm:$0xff]
        %v303 = vld [vmem:[%s188 + $0x190] sm:$0xff]
        %v304 = vld [vmem:[%s188 + $0x198] sm:$0xff]
        %v305 = vld [vmem:[%s188 + $0x1a0] sm:$0xff]
        %v306 = vld [vmem:[%s188 + $0x1a8] sm:$0xff]
        %v307 = vld [vmem:[%s188 + $0x1b0] sm:$0xff]
        %v308 = vld [vmem:[%s188 + $0x1b8] sm:$0xff]
        %v309 = vld [vmem:[%s188 + $0x1c0] sm:$0xff]
        %v310 = vld [vmem:[%s188 + $0x1c8] sm:$0xff]
        %v311 = vld [vmem:[%s188 + $0x1d0] sm:$0xff]
        %v312 = vld [vmem:[%s188 + $0x1d8] sm:$0xff]
        %v313 = vld [vmem:[%s188 + $0x1e0] sm:$0xff]
        %v314 = vld [vmem:[%s188 + $0x1e8] sm:$0xff]
        %v315 = vld [vmem:[%s188 + $0x1f0] sm:$0xff]
        %v316 = vld [vmem:[%s188 + $0x1f8] sm:$0xff]
        %v317 = vld [vmem:[%s2] sm:$0xff]
        %v318 = vld [vmem:[%s2 + $0x8] sm:$0xff]
        %v319 = vld [vmem:[%s2 + $0x10] sm:$0xff]
        %v320 = vld [vmem:[%s2 + $0x18] sm:$0xff]
        %v321 = vld [vmem:[%s2 + $0x20] sm:$0xff]
        %v322 = vld [vmem:[%s2 + $0x28] sm:$0xff]
        %v323 = vld [vmem:[%s2 + $0x30] sm:$0xff]
        %v324 = vld [vmem:[%s2 + $0x38] sm:$0xff]
        %v325 = vld [vmem:[%s2 + $0x40] sm:$0xff]
        %v326 = vld [vmem:[%s2 + $0x48] sm:$0xff]
        %v327 = vld [vmem:[%s2 + $0x50] sm:$0xff]
        %v328 = vld [vmem:[%s2 + $0x58] sm:$0xff]
        %v329 = vld [vmem:[%s2 + $0x60] sm:$0xff]
        %v330 = vld [vmem:[%s2 + $0x68] sm:$0xff]
        %v331 = vld [vmem:[%s2 + $0x70] sm:$0xff]
        %v332 = vld [vmem:[%s2 + $0x78] sm:$0xff]
        %v333 = vmul.f32 %v317, 0.4204482
        %v334 = vmul.f32 %v318, 0.4204482
        %v335 = vmul.f32 %v319, 0.4204482
        %v336 = vmul.f32 %v320, 0.4204482
        %v337 = vmul.f32 %v321, 0.4204482
        %v338 = vmul.f32 %v322, 0.4204482
        %v339 = vmul.f32 %v323, 0.4204482
        %v340 = vmul.f32 %v324, 0.4204482
        %v341 = vmul.f32 %v325, 0.4204482
        %v342 = vmul.f32 %v326, 0.4204482
        %v343 = vmul.f32 %v327, 0.4204482
        %v344 = vmul.f32 %v328, 0.4204482
        %v345 = vmul.f32 %v329, 0.4204482
        %v346 = vmul.f32 %v330, 0.4204482
        %v347 = vmul.f32 %v331, 0.4204482
        %v348 = vmul.f32 %v332, 0.4204482
        %vm349 = vcmask 261120
        %v351 = vsel %vm349, %v189, 0
        %v354 = vsel %vm349, %v190, 0
        %v357 = vsel %vm349, %v191, 0
        %v360 = vsel %vm349, %v192, 0
        %v363 = vsel %vm349, %v193, 0
        %v366 = vsel %vm349, %v194, 0
        %v369 = vsel %vm349, %v195, 0
        %v372 = vsel %vm349, %v196, 0
        %v375 = vsel %vm349, %v197, 0
        %v378 = vsel %vm349, %v198, 0
        %v381 = vsel %vm349, %v199, 0
        %v384 = vsel %vm349, %v200, 0
        %v387 = vsel %vm349, %v201, 0
        %v390 = vsel %vm349, %v202, 0
        %v393 = vsel %vm349, %v203, 0
        %v396 = vsel %vm349, %v204, 0
        %v399 = vsel %vm349, %v205, 0
        %v402 = vsel %vm349, %v206, 0
        %v405 = vsel %vm349, %v207, 0
        %v408 = vsel %vm349, %v208, 0
        %v411 = vsel %vm349, %v209, 0
        %v414 = vsel %vm349, %v210, 0
        %v417 = vsel %vm349, %v211, 0
        %v420 = vsel %vm349, %v212, 0
        %v423 = vsel %vm349, %v213, 0
        %v426 = vsel %vm349, %v214, 0
        %v429 = vsel %vm349, %v215, 0
        %v432 = vsel %vm349, %v216, 0
        %v435 = vsel %vm349, %v217, 0
        %v438 = vsel %vm349, %v218, 0
        %v441 = vsel %vm349, %v219, 0
        %v444 = vsel %vm349, %v220, 0
        %v447 = vsel %vm349, %v221, 0
        %v450 = vsel %vm349, %v222, 0
        %v453 = vsel %vm349, %v223, 0
        %v456 = vsel %vm349, %v224, 0
        %v459 = vsel %vm349, %v225, 0
        %v462 = vsel %vm349, %v226, 0
        %v465 = vsel %vm349, %v227, 0
        %v468 = vsel %vm349, %v228, 0
        %v471 = vsel %vm349, %v229, 0
        %v474 = vsel %vm349, %v230, 0
        %v477 = vsel %vm349, %v231, 0
        %v480 = vsel %vm349, %v232, 0
        %v483 = vsel %vm349, %v233, 0
        %v486 = vsel %vm349, %v234, 0
        %v489 = vsel %vm349, %v235, 0
        %v492 = vsel %vm349, %v236, 0
        %v495 = vsel %vm349, %v237, 0
        %v498 = vsel %vm349, %v238, 0
        %v501 = vsel %vm349, %v239, 0
        %v504 = vsel %vm349, %v240, 0
        %v507 = vsel %vm349, %v241, 0
        %v510 = vsel %vm349, %v242, 0
        %v513 = vsel %vm349, %v243, 0
        %v516 = vsel %vm349, %v244, 0
        %v519 = vsel %vm349, %v245, 0
        %v522 = vsel %vm349, %v246, 0
        %v525 = vsel %vm349, %v247, 0
        %v528 = vsel %vm349, %v248, 0
        %v531 = vsel %vm349, %v249, 0
        %v534 = vsel %vm349, %v250, 0
        %v537 = vsel %vm349, %v251, 0
        %v540 = vsel %vm349, %v252, 0
        %v543 = vsel %vm349, %v253, 0
        %v546 = vsel %vm349, %v254, 0
        %v549 = vsel %vm349, %v255, 0
        %v552 = vsel %vm349, %v256, 0
        %v555 = vsel %vm349, %v257, 0
        %v558 = vsel %vm349, %v258, 0
        %v561 = vsel %vm349, %v259, 0
        %v564 = vsel %vm349, %v260, 0
        %v567 = vsel %vm349, %v261, 0
        %v570 = vsel %vm349, %v262, 0
        %v573 = vsel %vm349, %v263, 0
        %v576 = vsel %vm349, %v264, 0
        %v579 = vsel %vm349, %v265, 0
        %v582 = vsel %vm349, %v266, 0
        %v585 = vsel %vm349, %v267, 0
        %v588 = vsel %vm349, %v268, 0
        %v591 = vsel %vm349, %v269, 0
        %v594 = vsel %vm349, %v270, 0
        %v597 = vsel %vm349, %v271, 0
        %v600 = vsel %vm349, %v272, 0
        %v603 = vsel %vm349, %v273, 0
        %v606 = vsel %vm349, %v274, 0
        %v609 = vsel %vm349, %v275, 0
        %v612 = vsel %vm349, %v276, 0
        %v615 = vsel %vm349, %v277, 0
        %v618 = vsel %vm349, %v278, 0
        %v621 = vsel %vm349, %v279, 0
        %v624 = vsel %vm349, %v280, 0
        %v627 = vsel %vm349, %v281, 0
        %v630 = vsel %vm349, %v282, 0
        %v633 = vsel %vm349, %v283, 0
        %v636 = vsel %vm349, %v284, 0
        %v639 = vsel %vm349, %v285, 0
        %v642 = vsel %vm349, %v286, 0
        %v645 = vsel %vm349, %v287, 0
        %v648 = vsel %vm349, %v288, 0
        %v651 = vsel %vm349, %v289, 0
        %v654 = vsel %vm349, %v290, 0
        %v657 = vsel %vm349, %v291, 0
        %v660 = vsel %vm349, %v292, 0
        %v663 = vsel %vm349, %v293, 0
        %v666 = vsel %vm349, %v294, 0
        %v669 = vsel %vm349, %v295, 0
        %v672 = vsel %vm349, %v296, 0
        %v675 = vsel %vm349, %v297, 0
        %v678 = vsel %vm349, %v298, 0
        %v681 = vsel %vm349, %v299, 0
        %v684 = vsel %vm349, %v300, 0
        %v687 = vsel %vm349, %v301, 0
        %v690 = vsel %vm349, %v302, 0
        %v693 = vsel %vm349, %v303, 0
        %v696 = vsel %vm349, %v304, 0
        %v699 = vsel %vm349, %v305, 0
        %v702 = vsel %vm349, %v306, 0
        %v705 = vsel %vm349, %v307, 0
        %v708 = vsel %vm349, %v308, 0
        %v711 = vsel %vm349, %v309, 0
        %v714 = vsel %vm349, %v310, 0
        %v717 = vsel %vm349, %v311, 0
        %v720 = vsel %vm349, %v312, 0
        %v723 = vsel %vm349, %v313, 0
        %v726 = vsel %vm349, %v314, 0
        %v729 = vsel %vm349, %v315, 0
        %v732 = vsel %vm349, %v316, 0
        %v735 = vsel %vm349, %v333, 0
        %v738 = vsel %vm349, %v334, 0
        %v741 = vsel %vm349, %v335, 0
        %v744 = vsel %vm349, %v336, 0
        %v747 = vsel %vm349, %v337, 0
        %v750 = vsel %vm349, %v338, 0
        %v753 = vsel %vm349, %v339, 0
        %v756 = vsel %vm349, %v340, 0
        %v759 = vsel %vm349, %v341, 0
        %v762 = vsel %vm349, %v342, 0
        %v765 = vsel %vm349, %v343, 0
        %v768 = vsel %vm349, %v344, 0
        %v771 = vsel %vm349, %v345, 0
        %v774 = vsel %vm349, %v346, 0
        %v777 = vsel %vm349, %v347, 0
        %v780 = vsel %vm349, %v348, 0
        %782 = vmatprep.subr.mxu0 0.0
        %783 = vmatpush1.xpose.msra.mxu0 %v780
        %784 = vmatprep.subr.mxu0 0.0
        %785 = vmatpush1.xpose.msra.mxu0 %v777
        %786 = vmatprep.subr.mxu0 0.0
        %787 = vmatpush1.xpose.msra.mxu0 %v774
        %788 = vmatprep.subr.mxu0 0.0
        %789 = vmatpush1.xpose.msra.mxu0 %v771
        %790 = vmatprep.subr.mxu0 0.0
        %791 = vmatpush1.xpose.msra.mxu0 %v768
        %792 = vmatprep.subr.mxu0 0.0
        %793 = vmatpush1.xpose.msra.mxu0 %v765
        %794 = vmatprep.subr.mxu0 0.0
        %795 = vmatpush1.xpose.msra.mxu0 %v762
        %796 = vmatprep.subr.mxu0 0.0
        %797 = vmatpush1.xpose.msra.mxu0 %v759
        %798 = vmatprep.subr.mxu0 0.0
        %799 = vmatpush1.xpose.msra.mxu0 %v756
        %800 = vmatprep.subr.mxu0 0.0
        %801 = vmatpush1.xpose.msra.mxu0 %v753
        %802 = vmatprep.subr.mxu0 0.0
        %803 = vmatpush1.xpose.msra.mxu0 %v750
        %804 = vmatprep.subr.mxu0 0.0
        %805 = vmatpush1.xpose.msra.mxu0 %v747
        %806 = vmatprep.subr.mxu0 0.0
        %807 = vmatpush1.xpose.msra.mxu0 %v744
        %808 = vmatprep.subr.mxu0 0.0
        %809 = vmatpush1.xpose.msra.mxu0 %v741
        %810 = vmatprep.subr.mxu0 0.0
        %811 = vmatpush1.xpose.msra.mxu0 %v738
        %812 = vmatprep.subr.mxu0 0.0
        %813 = vmatpush1.xpose.msra.mxu0 %v735
        %814 = vmatprep.subr.mxu0 0.0
        %815 = vmatpush2.xpose.msra.mxu0 0.0
        %816 = vmatprep.subr.mxu0 0.0
        %817 = vmatpush2.xpose.msra.mxu0 0.0
        %818 = vmatprep.subr.mxu0 0.0
        %819 = vmatpush2.xpose.msra.mxu0 0.0
        %820 = vmatprep.subr.mxu0 0.0
        %821 = vmatpush2.xpose.msra.mxu0 0.0
        %822 = vmatprep.subr.mxu0 0.0
        %823 = vmatpush2.xpose.msra.mxu0 0.0
        %824 = vmatprep.subr.mxu0 0.0
        %825 = vmatpush2.xpose.msra.mxu0 0.0
        %826 = vmatprep.subr.mxu0 0.0
        %827 = vmatpush2.xpose.msra.mxu0 0.0
        %828 = vmatprep.subr.mxu0 0.0
        %829 = vmatpush2.xpose.msra.mxu0 0.0
        %830 = vmatprep.subr.mxu0 0.0
        %831 = vmatpush2.xpose.msra.mxu0 0.0
        %832 = vmatprep.subr.mxu0 0.0
        %833 = vmatpush2.xpose.msra.mxu0 0.0
        %834 = vmatprep.subr.mxu0 0.0
        %835 = vmatpush2.xpose.msra.mxu0 0.0
        %836 = vmatprep.subr.mxu0 0.0
        %837 = vmatpush2.xpose.msra.mxu0 0.0
        %838 = vmatprep.subr.mxu0 0.0
        %839 = vmatpush2.xpose.msra.mxu0 0.0
        %840 = vmatprep.subr.mxu0 0.0
        %841 = vmatpush2.xpose.msra.mxu0 0.0
        %842 = vmatprep.subr.mxu0 0.0
        %843 = vmatpush2.xpose.msra.mxu0 0.0
        %844 = vmatprep.subr.mxu0 0.0
        %845 = vmatpush2.xpose.msra.mxu0 0.0
        %846 = vmatprep.mubr.f32.mxu0 0.0
        %847 = vmatmul.mubr.f32.gmra.mxu0 %v351
        %v848 = vpop.f32.mrf.mxu0
        %v849 = vadd.f32 0.0, %v848
        %v850 = vpop.f32.mrf.mxu0
        %851 = vmatprep.mubr.f32.mxu0 0.0
        %852 = vmatmul.mubr.f32.gmra.mxu0 %v354
        %v853 = vpop.f32.mrf.mxu0
        %v854 = vadd.f32 0.0, %v853
        %v855 = vpop.f32.mrf.mxu0
        %856 = vmatprep.mubr.f32.mxu0 0.0
        %857 = vmatmul.mubr.f32.gmra.mxu0 %v357
        %v858 = vpop.f32.mrf.mxu0
        %v859 = vadd.f32 0.0, %v858
        %v860 = vpop.f32.mrf.mxu0
        %861 = vmatprep.mubr.f32.mxu0 0.0
        %862 = vmatmul.mubr.f32.gmra.mxu0 %v360
        %v863 = vpop.f32.mrf.mxu0
        %v864 = vadd.f32 0.0, %v863
        %v865 = vpop.f32.mrf.mxu0
        %866 = vmatprep.mubr.f32.mxu0 0.0
        %867 = vmatmul.mubr.f32.gmra.mxu0 %v363
        %v868 = vpop.f32.mrf.mxu0
        %v869 = vadd.f32 0.0, %v868
        %v870 = vpop.f32.mrf.mxu0
        %871 = vmatprep.mubr.f32.mxu0 0.0
        %872 = vmatmul.mubr.f32.gmra.mxu0 %v366
        %v873 = vpop.f32.mrf.mxu0
        %v874 = vadd.f32 0.0, %v873
        %v875 = vpop.f32.mrf.mxu0
        %876 = vmatprep.mubr.f32.mxu0 0.0
        %877 = vmatmul.mubr.f32.gmra.mxu0 %v369
        %v878 = vpop.f32.mrf.mxu0
        %v879 = vadd.f32 0.0, %v878
        %v880 = vpop.f32.mrf.mxu0
        %881 = vmatprep.mubr.f32.mxu0 0.0
        %882 = vmatmul.mubr.f32.gmra.mxu0 %v372
        %v883 = vpop.f32.mrf.mxu0
        %v884 = vadd.f32 0.0, %v883
        %v885 = vpop.f32.mrf.mxu0
        %886 = vmatprep.mubr.f32.mxu0 0.0
        %887 = vmatmul.mubr.f32.gmra.mxu0 %v375
        %v888 = vpop.f32.mrf.mxu0
        %v889 = vadd.f32 0.0, %v888
        %v890 = vpop.f32.mrf.mxu0
        %891 = vmatprep.mubr.f32.mxu0 0.0
        %892 = vmatmul.mubr.f32.gmra.mxu0 %v378
        %v893 = vpop.f32.mrf.mxu0
        %v894 = vadd.f32 0.0, %v893
        %v895 = vpop.f32.mrf.mxu0
        %896 = vmatprep.mubr.f32.mxu0 0.0
        %897 = vmatmul.mubr.f32.gmra.mxu0 %v381
        %v898 = vpop.f32.mrf.mxu0
        %v899 = vadd.f32 0.0, %v898
        %v900 = vpop.f32.mrf.mxu0
        %901 = vmatprep.mubr.f32.mxu0 0.0
        %902 = vmatmul.mubr.f32.gmra.mxu0 %v384
        %v903 = vpop.f32.mrf.mxu0
        %v904 = vadd.f32 0.0, %v903
        %v905 = vpop.f32.mrf.mxu0
        %906 = vmatprep.mubr.f32.mxu0 0.0
        %907 = vmatmul.mubr.f32.gmra.mxu0 %v387
        %v908 = vpop.f32.mrf.mxu0
        %v909 = vadd.f32 0.0, %v908
        %v910 = vpop.f32.mrf.mxu0
        %911 = vmatprep.mubr.f32.mxu0 0.0
        %912 = vmatmul.mubr.f32.gmra.mxu0 %v390
        %v913 = vpop.f32.mrf.mxu0
        %v914 = vadd.f32 0.0, %v913
        %v915 = vpop.f32.mrf.mxu0
        %916 = vmatprep.mubr.f32.mxu0 0.0
        %917 = vmatmul.mubr.f32.gmra.mxu0 %v393
        %v918 = vpop.f32.mrf.mxu0
        %v919 = vadd.f32 0.0, %v918
        %v920 = vpop.f32.mrf.mxu0
        %921 = vmatprep.mubr.f32.mxu0 0.0
        %922 = vmatmul.mubr.f32.gmra.mxu0 %v396
        %v923 = vpop.f32.mrf.mxu0
        %v924 = vadd.f32 0.0, %v923
        %v925 = vpop.f32.mrf.mxu0
        %926 = vmatprep.mubr.f32.mxu0 0.0
        %927 = vmatmul.mubr.f32.gmra.mxu0 %v399
        %v928 = vpop.f32.mrf.mxu0
        %v929 = vadd.f32 0.0, %v928
        %v930 = vpop.f32.mrf.mxu0
        %931 = vmatprep.mubr.f32.mxu0 0.0
        %932 = vmatmul.mubr.f32.gmra.mxu0 %v402
        %v933 = vpop.f32.mrf.mxu0
        %v934 = vadd.f32 0.0, %v933
        %v935 = vpop.f32.mrf.mxu0
        %936 = vmatprep.mubr.f32.mxu0 0.0
        %937 = vmatmul.mubr.f32.gmra.mxu0 %v405
        %v938 = vpop.f32.mrf.mxu0
        %v939 = vadd.f32 0.0, %v938
        %v940 = vpop.f32.mrf.mxu0
        %941 = vmatprep.mubr.f32.mxu0 0.0
        %942 = vmatmul.mubr.f32.gmra.mxu0 %v408
        %v943 = vpop.f32.mrf.mxu0
        %v944 = vadd.f32 0.0, %v943
        %v945 = vpop.f32.mrf.mxu0
        %946 = vmatprep.mubr.f32.mxu0 0.0
        %947 = vmatmul.mubr.f32.gmra.mxu0 %v411
        %v948 = vpop.f32.mrf.mxu0
        %v949 = vadd.f32 0.0, %v948
        %v950 = vpop.f32.mrf.mxu0
        %951 = vmatprep.mubr.f32.mxu0 0.0
        %952 = vmatmul.mubr.f32.gmra.mxu0 %v414
        %v953 = vpop.f32.mrf.mxu0
        %v954 = vadd.f32 0.0, %v953
        %v955 = vpop.f32.mrf.mxu0
        %956 = vmatprep.mubr.f32.mxu0 0.0
        %957 = vmatmul.mubr.f32.gmra.mxu0 %v417
        %v958 = vpop.f32.mrf.mxu0
        %v959 = vadd.f32 0.0, %v958
        %v960 = vpop.f32.mrf.mxu0
        %961 = vmatprep.mubr.f32.mxu0 0.0
        %962 = vmatmul.mubr.f32.gmra.mxu0 %v420
        %v963 = vpop.f32.mrf.mxu0
        %v964 = vadd.f32 0.0, %v963
        %v965 = vpop.f32.mrf.mxu0
        %966 = vmatprep.mubr.f32.mxu0 0.0
        %967 = vmatmul.mubr.f32.gmra.mxu0 %v423
        %v968 = vpop.f32.mrf.mxu0
        %v969 = vadd.f32 0.0, %v968
        %v970 = vpop.f32.mrf.mxu0
        %971 = vmatprep.mubr.f32.mxu0 0.0
        %972 = vmatmul.mubr.f32.gmra.mxu0 %v426
        %v973 = vpop.f32.mrf.mxu0
        %v974 = vadd.f32 0.0, %v973
        %v975 = vpop.f32.mrf.mxu0
        %976 = vmatprep.mubr.f32.mxu0 0.0
        %977 = vmatmul.mubr.f32.gmra.mxu0 %v429
        %v978 = vpop.f32.mrf.mxu0
        %v979 = vadd.f32 0.0, %v978
        %v980 = vpop.f32.mrf.mxu0
        %981 = vmatprep.mubr.f32.mxu0 0.0
        %982 = vmatmul.mubr.f32.gmra.mxu0 %v432
        %v983 = vpop.f32.mrf.mxu0
        %v984 = vadd.f32 0.0, %v983
        %v985 = vpop.f32.mrf.mxu0
        %986 = vmatprep.mubr.f32.mxu0 0.0
        %987 = vmatmul.mubr.f32.gmra.mxu0 %v435
        %v988 = vpop.f32.mrf.mxu0
        %v989 = vadd.f32 0.0, %v988
        %v990 = vpop.f32.mrf.mxu0
        %991 = vmatprep.mubr.f32.mxu0 0.0
        %992 = vmatmul.mubr.f32.gmra.mxu0 %v438
        %v993 = vpop.f32.mrf.mxu0
        %v994 = vadd.f32 0.0, %v993
        %v995 = vpop.f32.mrf.mxu0
        %996 = vmatprep.mubr.f32.mxu0 0.0
        %997 = vmatmul.mubr.f32.gmra.mxu0 %v441
        %v998 = vpop.f32.mrf.mxu0
        %v999 = vadd.f32 0.0, %v998
        %v1000 = vpop.f32.mrf.mxu0
        %1001 = vmatprep.mubr.f32.mxu0 0.0
        %1002 = vmatmul.mubr.f32.gmra.mxu0 %v444
        %v1003 = vpop.f32.mrf.mxu0
        %v1004 = vadd.f32 0.0, %v1003
        %v1005 = vpop.f32.mrf.mxu0
        %1006 = vmatprep.mubr.f32.mxu0 0.0
        %1007 = vmatmul.mubr.f32.gmra.mxu0 %v447
        %v1008 = vpop.f32.mrf.mxu0
        %v1009 = vadd.f32 0.0, %v1008
        %v1010 = vpop.f32.mrf.mxu0
        %1011 = vmatprep.mubr.f32.mxu0 0.0
        %1012 = vmatmul.mubr.f32.gmra.mxu0 %v450
        %v1013 = vpop.f32.mrf.mxu0
        %v1014 = vadd.f32 0.0, %v1013
        %v1015 = vpop.f32.mrf.mxu0
        %1016 = vmatprep.mubr.f32.mxu0 0.0
        %1017 = vmatmul.mubr.f32.gmra.mxu0 %v453
        %v1018 = vpop.f32.mrf.mxu0
        %v1019 = vadd.f32 0.0, %v1018
        %v1020 = vpop.f32.mrf.mxu0
        %1021 = vmatprep.mubr.f32.mxu0 0.0
        %1022 = vmatmul.mubr.f32.gmra.mxu0 %v456
        %v1023 = vpop.f32.mrf.mxu0
        %v1024 = vadd.f32 0.0, %v1023
        %v1025 = vpop.f32.mrf.mxu0
        %1026 = vmatprep.mubr.f32.mxu0 0.0
        %1027 = vmatmul.mubr.f32.gmra.mxu0 %v459
        %v1028 = vpop.f32.mrf.mxu0
        %v1029 = vadd.f32 0.0, %v1028
        %v1030 = vpop.f32.mrf.mxu0
        %1031 = vmatprep.mubr.f32.mxu0 0.0
        %1032 = vmatmul.mubr.f32.gmra.mxu0 %v462
        %v1033 = vpop.f32.mrf.mxu0
        %v1034 = vadd.f32 0.0, %v1033
        %v1035 = vpop.f32.mrf.mxu0
        %1036 = vmatprep.mubr.f32.mxu0 0.0
        %1037 = vmatmul.mubr.f32.gmra.mxu0 %v465
        %v1038 = vpop.f32.mrf.mxu0
        %v1039 = vadd.f32 0.0, %v1038
        %v1040 = vpop.f32.mrf.mxu0
        %1041 = vmatprep.mubr.f32.mxu0 0.0
        %1042 = vmatmul.mubr.f32.gmra.mxu0 %v468
        %v1043 = vpop.f32.mrf.mxu0
        %v1044 = vadd.f32 0.0, %v1043
        %v1045 = vpop.f32.mrf.mxu0
        %1046 = vmatprep.mubr.f32.mxu0 0.0
        %1047 = vmatmul.mubr.f32.gmra.mxu0 %v471
        %v1048 = vpop.f32.mrf.mxu0
        %v1049 = vadd.f32 0.0, %v1048
        %v1050 = vpop.f32.mrf.mxu0
        %1051 = vmatprep.mubr.f32.mxu0 0.0
        %1052 = vmatmul.mubr.f32.gmra.mxu0 %v474
        %v1053 = vpop.f32.mrf.mxu0
        %v1054 = vadd.f32 0.0, %v1053
        %v1055 = vpop.f32.mrf.mxu0
        %1056 = vmatprep.mubr.f32.mxu0 0.0
        %1057 = vmatmul.mubr.f32.gmra.mxu0 %v477
        %v1058 = vpop.f32.mrf.mxu0
        %v1059 = vadd.f32 0.0, %v1058
        %v1060 = vpop.f32.mrf.mxu0
        %1061 = vmatprep.mubr.f32.mxu0 0.0
        %1062 = vmatmul.mubr.f32.gmra.mxu0 %v480
        %v1063 = vpop.f32.mrf.mxu0
        %v1064 = vadd.f32 0.0, %v1063
        %v1065 = vpop.f32.mrf.mxu0
        %1066 = vmatprep.mubr.f32.mxu0 0.0
        %1067 = vmatmul.mubr.f32.gmra.mxu0 %v483
        %v1068 = vpop.f32.mrf.mxu0
        %v1069 = vadd.f32 0.0, %v1068
        %v1070 = vpop.f32.mrf.mxu0
        %1071 = vmatprep.mubr.f32.mxu0 0.0
        %1072 = vmatmul.mubr.f32.gmra.mxu0 %v486
        %v1073 = vpop.f32.mrf.mxu0
        %v1074 = vadd.f32 0.0, %v1073
        %v1075 = vpop.f32.mrf.mxu0
        %1076 = vmatprep.mubr.f32.mxu0 0.0
        %1077 = vmatmul.mubr.f32.gmra.mxu0 %v489
        %v1078 = vpop.f32.mrf.mxu0
        %v1079 = vadd.f32 0.0, %v1078
        %v1080 = vpop.f32.mrf.mxu0
        %1081 = vmatprep.mubr.f32.mxu0 0.0
        %1082 = vmatmul.mubr.f32.gmra.mxu0 %v492
        %v1083 = vpop.f32.mrf.mxu0
        %v1084 = vadd.f32 0.0, %v1083
        %v1085 = vpop.f32.mrf.mxu0
        %1086 = vmatprep.mubr.f32.mxu0 0.0
        %1087 = vmatmul.mubr.f32.gmra.mxu0 %v495
        %v1088 = vpop.f32.mrf.mxu0
        %v1089 = vadd.f32 0.0, %v1088
        %v1090 = vpop.f32.mrf.mxu0
        %1091 = vmatprep.mubr.f32.mxu0 0.0
        %1092 = vmatmul.mubr.f32.gmra.mxu0 %v498
        %v1093 = vpop.f32.mrf.mxu0
        %v1094 = vadd.f32 0.0, %v1093
        %v1095 = vpop.f32.mrf.mxu0
        %1096 = vmatprep.mubr.f32.mxu0 0.0
        %1097 = vmatmul.mubr.f32.gmra.mxu0 %v501
        %v1098 = vpop.f32.mrf.mxu0
        %v1099 = vadd.f32 0.0, %v1098
        %v1100 = vpop.f32.mrf.mxu0
        %1101 = vmatprep.mubr.f32.mxu0 0.0
        %1102 = vmatmul.mubr.f32.gmra.mxu0 %v504
        %v1103 = vpop.f32.mrf.mxu0
        %v1104 = vadd.f32 0.0, %v1103
        %v1105 = vpop.f32.mrf.mxu0
        %1106 = vmatprep.mubr.f32.mxu0 0.0
        %1107 = vmatmul.mubr.f32.gmra.mxu0 %v507
        %v1108 = vpop.f32.mrf.mxu0
        %v1109 = vadd.f32 0.0, %v1108
        %v1110 = vpop.f32.mrf.mxu0
        %1111 = vmatprep.mubr.f32.mxu0 0.0
        %1112 = vmatmul.mubr.f32.gmra.mxu0 %v510
        %v1113 = vpop.f32.mrf.mxu0
        %v1114 = vadd.f32 0.0, %v1113
        %v1115 = vpop.f32.mrf.mxu0
        %1116 = vmatprep.mubr.f32.mxu0 0.0
        %1117 = vmatmul.mubr.f32.gmra.mxu0 %v513
        %v1118 = vpop.f32.mrf.mxu0
        %v1119 = vadd.f32 0.0, %v1118
        %v1120 = vpop.f32.mrf.mxu0
        %1121 = vmatprep.mubr.f32.mxu0 0.0
        %1122 = vmatmul.mubr.f32.gmra.mxu0 %v516
        %v1123 = vpop.f32.mrf.mxu0
        %v1124 = vadd.f32 0.0, %v1123
        %v1125 = vpop.f32.mrf.mxu0
        %1126 = vmatprep.mubr.f32.mxu0 0.0
        %1127 = vmatmul.mubr.f32.gmra.mxu0 %v519
        %v1128 = vpop.f32.mrf.mxu0
        %v1129 = vadd.f32 0.0, %v1128
        %v1130 = vpop.f32.mrf.mxu0
        %1131 = vmatprep.mubr.f32.mxu0 0.0
        %1132 = vmatmul.mubr.f32.gmra.mxu0 %v522
        %v1133 = vpop.f32.mrf.mxu0
        %v1134 = vadd.f32 0.0, %v1133
        %v1135 = vpop.f32.mrf.mxu0
        %1136 = vmatprep.mubr.f32.mxu0 0.0
        %1137 = vmatmul.mubr.f32.gmra.mxu0 %v525
        %v1138 = vpop.f32.mrf.mxu0
        %v1139 = vadd.f32 0.0, %v1138
        %v1140 = vpop.f32.mrf.mxu0
        %1141 = vmatprep.mubr.f32.mxu0 0.0
        %1142 = vmatmul.mubr.f32.gmra.mxu0 %v528
        %v1143 = vpop.f32.mrf.mxu0
        %v1144 = vadd.f32 0.0, %v1143
        %v1145 = vpop.f32.mrf.mxu0
        %1146 = vmatprep.mubr.f32.mxu0 0.0
        %1147 = vmatmul.mubr.f32.gmra.mxu0 %v531
        %v1148 = vpop.f32.mrf.mxu0
        %v1149 = vadd.f32 0.0, %v1148
        %v1150 = vpop.f32.mrf.mxu0
        %1151 = vmatprep.mubr.f32.mxu0 0.0
        %1152 = vmatmul.mubr.f32.gmra.mxu0 %v534
        %v1153 = vpop.f32.mrf.mxu0
        %v1154 = vadd.f32 0.0, %v1153
        %v1155 = vpop.f32.mrf.mxu0
        %1156 = vmatprep.mubr.f32.mxu0 0.0
        %1157 = vmatmul.mubr.f32.gmra.mxu0 %v537
        %v1158 = vpop.f32.mrf.mxu0
        %v1159 = vadd.f32 0.0, %v1158
        %v1160 = vpop.f32.mrf.mxu0
        %1161 = vmatprep.mubr.f32.mxu0 0.0
        %1162 = vmatmul.mubr.f32.gmra.mxu0 %v540
        %v1163 = vpop.f32.mrf.mxu0
        %v1164 = vadd.f32 0.0, %v1163
        %v1165 = vpop.f32.mrf.mxu0
        %1166 = vmatprep.mubr.f32.mxu0 0.0
        %1167 = vmatmul.mubr.f32.gmra.mxu0 %v543
        %v1168 = vpop.f32.mrf.mxu0
        %v1169 = vadd.f32 0.0, %v1168
        %v1170 = vpop.f32.mrf.mxu0
        %1171 = vmatprep.mubr.f32.mxu0 0.0
        %1172 = vmatmul.mubr.f32.gmra.mxu0 %v546
        %v1173 = vpop.f32.mrf.mxu0
        %v1174 = vadd.f32 0.0, %v1173
        %v1175 = vpop.f32.mrf.mxu0
        %1176 = vmatprep.mubr.f32.mxu0 0.0
        %1177 = vmatmul.mubr.f32.gmra.mxu0 %v549
        %v1178 = vpop.f32.mrf.mxu0
        %v1179 = vadd.f32 0.0, %v1178
        %v1180 = vpop.f32.mrf.mxu0
        %1181 = vmatprep.mubr.f32.mxu0 0.0
        %1182 = vmatmul.mubr.f32.gmra.mxu0 %v552
        %v1183 = vpop.f32.mrf.mxu0
        %v1184 = vadd.f32 0.0, %v1183
        %v1185 = vpop.f32.mrf.mxu0
        %1186 = vmatprep.mubr.f32.mxu0 0.0
        %1187 = vmatmul.mubr.f32.gmra.mxu0 %v555
        %v1188 = vpop.f32.mrf.mxu0
        %v1189 = vadd.f32 0.0, %v1188
        %v1190 = vpop.f32.mrf.mxu0
        %1191 = vmatprep.mubr.f32.mxu0 0.0
        %1192 = vmatmul.mubr.f32.gmra.mxu0 %v558
        %v1193 = vpop.f32.mrf.mxu0
        %v1194 = vadd.f32 0.0, %v1193
        %v1195 = vpop.f32.mrf.mxu0
        %1196 = vmatprep.mubr.f32.mxu0 0.0
        %1197 = vmatmul.mubr.f32.gmra.mxu0 %v561
        %v1198 = vpop.f32.mrf.mxu0
        %v1199 = vadd.f32 0.0, %v1198
        %v1200 = vpop.f32.mrf.mxu0
        %1201 = vmatprep.mubr.f32.mxu0 0.0
        %1202 = vmatmul.mubr.f32.gmra.mxu0 %v564
        %v1203 = vpop.f32.mrf.mxu0
        %v1204 = vadd.f32 0.0, %v1203
        %v1205 = vpop.f32.mrf.mxu0
        %1206 = vmatprep.mubr.f32.mxu0 0.0
        %1207 = vmatmul.mubr.f32.gmra.mxu0 %v567
        %v1208 = vpop.f32.mrf.mxu0
        %v1209 = vadd.f32 0.0, %v1208
        %v1210 = vpop.f32.mrf.mxu0
        %1211 = vmatprep.mubr.f32.mxu0 0.0
        %1212 = vmatmul.mubr.f32.gmra.mxu0 %v570
        %v1213 = vpop.f32.mrf.mxu0
        %v1214 = vadd.f32 0.0, %v1213
        %v1215 = vpop.f32.mrf.mxu0
        %1216 = vmatprep.mubr.f32.mxu0 0.0
        %1217 = vmatmul.mubr.f32.gmra.mxu0 %v573
        %v1218 = vpop.f32.mrf.mxu0
        %v1219 = vadd.f32 0.0, %v1218
        %v1220 = vpop.f32.mrf.mxu0
        %1221 = vmatprep.mubr.f32.mxu0 0.0
        %1222 = vmatmul.mubr.f32.gmra.mxu0 %v576
        %v1223 = vpop.f32.mrf.mxu0
        %v1224 = vadd.f32 0.0, %v1223
        %v1225 = vpop.f32.mrf.mxu0
        %1226 = vmatprep.mubr.f32.mxu0 0.0
        %1227 = vmatmul.mubr.f32.gmra.mxu0 %v579
        %v1228 = vpop.f32.mrf.mxu0
        %v1229 = vadd.f32 0.0, %v1228
        %v1230 = vpop.f32.mrf.mxu0
        %1231 = vmatprep.mubr.f32.mxu0 0.0
        %1232 = vmatmul.mubr.f32.gmra.mxu0 %v582
        %v1233 = vpop.f32.mrf.mxu0
        %v1234 = vadd.f32 0.0, %v1233
        %v1235 = vpop.f32.mrf.mxu0
        %1236 = vmatprep.mubr.f32.mxu0 0.0
        %1237 = vmatmul.mubr.f32.gmra.mxu0 %v585
        %v1238 = vpop.f32.mrf.mxu0
        %v1239 = vadd.f32 0.0, %v1238
        %v1240 = vpop.f32.mrf.mxu0
        %1241 = vmatprep.mubr.f32.mxu0 0.0
        %1242 = vmatmul.mubr.f32.gmra.mxu0 %v588
        %v1243 = vpop.f32.mrf.mxu0
        %v1244 = vadd.f32 0.0, %v1243
        %v1245 = vpop.f32.mrf.mxu0
        %1246 = vmatprep.mubr.f32.mxu0 0.0
        %1247 = vmatmul.mubr.f32.gmra.mxu0 %v591
        %v1248 = vpop.f32.mrf.mxu0
        %v1249 = vadd.f32 0.0, %v1248
        %v1250 = vpop.f32.mrf.mxu0
        %1251 = vmatprep.mubr.f32.mxu0 0.0
        %1252 = vmatmul.mubr.f32.gmra.mxu0 %v594
        %v1253 = vpop.f32.mrf.mxu0
        %v1254 = vadd.f32 0.0, %v1253
        %v1255 = vpop.f32.mrf.mxu0
        %1256 = vmatprep.mubr.f32.mxu0 0.0
        %1257 = vmatmul.mubr.f32.gmra.mxu0 %v597
        %v1258 = vpop.f32.mrf.mxu0
        %v1259 = vadd.f32 0.0, %v1258
        %v1260 = vpop.f32.mrf.mxu0
        %1261 = vmatprep.mubr.f32.mxu0 0.0
        %1262 = vmatmul.mubr.f32.gmra.mxu0 %v600
        %v1263 = vpop.f32.mrf.mxu0
        %v1264 = vadd.f32 0.0, %v1263
        %v1265 = vpop.f32.mrf.mxu0
        %1266 = vmatprep.mubr.f32.mxu0 0.0
        %1267 = vmatmul.mubr.f32.gmra.mxu0 %v603
        %v1268 = vpop.f32.mrf.mxu0
        %v1269 = vadd.f32 0.0, %v1268
        %v1270 = vpop.f32.mrf.mxu0
        %1271 = vmatprep.mubr.f32.mxu0 0.0
        %1272 = vmatmul.mubr.f32.gmra.mxu0 %v606
        %v1273 = vpop.f32.mrf.mxu0
        %v1274 = vadd.f32 0.0, %v1273
        %v1275 = vpop.f32.mrf.mxu0
        %1276 = vmatprep.mubr.f32.mxu0 0.0
        %1277 = vmatmul.mubr.f32.gmra.mxu0 %v609
        %v1278 = vpop.f32.mrf.mxu0
        %v1279 = vadd.f32 0.0, %v1278
        %v1280 = vpop.f32.mrf.mxu0
        %1281 = vmatprep.mubr.f32.mxu0 0.0
        %1282 = vmatmul.mubr.f32.gmra.mxu0 %v612
        %v1283 = vpop.f32.mrf.mxu0
        %v1284 = vadd.f32 0.0, %v1283
        %v1285 = vpop.f32.mrf.mxu0
        %1286 = vmatprep.mubr.f32.mxu0 0.0
        %1287 = vmatmul.mubr.f32.gmra.mxu0 %v615
        %v1288 = vpop.f32.mrf.mxu0
        %v1289 = vadd.f32 0.0, %v1288
        %v1290 = vpop.f32.mrf.mxu0
        %1291 = vmatprep.mubr.f32.mxu0 0.0
        %1292 = vmatmul.mubr.f32.gmra.mxu0 %v618
        %v1293 = vpop.f32.mrf.mxu0
        %v1294 = vadd.f32 0.0, %v1293
        %v1295 = vpop.f32.mrf.mxu0
        %1296 = vmatprep.mubr.f32.mxu0 0.0
        %1297 = vmatmul.mubr.f32.gmra.mxu0 %v621
        %v1298 = vpop.f32.mrf.mxu0
        %v1299 = vadd.f32 0.0, %v1298
        %v1300 = vpop.f32.mrf.mxu0
        %1301 = vmatprep.mubr.f32.mxu0 0.0
        %1302 = vmatmul.mubr.f32.gmra.mxu0 %v624
        %v1303 = vpop.f32.mrf.mxu0
        %v1304 = vadd.f32 0.0, %v1303
        %v1305 = vpop.f32.mrf.mxu0
        %1306 = vmatprep.mubr.f32.mxu0 0.0
        %1307 = vmatmul.mubr.f32.gmra.mxu0 %v627
        %v1308 = vpop.f32.mrf.mxu0
        %v1309 = vadd.f32 0.0, %v1308
        %v1310 = vpop.f32.mrf.mxu0
        %1311 = vmatprep.mubr.f32.mxu0 0.0
        %1312 = vmatmul.mubr.f32.gmra.mxu0 %v630
        %v1313 = vpop.f32.mrf.mxu0
        %v1314 = vadd.f32 0.0, %v1313
        %v1315 = vpop.f32.mrf.mxu0
        %1316 = vmatprep.mubr.f32.mxu0 0.0
        %1317 = vmatmul.mubr.f32.gmra.mxu0 %v633
        %v1318 = vpop.f32.mrf.mxu0
        %v1319 = vadd.f32 0.0, %v1318
        %v1320 = vpop.f32.mrf.mxu0
        %1321 = vmatprep.mubr.f32.mxu0 0.0
        %1322 = vmatmul.mubr.f32.gmra.mxu0 %v636
        %v1323 = vpop.f32.mrf.mxu0
        %v1324 = vadd.f32 0.0, %v1323
        %v1325 = vpop.f32.mrf.mxu0
        %1326 = vmatprep.mubr.f32.mxu0 0.0
        %1327 = vmatmul.mubr.f32.gmra.mxu0 %v639
        %v1328 = vpop.f32.mrf.mxu0
        %v1329 = vadd.f32 0.0, %v1328
        %v1330 = vpop.f32.mrf.mxu0
        %1331 = vmatprep.mubr.f32.mxu0 0.0
        %1332 = vmatmul.mubr.f32.gmra.mxu0 %v642
        %v1333 = vpop.f32.mrf.mxu0
        %v1334 = vadd.f32 0.0, %v1333
        %v1335 = vpop.f32.mrf.mxu0
        %1336 = vmatprep.mubr.f32.mxu0 0.0
        %1337 = vmatmul.mubr.f32.gmra.mxu0 %v645
        %v1338 = vpop.f32.mrf.mxu0
        %v1339 = vadd.f32 0.0, %v1338
        %v1340 = vpop.f32.mrf.mxu0
        %1341 = vmatprep.mubr.f32.mxu0 0.0
        %1342 = vmatmul.mubr.f32.gmra.mxu0 %v648
        %v1343 = vpop.f32.mrf.mxu0
        %v1344 = vadd.f32 0.0, %v1343
        %v1345 = vpop.f32.mrf.mxu0
        %1346 = vmatprep.mubr.f32.mxu0 0.0
        %1347 = vmatmul.mubr.f32.gmra.mxu0 %v651
        %v1348 = vpop.f32.mrf.mxu0
        %v1349 = vadd.f32 0.0, %v1348
        %v1350 = vpop.f32.mrf.mxu0
        %1351 = vmatprep.mubr.f32.mxu0 0.0
        %1352 = vmatmul.mubr.f32.gmra.mxu0 %v654
        %v1353 = vpop.f32.mrf.mxu0
        %v1354 = vadd.f32 0.0, %v1353
        %v1355 = vpop.f32.mrf.mxu0
        %1356 = vmatprep.mubr.f32.mxu0 0.0
        %1357 = vmatmul.mubr.f32.gmra.mxu0 %v657
        %v1358 = vpop.f32.mrf.mxu0
        %v1359 = vadd.f32 0.0, %v1358
        %v1360 = vpop.f32.mrf.mxu0
        %1361 = vmatprep.mubr.f32.mxu0 0.0
        %1362 = vmatmul.mubr.f32.gmra.mxu0 %v660
        %v1363 = vpop.f32.mrf.mxu0
        %v1364 = vadd.f32 0.0, %v1363
        %v1365 = vpop.f32.mrf.mxu0
        %1366 = vmatprep.mubr.f32.mxu0 0.0
        %1367 = vmatmul.mubr.f32.gmra.mxu0 %v663
        %v1368 = vpop.f32.mrf.mxu0
        %v1369 = vadd.f32 0.0, %v1368
        %v1370 = vpop.f32.mrf.mxu0
        %1371 = vmatprep.mubr.f32.mxu0 0.0
        %1372 = vmatmul.mubr.f32.gmra.mxu0 %v666
        %v1373 = vpop.f32.mrf.mxu0
        %v1374 = vadd.f32 0.0, %v1373
        %v1375 = vpop.f32.mrf.mxu0
        %1376 = vmatprep.mubr.f32.mxu0 0.0
        %1377 = vmatmul.mubr.f32.gmra.mxu0 %v669
        %v1378 = vpop.f32.mrf.mxu0
        %v1379 = vadd.f32 0.0, %v1378
        %v1380 = vpop.f32.mrf.mxu0
        %1381 = vmatprep.mubr.f32.mxu0 0.0
        %1382 = vmatmul.mubr.f32.gmra.mxu0 %v672
        %v1383 = vpop.f32.mrf.mxu0
        %v1384 = vadd.f32 0.0, %v1383
        %v1385 = vpop.f32.mrf.mxu0
        %1386 = vmatprep.mubr.f32.mxu0 0.0
        %1387 = vmatmul.mubr.f32.gmra.mxu0 %v675
        %v1388 = vpop.f32.mrf.mxu0
        %v1389 = vadd.f32 0.0, %v1388
        %v1390 = vpop.f32.mrf.mxu0
        %1391 = vmatprep.mubr.f32.mxu0 0.0
        %1392 = vmatmul.mubr.f32.gmra.mxu0 %v678
        %v1393 = vpop.f32.mrf.mxu0
        %v1394 = vadd.f32 0.0, %v1393
        %v1395 = vpop.f32.mrf.mxu0
        %1396 = vmatprep.mubr.f32.mxu0 0.0
        %1397 = vmatmul.mubr.f32.gmra.mxu0 %v681
        %v1398 = vpop.f32.mrf.mxu0
        %v1399 = vadd.f32 0.0, %v1398
        %v1400 = vpop.f32.mrf.mxu0
        %1401 = vmatprep.mubr.f32.mxu0 0.0
        %1402 = vmatmul.mubr.f32.gmra.mxu0 %v684
        %v1403 = vpop.f32.mrf.mxu0
        %v1404 = vadd.f32 0.0, %v1403
        %v1405 = vpop.f32.mrf.mxu0
        %1406 = vmatprep.mubr.f32.mxu0 0.0
        %1407 = vmatmul.mubr.f32.gmra.mxu0 %v687
        %v1408 = vpop.f32.mrf.mxu0
        %v1409 = vadd.f32 0.0, %v1408
        %v1410 = vpop.f32.mrf.mxu0
        %1411 = vmatprep.mubr.f32.mxu0 0.0
        %1412 = vmatmul.mubr.f32.gmra.mxu0 %v690
        %v1413 = vpop.f32.mrf.mxu0
        %v1414 = vadd.f32 0.0, %v1413
        %v1415 = vpop.f32.mrf.mxu0
        %1416 = vmatprep.mubr.f32.mxu0 0.0
        %1417 = vmatmul.mubr.f32.gmra.mxu0 %v693
        %v1418 = vpop.f32.mrf.mxu0
        %v1419 = vadd.f32 0.0, %v1418
        %v1420 = vpop.f32.mrf.mxu0
        %1421 = vmatprep.mubr.f32.mxu0 0.0
        %1422 = vmatmul.mubr.f32.gmra.mxu0 %v696
        %v1423 = vpop.f32.mrf.mxu0
        %v1424 = vadd.f32 0.0, %v1423
        %v1425 = vpop.f32.mrf.mxu0
        %1426 = vmatprep.mubr.f32.mxu0 0.0
        %1427 = vmatmul.mubr.f32.gmra.mxu0 %v699
        %v1428 = vpop.f32.mrf.mxu0
        %v1429 = vadd.f32 0.0, %v1428
        %v1430 = vpop.f32.mrf.mxu0
        %1431 = vmatprep.mubr.f32.mxu0 0.0
        %1432 = vmatmul.mubr.f32.gmra.mxu0 %v702
        %v1433 = vpop.f32.mrf.mxu0
        %v1434 = vadd.f32 0.0, %v1433
        %v1435 = vpop.f32.mrf.mxu0
        %1436 = vmatprep.mubr.f32.mxu0 0.0
        %1437 = vmatmul.mubr.f32.gmra.mxu0 %v705
        %v1438 = vpop.f32.mrf.mxu0
        %v1439 = vadd.f32 0.0, %v1438
        %v1440 = vpop.f32.mrf.mxu0
        %1441 = vmatprep.mubr.f32.mxu0 0.0
        %1442 = vmatmul.mubr.f32.gmra.mxu0 %v708
        %v1443 = vpop.f32.mrf.mxu0
        %v1444 = vadd.f32 0.0, %v1443
        %v1445 = vpop.f32.mrf.mxu0
        %1446 = vmatprep.mubr.f32.mxu0 0.0
        %1447 = vmatmul.mubr.f32.gmra.mxu0 %v711
        %v1448 = vpop.f32.mrf.mxu0
        %v1449 = vadd.f32 0.0, %v1448
        %v1450 = vpop.f32.mrf.mxu0
        %1451 = vmatprep.mubr.f32.mxu0 0.0
        %1452 = vmatmul.mubr.f32.gmra.mxu0 %v714
        %v1453 = vpop.f32.mrf.mxu0
        %v1454 = vadd.f32 0.0, %v1453
        %v1455 = vpop.f32.mrf.mxu0
        %1456 = vmatprep.mubr.f32.mxu0 0.0
        %1457 = vmatmul.mubr.f32.gmra.mxu0 %v717
        %v1458 = vpop.f32.mrf.mxu0
        %v1459 = vadd.f32 0.0, %v1458
        %v1460 = vpop.f32.mrf.mxu0
        %1461 = vmatprep.mubr.f32.mxu0 0.0
        %1462 = vmatmul.mubr.f32.gmra.mxu0 %v720
        %v1463 = vpop.f32.mrf.mxu0
        %v1464 = vadd.f32 0.0, %v1463
        %v1465 = vpop.f32.mrf.mxu0
        %1466 = vmatprep.mubr.f32.mxu0 0.0
        %1467 = vmatmul.mubr.f32.gmra.mxu0 %v723
        %v1468 = vpop.f32.mrf.mxu0
        %v1469 = vadd.f32 0.0, %v1468
        %v1470 = vpop.f32.mrf.mxu0
        %1471 = vmatprep.mubr.f32.mxu0 0.0
        %1472 = vmatmul.mubr.f32.gmra.mxu0 %v726
        %v1473 = vpop.f32.mrf.mxu0
        %v1474 = vadd.f32 0.0, %v1473
        %v1475 = vpop.f32.mrf.mxu0
        %1476 = vmatprep.mubr.f32.mxu0 0.0
        %1477 = vmatmul.mubr.f32.gmra.mxu0 %v729
        %v1478 = vpop.f32.mrf.mxu0
        %v1479 = vadd.f32 0.0, %v1478
        %v1480 = vpop.f32.mrf.mxu0
        %1481 = vmatprep.mubr.f32.mxu0 0.0
        %1482 = vmatmul.mubr.f32.gmra.mxu0 %v732
        %v1483 = vpop.f32.mrf.mxu0
        %v1484 = vadd.f32 0.0, %v1483
        %v1485 = vpop.f32.mrf.mxu0
        %1486 = vdwg.mxu0
        %v1487 = vmul.f32 %v189, %v189
        %v1488 = vmul.f32 %v190, %v190
        %v1489 = vmul.f32 %v191, %v191
        %v1490 = vmul.f32 %v192, %v192
        %v1491 = vmul.f32 %v193, %v193
        %v1492 = vmul.f32 %v194, %v194
        %v1493 = vmul.f32 %v195, %v195
        %v1494 = vmul.f32 %v196, %v196
        %v1495 = vmul.f32 %v197, %v197
        %v1496 = vmul.f32 %v198, %v198
        %v1497 = vmul.f32 %v199, %v199
        %v1498 = vmul.f32 %v200, %v200
        %v1499 = vmul.f32 %v201, %v201
        %v1500 = vmul.f32 %v202, %v202
        %v1501 = vmul.f32 %v203, %v203
        %v1502 = vmul.f32 %v204, %v204
        %v1503 = vmul.f32 %v205, %v205
        %v1504 = vmul.f32 %v206, %v206
        %v1505 = vmul.f32 %v207, %v207
        %v1506 = vmul.f32 %v208, %v208
        %v1507 = vmul.f32 %v209, %v209
        %v1508 = vmul.f32 %v210, %v210
        %v1509 = vmul.f32 %v211, %v211
        %v1510 = vmul.f32 %v212, %v212
        %v1511 = vmul.f32 %v213, %v213
        %v1512 = vmul.f32 %v214, %v214
        %v1513 = vmul.f32 %v215, %v215
        %v1514 = vmul.f32 %v216, %v216
        %v1515 = vmul.f32 %v217, %v217
        %v1516 = vmul.f32 %v218, %v218
        %v1517 = vmul.f32 %v219, %v219
        %v1518 = vmul.f32 %v220, %v220
        %v1519 = vmul.f32 %v221, %v221
        %v1520 = vmul.f32 %v222, %v222
        %v1521 = vmul.f32 %v223, %v223
        %v1522 = vmul.f32 %v224, %v224
        %v1523 = vmul.f32 %v225, %v225
        %v1524 = vmul.f32 %v226, %v226
        %v1525 = vmul.f32 %v227, %v227
        %v1526 = vmul.f32 %v228, %v228
        %v1527 = vmul.f32 %v229, %v229
        %v1528 = vmul.f32 %v230, %v230
        %v1529 = vmul.f32 %v231, %v231
        %v1530 = vmul.f32 %v232, %v232
        %v1531 = vmul.f32 %v233, %v233
        %v1532 = vmul.f32 %v234, %v234
        %v1533 = vmul.f32 %v235, %v235
        %v1534 = vmul.f32 %v236, %v236
        %v1535 = vmul.f32 %v237, %v237
        %v1536 = vmul.f32 %v238, %v238
        %v1537 = vmul.f32 %v239, %v239
        %v1538 = vmul.f32 %v240, %v240
        %v1539 = vmul.f32 %v241, %v241
        %v1540 = vmul.f32 %v242, %v242
        %v1541 = vmul.f32 %v243, %v243
        %v1542 = vmul.f32 %v244, %v244
        %v1543 = vmul.f32 %v245, %v245
        %v1544 = vmul.f32 %v246, %v246
        %v1545 = vmul.f32 %v247, %v247
        %v1546 = vmul.f32 %v248, %v248
        %v1547 = vmul.f32 %v249, %v249
        %v1548 = vmul.f32 %v250, %v250
        %v1549 = vmul.f32 %v251, %v251
        %v1550 = vmul.f32 %v252, %v252
        %v1551 = vsel %vm349, %v1487, 0.0
        %1552 = vadd.xlane.f32.xlu0 %v1551
        %v1553 = vpop.xlane.xlu0 %1552
        %v1554 = vsel %vm349, %v1488, 0.0
        %1555 = vadd.xlane.f32.xlu0 %v1554
        %v1556 = vpop.xlane.xlu0 %1555
        %v1557 = vsel %vm349, %v1489, 0.0
        %1558 = vadd.xlane.f32.xlu0 %v1557
        %v1559 = vpop.xlane.xlu0 %1558
        %v1560 = vsel %vm349, %v1490, 0.0
        %1561 = vadd.xlane.f32.xlu0 %v1560
        %v1562 = vpop.xlane.xlu0 %1561
        %v1563 = vsel %vm349, %v1491, 0.0
        %1564 = vadd.xlane.f32.xlu0 %v1563
        %v1565 = vpop.xlane.xlu0 %1564
        %v1566 = vsel %vm349, %v1492, 0.0
        %1567 = vadd.xlane.f32.xlu0 %v1566
        %v1568 = vpop.xlane.xlu0 %1567
        %v1569 = vsel %vm349, %v1493, 0.0
        %1570 = vadd.xlane.f32.xlu0 %v1569
        %v1571 = vpop.xlane.xlu0 %1570
        %v1572 = vsel %vm349, %v1494, 0.0
        %1573 = vadd.xlane.f32.xlu0 %v1572
        %v1574 = vpop.xlane.xlu0 %1573
        %v1575 = vsel %vm349, %v1495, 0.0
        %1576 = vadd.xlane.f32.xlu0 %v1575
        %v1577 = vpop.xlane.xlu0 %1576
        %v1578 = vsel %vm349, %v1496, 0.0
        %1579 = vadd.xlane.f32.xlu0 %v1578
        %v1580 = vpop.xlane.xlu0 %1579
        %v1581 = vsel %vm349, %v1497, 0.0
        %1582 = vadd.xlane.f32.xlu0 %v1581
        %v1583 = vpop.xlane.xlu0 %1582
        %v1584 = vsel %vm349, %v1498, 0.0
        %1585 = vadd.xlane.f32.xlu0 %v1584
        %v1586 = vpop.xlane.xlu0 %1585
        %v1587 = vsel %vm349, %v1499, 0.0
        %1588 = vadd.xlane.f32.xlu0 %v1587
        %v1589 = vpop.xlane.xlu0 %1588
        %v1590 = vsel %vm349, %v1500, 0.0
        %1591 = vadd.xlane.f32.xlu0 %v1590
        %v1592 = vpop.xlane.xlu0 %1591
        %v1593 = vsel %vm349, %v1501, 0.0
        %1594 = vadd.xlane.f32.xlu0 %v1593
        %v1595 = vpop.xlane.xlu0 %1594
        %v1596 = vsel %vm349, %v1502, 0.0
        %1597 = vadd.xlane.f32.xlu0 %v1596
        %v1598 = vpop.xlane.xlu0 %1597
        %v1599 = vsel %vm349, %v1503, 0.0
        %1600 = vadd.xlane.f32.xlu0 %v1599
        %v1601 = vpop.xlane.xlu0 %1600
        %v1602 = vsel %vm349, %v1504, 0.0
        %1603 = vadd.xlane.f32.xlu0 %v1602
        %v1604 = vpop.xlane.xlu0 %1603
        %v1605 = vsel %vm349, %v1505, 0.0
        %1606 = vadd.xlane.f32.xlu0 %v1605
        %v1607 = vpop.xlane.xlu0 %1606
        %v1608 = vsel %vm349, %v1506, 0.0
        %1609 = vadd.xlane.f32.xlu0 %v1608
        %v1610 = vpop.xlane.xlu0 %1609
        %v1611 = vsel %vm349, %v1507, 0.0
        %1612 = vadd.xlane.f32.xlu0 %v1611
        %v1613 = vpop.xlane.xlu0 %1612
        %v1614 = vsel %vm349, %v1508, 0.0
        %1615 = vadd.xlane.f32.xlu0 %v1614
        %v1616 = vpop.xlane.xlu0 %1615
        %v1617 = vsel %vm349, %v1509, 0.0
        %1618 = vadd.xlane.f32.xlu0 %v1617
        %v1619 = vpop.xlane.xlu0 %1618
        %v1620 = vsel %vm349, %v1510, 0.0
        %1621 = vadd.xlane.f32.xlu0 %v1620
        %v1622 = vpop.xlane.xlu0 %1621
        %v1623 = vsel %vm349, %v1511, 0.0
        %1624 = vadd.xlane.f32.xlu0 %v1623
        %v1625 = vpop.xlane.xlu0 %1624
        %v1626 = vsel %vm349, %v1512, 0.0
        %1627 = vadd.xlane.f32.xlu0 %v1626
        %v1628 = vpop.xlane.xlu0 %1627
        %v1629 = vsel %vm349, %v1513, 0.0
        %1630 = vadd.xlane.f32.xlu0 %v1629
        %v1631 = vpop.xlane.xlu0 %1630
        %v1632 = vsel %vm349, %v1514, 0.0
        %1633 = vadd.xlane.f32.xlu0 %v1632
        %v1634 = vpop.xlane.xlu0 %1633
        %v1635 = vsel %vm349, %v1515, 0.0
        %1636 = vadd.xlane.f32.xlu0 %v1635
        %v1637 = vpop.xlane.xlu0 %1636
        %v1638 = vsel %vm349, %v1516, 0.0
        %1639 = vadd.xlane.f32.xlu0 %v1638
        %v1640 = vpop.xlane.xlu0 %1639
        %v1641 = vsel %vm349, %v1517, 0.0
        %1642 = vadd.xlane.f32.xlu0 %v1641
        %v1643 = vpop.xlane.xlu0 %1642
        %v1644 = vsel %vm349, %v1518, 0.0
        %1645 = vadd.xlane.f32.xlu0 %v1644
        %v1646 = vpop.xlane.xlu0 %1645
        %v1647 = vsel %vm349, %v1519, 0.0
        %1648 = vadd.xlane.f32.xlu0 %v1647
        %v1649 = vpop.xlane.xlu0 %1648
        %v1650 = vsel %vm349, %v1520, 0.0
        %1651 = vadd.xlane.f32.xlu0 %v1650
        %v1652 = vpop.xlane.xlu0 %1651
        %v1653 = vsel %vm349, %v1521, 0.0
        %1654 = vadd.xlane.f32.xlu0 %v1653
        %v1655 = vpop.xlane.xlu0 %1654
        %v1656 = vsel %vm349, %v1522, 0.0
        %1657 = vadd.xlane.f32.xlu0 %v1656
        %v1658 = vpop.xlane.xlu0 %1657
        %v1659 = vsel %vm349, %v1523, 0.0
        %1660 = vadd.xlane.f32.xlu0 %v1659
        %v1661 = vpop.xlane.xlu0 %1660
        %v1662 = vsel %vm349, %v1524, 0.0
        %1663 = vadd.xlane.f32.xlu0 %v1662
        %v1664 = vpop.xlane.xlu0 %1663
        %v1665 = vsel %vm349, %v1525, 0.0
        %1666 = vadd.xlane.f32.xlu0 %v1665
        %v1667 = vpop.xlane.xlu0 %1666
        %v1668 = vsel %vm349, %v1526, 0.0
        %1669 = vadd.xlane.f32.xlu0 %v1668
        %v1670 = vpop.xlane.xlu0 %1669
        %v1671 = vsel %vm349, %v1527, 0.0
        %1672 = vadd.xlane.f32.xlu0 %v1671
        %v1673 = vpop.xlane.xlu0 %1672
        %v1674 = vsel %vm349, %v1528, 0.0
        %1675 = vadd.xlane.f32.xlu0 %v1674
        %v1676 = vpop.xlane.xlu0 %1675
        %v1677 = vsel %vm349, %v1529, 0.0
        %1678 = vadd.xlane.f32.xlu0 %v1677
        %v1679 = vpop.xlane.xlu0 %1678
        %v1680 = vsel %vm349, %v1530, 0.0
        %1681 = vadd.xlane.f32.xlu0 %v1680
        %v1682 = vpop.xlane.xlu0 %1681
        %v1683 = vsel %vm349, %v1531, 0.0
        %1684 = vadd.xlane.f32.xlu0 %v1683
        %v1685 = vpop.xlane.xlu0 %1684
        %v1686 = vsel %vm349, %v1532, 0.0
        %1687 = vadd.xlane.f32.xlu0 %v1686
        %v1688 = vpop.xlane.xlu0 %1687
        %v1689 = vsel %vm349, %v1533, 0.0
        %1690 = vadd.xlane.f32.xlu0 %v1689
        %v1691 = vpop.xlane.xlu0 %1690
        %v1692 = vsel %vm349, %v1534, 0.0
        %1693 = vadd.xlane.f32.xlu0 %v1692
        %v1694 = vpop.xlane.xlu0 %1693
        %v1695 = vsel %vm349, %v1535, 0.0
        %1696 = vadd.xlane.f32.xlu0 %v1695
        %v1697 = vpop.xlane.xlu0 %1696
        %v1698 = vsel %vm349, %v1536, 0.0
        %1699 = vadd.xlane.f32.xlu0 %v1698
        %v1700 = vpop.xlane.xlu0 %1699
        %v1701 = vsel %vm349, %v1537, 0.0
        %1702 = vadd.xlane.f32.xlu0 %v1701
        %v1703 = vpop.xlane.xlu0 %1702
        %v1704 = vsel %vm349, %v1538, 0.0
        %1705 = vadd.xlane.f32.xlu0 %v1704
        %v1706 = vpop.xlane.xlu0 %1705
        %v1707 = vsel %vm349, %v1539, 0.0
        %1708 = vadd.xlane.f32.xlu0 %v1707
        %v1709 = vpop.xlane.xlu0 %1708
        %v1710 = vsel %vm349, %v1540, 0.0
        %1711 = vadd.xlane.f32.xlu0 %v1710
        %v1712 = vpop.xlane.xlu0 %1711
        %v1713 = vsel %vm349, %v1541, 0.0
        %1714 = vadd.xlane.f32.xlu0 %v1713
        %v1715 = vpop.xlane.xlu0 %1714
        %v1716 = vsel %vm349, %v1542, 0.0
        %1717 = vadd.xlane.f32.xlu0 %v1716
        %v1718 = vpop.xlane.xlu0 %1717
        %v1719 = vsel %vm349, %v1543, 0.0
        %1720 = vadd.xlane.f32.xlu0 %v1719
        %v1721 = vpop.xlane.xlu0 %1720
        %v1722 = vsel %vm349, %v1544, 0.0
        %1723 = vadd.xlane.f32.xlu0 %v1722
        %v1724 = vpop.xlane.xlu0 %1723
        %v1725 = vsel %vm349, %v1545, 0.0
        %1726 = vadd.xlane.f32.xlu0 %v1725
        %v1727 = vpop.xlane.xlu0 %1726
        %v1728 = vsel %vm349, %v1546, 0.0
        %1729 = vadd.xlane.f32.xlu0 %v1728
        %v1730 = vpop.xlane.xlu0 %1729
        %v1731 = vsel %vm349, %v1547, 0.0
        %1732 = vadd.xlane.f32.xlu0 %v1731
        %v1733 = vpop.xlane.xlu0 %1732
        %v1734 = vsel %vm349, %v1548, 0.0
        %1735 = vadd.xlane.f32.xlu0 %v1734
        %v1736 = vpop.xlane.xlu0 %1735
        %v1737 = vsel %vm349, %v1549, 0.0
        %1738 = vadd.xlane.f32.xlu0 %v1737
        %v1739 = vpop.xlane.xlu0 %1738
        %v1740 = vsel %vm349, %v1550, 0.0
        %1741 = vadd.xlane.f32.xlu0 %v1740
        %v1742 = vpop.xlane.xlu0 %1741
        %v1743 = vmul.f32 %v1553, 0.088388346
        %v1744 = vmul.f32 %v1556, 0.088388346
        %v1745 = vmul.f32 %v1559, 0.088388346
        %v1746 = vmul.f32 %v1562, 0.088388346
        %v1747 = vmul.f32 %v1565, 0.088388346
        %v1748 = vmul.f32 %v1568, 0.088388346
        %v1749 = vmul.f32 %v1571, 0.088388346
        %v1750 = vmul.f32 %v1574, 0.088388346
        %v1751 = vmul.f32 %v1577, 0.088388346
        %v1752 = vmul.f32 %v1580, 0.088388346
        %v1753 = vmul.f32 %v1583, 0.088388346
        %v1754 = vmul.f32 %v1586, 0.088388346
        %v1755 = vmul.f32 %v1589, 0.088388346
        %v1756 = vmul.f32 %v1592, 0.088388346
        %v1757 = vmul.f32 %v1595, 0.088388346
        %v1758 = vmul.f32 %v1598, 0.088388346
        %v1759 = vmul.f32 %v1601, 0.088388346
        %v1760 = vmul.f32 %v1604, 0.088388346
        %v1761 = vmul.f32 %v1607, 0.088388346
        %v1762 = vmul.f32 %v1610, 0.088388346
        %v1763 = vmul.f32 %v1613, 0.088388346
        %v1764 = vmul.f32 %v1616, 0.088388346
        %v1765 = vmul.f32 %v1619, 0.088388346
        %v1766 = vmul.f32 %v1622, 0.088388346
        %v1767 = vmul.f32 %v1625, 0.088388346
        %v1768 = vmul.f32 %v1628, 0.088388346
        %v1769 = vmul.f32 %v1631, 0.088388346
        %v1770 = vmul.f32 %v1634, 0.088388346
        %v1771 = vmul.f32 %v1637, 0.088388346
        %v1772 = vmul.f32 %v1640, 0.088388346
        %v1773 = vmul.f32 %v1643, 0.088388346
        %v1774 = vmul.f32 %v1646, 0.088388346
        %v1775 = vmul.f32 %v1649, 0.088388346
        %v1776 = vmul.f32 %v1652, 0.088388346
        %v1777 = vmul.f32 %v1655, 0.088388346
        %v1778 = vmul.f32 %v1658, 0.088388346
        %v1779 = vmul.f32 %v1661, 0.088388346
        %v1780 = vmul.f32 %v1664, 0.088388346
        %v1781 = vmul.f32 %v1667, 0.088388346
        %v1782 = vmul.f32 %v1670, 0.088388346
        %v1783 = vmul.f32 %v1673, 0.088388346
        %v1784 = vmul.f32 %v1676, 0.088388346
        %v1785 = vmul.f32 %v1679, 0.088388346
        %v1786 = vmul.f32 %v1682, 0.088388346
        %v1787 = vmul.f32 %v1685, 0.088388346
        %v1788 = vmul.f32 %v1688, 0.088388346
        %v1789 = vmul.f32 %v1691, 0.088388346
        %v1790 = vmul.f32 %v1694, 0.088388346
        %v1791 = vmul.f32 %v1697, 0.088388346
        %v1792 = vmul.f32 %v1700, 0.088388346
        %v1793 = vmul.f32 %v1703, 0.088388346
        %v1794 = vmul.f32 %v1706, 0.088388346
        %v1795 = vmul.f32 %v1709, 0.088388346
        %v1796 = vmul.f32 %v1712, 0.088388346
        %v1797 = vmul.f32 %v1715, 0.088388346
        %v1798 = vmul.f32 %v1718, 0.088388346
        %v1799 = vmul.f32 %v1721, 0.088388346
        %v1800 = vmul.f32 %v1724, 0.088388346
        %v1801 = vmul.f32 %v1727, 0.088388346
        %v1802 = vmul.f32 %v1730, 0.088388346
        %v1803 = vmul.f32 %v1733, 0.088388346
        %v1804 = vmul.f32 %v1736, 0.088388346
        %v1805 = vmul.f32 %v1739, 0.088388346
        %v1806 = vmul.f32 %v1742, 0.088388346
        %v1807 = vmul.f32 %v253, %v253
        %v1808 = vmul.f32 %v254, %v254
        %v1809 = vmul.f32 %v255, %v255
        %v1810 = vmul.f32 %v256, %v256
        %v1811 = vmul.f32 %v257, %v257
        %v1812 = vmul.f32 %v258, %v258
        %v1813 = vmul.f32 %v259, %v259
        %v1814 = vmul.f32 %v260, %v260
        %v1815 = vmul.f32 %v261, %v261
        %v1816 = vmul.f32 %v262, %v262
        %v1817 = vmul.f32 %v263, %v263
        %v1818 = vmul.f32 %v264, %v264
        %v1819 = vmul.f32 %v265, %v265
        %v1820 = vmul.f32 %v266, %v266
        %v1821 = vmul.f32 %v267, %v267
        %v1822 = vmul.f32 %v268, %v268
        %v1823 = vmul.f32 %v269, %v269
        %v1824 = vmul.f32 %v270, %v270
        %v1825 = vmul.f32 %v271, %v271
        %v1826 = vmul.f32 %v272, %v272
        %v1827 = vmul.f32 %v273, %v273
        %v1828 = vmul.f32 %v274, %v274
        %v1829 = vmul.f32 %v275, %v275
        %v1830 = vmul.f32 %v276, %v276
        %v1831 = vmul.f32 %v277, %v277
        %v1832 = vmul.f32 %v278, %v278
        %v1833 = vmul.f32 %v279, %v279
        %v1834 = vmul.f32 %v280, %v280
        %v1835 = vmul.f32 %v281, %v281
        %v1836 = vmul.f32 %v282, %v282
        %v1837 = vmul.f32 %v283, %v283
        %v1838 = vmul.f32 %v284, %v284
        %v1839 = vmul.f32 %v285, %v285
        %v1840 = vmul.f32 %v286, %v286
        %v1841 = vmul.f32 %v287, %v287
        %v1842 = vmul.f32 %v288, %v288
        %v1843 = vmul.f32 %v289, %v289
        %v1844 = vmul.f32 %v290, %v290
        %v1845 = vmul.f32 %v291, %v291
        %v1846 = vmul.f32 %v292, %v292
        %v1847 = vmul.f32 %v293, %v293
        %v1848 = vmul.f32 %v294, %v294
        %v1849 = vmul.f32 %v295, %v295
        %v1850 = vmul.f32 %v296, %v296
        %v1851 = vmul.f32 %v297, %v297
        %v1852 = vmul.f32 %v298, %v298
        %v1853 = vmul.f32 %v299, %v299
        %v1854 = vmul.f32 %v300, %v300
        %v1855 = vmul.f32 %v301, %v301
        %v1856 = vmul.f32 %v302, %v302
        %v1857 = vmul.f32 %v303, %v303
        %v1858 = vmul.f32 %v304, %v304
        %v1859 = vmul.f32 %v305, %v305
        %v1860 = vmul.f32 %v306, %v306
        %v1861 = vmul.f32 %v307, %v307
        %v1862 = vmul.f32 %v308, %v308
        %v1863 = vmul.f32 %v309, %v309
        %v1864 = vmul.f32 %v310, %v310
        %v1865 = vmul.f32 %v311, %v311
        %v1866 = vmul.f32 %v312, %v312
        %v1867 = vmul.f32 %v313, %v313
        %v1868 = vmul.f32 %v314, %v314
        %v1869 = vmul.f32 %v315, %v315
        %v1870 = vmul.f32 %v316, %v316
        %v1871 = vsel %vm349, %v1807, 0.0
        %1872 = vadd.xlane.f32.xlu0 %v1871
        %v1873 = vpop.xlane.xlu0 %1872
        %v1874 = vsel %vm349, %v1808, 0.0
        %1875 = vadd.xlane.f32.xlu0 %v1874
        %v1876 = vpop.xlane.xlu0 %1875
        %v1877 = vsel %vm349, %v1809, 0.0
        %1878 = vadd.xlane.f32.xlu0 %v1877
        %v1879 = vpop.xlane.xlu0 %1878
        %v1880 = vsel %vm349, %v1810, 0.0
        %1881 = vadd.xlane.f32.xlu0 %v1880
        %v1882 = vpop.xlane.xlu0 %1881
        %v1883 = vsel %vm349, %v1811, 0.0
        %1884 = vadd.xlane.f32.xlu0 %v1883
        %v1885 = vpop.xlane.xlu0 %1884
        %v1886 = vsel %vm349, %v1812, 0.0
        %1887 = vadd.xlane.f32.xlu0 %v1886
        %v1888 = vpop.xlane.xlu0 %1887
        %v1889 = vsel %vm349, %v1813, 0.0
        %1890 = vadd.xlane.f32.xlu0 %v1889
        %v1891 = vpop.xlane.xlu0 %1890
        %v1892 = vsel %vm349, %v1814, 0.0
        %1893 = vadd.xlane.f32.xlu0 %v1892
        %v1894 = vpop.xlane.xlu0 %1893
        %v1895 = vsel %vm349, %v1815, 0.0
        %1896 = vadd.xlane.f32.xlu0 %v1895
        %v1897 = vpop.xlane.xlu0 %1896
        %v1898 = vsel %vm349, %v1816, 0.0
        %1899 = vadd.xlane.f32.xlu0 %v1898
        %v1900 = vpop.xlane.xlu0 %1899
        %v1901 = vsel %vm349, %v1817, 0.0
        %1902 = vadd.xlane.f32.xlu0 %v1901
        %v1903 = vpop.xlane.xlu0 %1902
        %v1904 = vsel %vm349, %v1818, 0.0
        %1905 = vadd.xlane.f32.xlu0 %v1904
        %v1906 = vpop.xlane.xlu0 %1905
        %v1907 = vsel %vm349, %v1819, 0.0
        %1908 = vadd.xlane.f32.xlu0 %v1907
        %v1909 = vpop.xlane.xlu0 %1908
        %v1910 = vsel %vm349, %v1820, 0.0
        %1911 = vadd.xlane.f32.xlu0 %v1910
        %v1912 = vpop.xlane.xlu0 %1911
        %v1913 = vsel %vm349, %v1821, 0.0
        %1914 = vadd.xlane.f32.xlu0 %v1913
        %v1915 = vpop.xlane.xlu0 %1914
        %v1916 = vsel %vm349, %v1822, 0.0
        %1917 = vadd.xlane.f32.xlu0 %v1916
        %v1918 = vpop.xlane.xlu0 %1917
        %v1919 = vsel %vm349, %v1823, 0.0
        %1920 = vadd.xlane.f32.xlu0 %v1919
        %v1921 = vpop.xlane.xlu0 %1920
        %v1922 = vsel %vm349, %v1824, 0.0
        %1923 = vadd.xlane.f32.xlu0 %v1922
        %v1924 = vpop.xlane.xlu0 %1923
        %v1925 = vsel %vm349, %v1825, 0.0
        %1926 = vadd.xlane.f32.xlu0 %v1925
        %v1927 = vpop.xlane.xlu0 %1926
        %v1928 = vsel %vm349, %v1826, 0.0
        %1929 = vadd.xlane.f32.xlu0 %v1928
        %v1930 = vpop.xlane.xlu0 %1929
        %v1931 = vsel %vm349, %v1827, 0.0
        %1932 = vadd.xlane.f32.xlu0 %v1931
        %v1933 = vpop.xlane.xlu0 %1932
        %v1934 = vsel %vm349, %v1828, 0.0
        %1935 = vadd.xlane.f32.xlu0 %v1934
        %v1936 = vpop.xlane.xlu0 %1935
        %v1937 = vsel %vm349, %v1829, 0.0
        %1938 = vadd.xlane.f32.xlu0 %v1937
        %v1939 = vpop.xlane.xlu0 %1938
        %v1940 = vsel %vm349, %v1830, 0.0
        %1941 = vadd.xlane.f32.xlu0 %v1940
        %v1942 = vpop.xlane.xlu0 %1941
        %v1943 = vsel %vm349, %v1831, 0.0
        %1944 = vadd.xlane.f32.xlu0 %v1943
        %v1945 = vpop.xlane.xlu0 %1944
        %v1946 = vsel %vm349, %v1832, 0.0
        %1947 = vadd.xlane.f32.xlu0 %v1946
        %v1948 = vpop.xlane.xlu0 %1947
        %v1949 = vsel %vm349, %v1833, 0.0
        %1950 = vadd.xlane.f32.xlu0 %v1949
        %v1951 = vpop.xlane.xlu0 %1950
        %v1952 = vsel %vm349, %v1834, 0.0
        %1953 = vadd.xlane.f32.xlu0 %v1952
        %v1954 = vpop.xlane.xlu0 %1953
        %v1955 = vsel %vm349, %v1835, 0.0
        %1956 = vadd.xlane.f32.xlu0 %v1955
        %v1957 = vpop.xlane.xlu0 %1956
        %v1958 = vsel %vm349, %v1836, 0.0
        %1959 = vadd.xlane.f32.xlu0 %v1958
        %v1960 = vpop.xlane.xlu0 %1959
        %v1961 = vsel %vm349, %v1837, 0.0
        %1962 = vadd.xlane.f32.xlu0 %v1961
        %v1963 = vpop.xlane.xlu0 %1962
        %v1964 = vsel %vm349, %v1838, 0.0
        %1965 = vadd.xlane.f32.xlu0 %v1964
        %v1966 = vpop.xlane.xlu0 %1965
        %v1967 = vsel %vm349, %v1839, 0.0
        %1968 = vadd.xlane.f32.xlu0 %v1967
        %v1969 = vpop.xlane.xlu0 %1968
        %v1970 = vsel %vm349, %v1840, 0.0
        %1971 = vadd.xlane.f32.xlu0 %v1970
        %v1972 = vpop.xlane.xlu0 %1971
        %v1973 = vsel %vm349, %v1841, 0.0
        %1974 = vadd.xlane.f32.xlu0 %v1973
        %v1975 = vpop.xlane.xlu0 %1974
        %v1976 = vsel %vm349, %v1842, 0.0
        %1977 = vadd.xlane.f32.xlu0 %v1976
        %v1978 = vpop.xlane.xlu0 %1977
        %v1979 = vsel %vm349, %v1843, 0.0
        %1980 = vadd.xlane.f32.xlu0 %v1979
        %v1981 = vpop.xlane.xlu0 %1980
        %v1982 = vsel %vm349, %v1844, 0.0
        %1983 = vadd.xlane.f32.xlu0 %v1982
        %v1984 = vpop.xlane.xlu0 %1983
        %v1985 = vsel %vm349, %v1845, 0.0
        %1986 = vadd.xlane.f32.xlu0 %v1985
        %v1987 = vpop.xlane.xlu0 %1986
        %v1988 = vsel %vm349, %v1846, 0.0
        %1989 = vadd.xlane.f32.xlu0 %v1988
        %v1990 = vpop.xlane.xlu0 %1989
        %v1991 = vsel %vm349, %v1847, 0.0
        %1992 = vadd.xlane.f32.xlu0 %v1991
        %v1993 = vpop.xlane.xlu0 %1992
        %v1994 = vsel %vm349, %v1848, 0.0
        %1995 = vadd.xlane.f32.xlu0 %v1994
        %v1996 = vpop.xlane.xlu0 %1995
        %v1997 = vsel %vm349, %v1849, 0.0
        %1998 = vadd.xlane.f32.xlu0 %v1997
        %v1999 = vpop.xlane.xlu0 %1998
        %v2000 = vsel %vm349, %v1850, 0.0
        %2001 = vadd.xlane.f32.xlu0 %v2000
        %v2002 = vpop.xlane.xlu0 %2001
        %v2003 = vsel %vm349, %v1851, 0.0
        %2004 = vadd.xlane.f32.xlu0 %v2003
        %v2005 = vpop.xlane.xlu0 %2004
        %v2006 = vsel %vm349, %v1852, 0.0
        %2007 = vadd.xlane.f32.xlu0 %v2006
        %v2008 = vpop.xlane.xlu0 %2007
        %v2009 = vsel %vm349, %v1853, 0.0
        %2010 = vadd.xlane.f32.xlu0 %v2009
        %v2011 = vpop.xlane.xlu0 %2010
        %v2012 = vsel %vm349, %v1854, 0.0
        %2013 = vadd.xlane.f32.xlu0 %v2012
        %v2014 = vpop.xlane.xlu0 %2013
        %v2015 = vsel %vm349, %v1855, 0.0
        %2016 = vadd.xlane.f32.xlu0 %v2015
        %v2017 = vpop.xlane.xlu0 %2016
        %v2018 = vsel %vm349, %v1856, 0.0
        %2019 = vadd.xlane.f32.xlu0 %v2018
        %v2020 = vpop.xlane.xlu0 %2019
        %v2021 = vsel %vm349, %v1857, 0.0
        %2022 = vadd.xlane.f32.xlu0 %v2021
        %v2023 = vpop.xlane.xlu0 %2022
        %v2024 = vsel %vm349, %v1858, 0.0
        %2025 = vadd.xlane.f32.xlu0 %v2024
        %v2026 = vpop.xlane.xlu0 %2025
        %v2027 = vsel %vm349, %v1859, 0.0
        %2028 = vadd.xlane.f32.xlu0 %v2027
        %v2029 = vpop.xlane.xlu0 %2028
        %v2030 = vsel %vm349, %v1860, 0.0
        %2031 = vadd.xlane.f32.xlu0 %v2030
        %v2032 = vpop.xlane.xlu0 %2031
        %v2033 = vsel %vm349, %v1861, 0.0
        %2034 = vadd.xlane.f32.xlu0 %v2033
        %v2035 = vpop.xlane.xlu0 %2034
        %v2036 = vsel %vm349, %v1862, 0.0
        %2037 = vadd.xlane.f32.xlu0 %v2036
        %v2038 = vpop.xlane.xlu0 %2037
        %v2039 = vsel %vm349, %v1863, 0.0
        %2040 = vadd.xlane.f32.xlu0 %v2039
        %v2041 = vpop.xlane.xlu0 %2040
        %v2042 = vsel %vm349, %v1864, 0.0
        %2043 = vadd.xlane.f32.xlu0 %v2042
        %v2044 = vpop.xlane.xlu0 %2043
        %v2045 = vsel %vm349, %v1865, 0.0
        %2046 = vadd.xlane.f32.xlu0 %v2045
        %v2047 = vpop.xlane.xlu0 %2046
        %v2048 = vsel %vm349, %v1866, 0.0
        %2049 = vadd.xlane.f32.xlu0 %v2048
        %v2050 = vpop.xlane.xlu0 %2049
        %v2051 = vsel %vm349, %v1867, 0.0
        %2052 = vadd.xlane.f32.xlu0 %v2051
        %v2053 = vpop.xlane.xlu0 %2052
        %v2054 = vsel %vm349, %v1868, 0.0
        %2055 = vadd.xlane.f32.xlu0 %v2054
        %v2056 = vpop.xlane.xlu0 %2055
        %v2057 = vsel %vm349, %v1869, 0.0
        %2058 = vadd.xlane.f32.xlu0 %v2057
        %v2059 = vpop.xlane.xlu0 %2058
        %v2060 = vsel %vm349, %v1870, 0.0
        %2061 = vadd.xlane.f32.xlu0 %v2060
        %v2062 = vpop.xlane.xlu0 %2061
        %v2063 = vmul.f32 %v1873, 0.088388346
        %v2064 = vmul.f32 %v1876, 0.088388346
        %v2065 = vmul.f32 %v1879, 0.088388346
        %v2066 = vmul.f32 %v1882, 0.088388346
        %v2067 = vmul.f32 %v1885, 0.088388346
        %v2068 = vmul.f32 %v1888, 0.088388346
        %v2069 = vmul.f32 %v1891, 0.088388346
        %v2070 = vmul.f32 %v1894, 0.088388346
        %v2071 = vmul.f32 %v1897, 0.088388346
        %v2072 = vmul.f32 %v1900, 0.088388346
        %v2073 = vmul.f32 %v1903, 0.088388346
        %v2074 = vmul.f32 %v1906, 0.088388346
        %v2075 = vmul.f32 %v1909, 0.088388346
        %v2076 = vmul.f32 %v1912, 0.088388346
        %v2077 = vmul.f32 %v1915, 0.088388346
        %v2078 = vmul.f32 %v1918, 0.088388346
        %v2079 = vmul.f32 %v1921, 0.088388346
        %v2080 = vmul.f32 %v1924, 0.088388346
        %v2081 = vmul.f32 %v1927, 0.088388346
        %v2082 = vmul.f32 %v1930, 0.088388346
        %v2083 = vmul.f32 %v1933, 0.088388346
        %v2084 = vmul.f32 %v1936, 0.088388346
        %v2085 = vmul.f32 %v1939, 0.088388346
        %v2086 = vmul.f32 %v1942, 0.088388346
        %v2087 = vmul.f32 %v1945, 0.088388346
        %v2088 = vmul.f32 %v1948, 0.088388346
        %v2089 = vmul.f32 %v1951, 0.088388346
        %v2090 = vmul.f32 %v1954, 0.088388346
        %v2091 = vmul.f32 %v1957, 0.088388346
        %v2092 = vmul.f32 %v1960, 0.088388346
        %v2093 = vmul.f32 %v1963, 0.088388346
        %v2094 = vmul.f32 %v1966, 0.088388346
        %v2095 = vmul.f32 %v1969, 0.088388346
        %v2096 = vmul.f32 %v1972, 0.088388346
        %v2097 = vmul.f32 %v1975, 0.088388346
        %v2098 = vmul.f32 %v1978, 0.088388346
        %v2099 = vmul.f32 %v1981, 0.088388346
        %v2100 = vmul.f32 %v1984, 0.088388346
        %v2101 = vmul.f32 %v1987, 0.088388346
        %v2102 = vmul.f32 %v1990, 0.088388346
        %v2103 = vmul.f32 %v1993, 0.088388346
        %v2104 = vmul.f32 %v1996, 0.088388346
        %v2105 = vmul.f32 %v1999, 0.088388346
        %v2106 = vmul.f32 %v2002, 0.088388346
        %v2107 = vmul.f32 %v2005, 0.088388346
        %v2108 = vmul.f32 %v2008, 0.088388346
        %v2109 = vmul.f32 %v2011, 0.088388346
        %v2110 = vmul.f32 %v2014, 0.088388346
        %v2111 = vmul.f32 %v2017, 0.088388346
        %v2112 = vmul.f32 %v2020, 0.088388346
        %v2113 = vmul.f32 %v2023, 0.088388346
        %v2114 = vmul.f32 %v2026, 0.088388346
        %v2115 = vmul.f32 %v2029, 0.088388346
        %v2116 = vmul.f32 %v2032, 0.088388346
        %v2117 = vmul.f32 %v2035, 0.088388346
        %v2118 = vmul.f32 %v2038, 0.088388346
        %v2119 = vmul.f32 %v2041, 0.088388346
        %v2120 = vmul.f32 %v2044, 0.088388346
        %v2121 = vmul.f32 %v2047, 0.088388346
        %v2122 = vmul.f32 %v2050, 0.088388346
        %v2123 = vmul.f32 %v2053, 0.088388346
        %v2124 = vmul.f32 %v2056, 0.088388346
        %v2125 = vmul.f32 %v2059, 0.088388346
        %v2126 = vmul.f32 %v2062, 0.088388346
        %2127 = vmax.xlane.f32.xlu0 %v849
        %v2128 = vpop.xlane.xlu0 %2127
        %2129 = vmax.xlane.f32.xlu0 %v854
        %v2130 = vpop.xlane.xlu0 %2129
        %2131 = vmax.xlane.f32.xlu0 %v859
        %v2132 = vpop.xlane.xlu0 %2131
        %2133 = vmax.xlane.f32.xlu0 %v864
        %v2134 = vpop.xlane.xlu0 %2133
        %2135 = vmax.xlane.f32.xlu0 %v869
        %v2136 = vpop.xlane.xlu0 %2135
        %2137 = vmax.xlane.f32.xlu0 %v874
        %v2138 = vpop.xlane.xlu0 %2137
        %2139 = vmax.xlane.f32.xlu0 %v879
        %v2140 = vpop.xlane.xlu0 %2139
        %2141 = vmax.xlane.f32.xlu0 %v884
        %v2142 = vpop.xlane.xlu0 %2141
        %2143 = vmax.xlane.f32.xlu0 %v889
        %v2144 = vpop.xlane.xlu0 %2143
        %2145 = vmax.xlane.f32.xlu0 %v894
        %v2146 = vpop.xlane.xlu0 %2145
        %2147 = vmax.xlane.f32.xlu0 %v899
        %v2148 = vpop.xlane.xlu0 %2147
        %2149 = vmax.xlane.f32.xlu0 %v904
        %v2150 = vpop.xlane.xlu0 %2149
        %2151 = vmax.xlane.f32.xlu0 %v909
        %v2152 = vpop.xlane.xlu0 %2151
        %2153 = vmax.xlane.f32.xlu0 %v914
        %v2154 = vpop.xlane.xlu0 %2153
        %2155 = vmax.xlane.f32.xlu0 %v919
        %v2156 = vpop.xlane.xlu0 %2155
        %2157 = vmax.xlane.f32.xlu0 %v924
        %v2158 = vpop.xlane.xlu0 %2157
        %2159 = vmax.xlane.f32.xlu0 %v929
        %v2160 = vpop.xlane.xlu0 %2159
        %2161 = vmax.xlane.f32.xlu0 %v934
        %v2162 = vpop.xlane.xlu0 %2161
        %2163 = vmax.xlane.f32.xlu0 %v939
        %v2164 = vpop.xlane.xlu0 %2163
        %2165 = vmax.xlane.f32.xlu0 %v944
        %v2166 = vpop.xlane.xlu0 %2165
        %2167 = vmax.xlane.f32.xlu0 %v949
        %v2168 = vpop.xlane.xlu0 %2167
        %2169 = vmax.xlane.f32.xlu0 %v954
        %v2170 = vpop.xlane.xlu0 %2169
        %2171 = vmax.xlane.f32.xlu0 %v959
        %v2172 = vpop.xlane.xlu0 %2171
        %2173 = vmax.xlane.f32.xlu0 %v964
        %v2174 = vpop.xlane.xlu0 %2173
        %2175 = vmax.xlane.f32.xlu0 %v969
        %v2176 = vpop.xlane.xlu0 %2175
        %2177 = vmax.xlane.f32.xlu0 %v974
        %v2178 = vpop.xlane.xlu0 %2177
        %2179 = vmax.xlane.f32.xlu0 %v979
        %v2180 = vpop.xlane.xlu0 %2179
        %2181 = vmax.xlane.f32.xlu0 %v984
        %v2182 = vpop.xlane.xlu0 %2181
        %2183 = vmax.xlane.f32.xlu0 %v989
        %v2184 = vpop.xlane.xlu0 %2183
        %2185 = vmax.xlane.f32.xlu0 %v994
        %v2186 = vpop.xlane.xlu0 %2185
        %2187 = vmax.xlane.f32.xlu0 %v999
        %v2188 = vpop.xlane.xlu0 %2187
        %2189 = vmax.xlane.f32.xlu0 %v1004
        %v2190 = vpop.xlane.xlu0 %2189
        %2191 = vmax.xlane.f32.xlu0 %v1009
        %v2192 = vpop.xlane.xlu0 %2191
        %2193 = vmax.xlane.f32.xlu0 %v1014
        %v2194 = vpop.xlane.xlu0 %2193
        %2195 = vmax.xlane.f32.xlu0 %v1019
        %v2196 = vpop.xlane.xlu0 %2195
        %2197 = vmax.xlane.f32.xlu0 %v1024
        %v2198 = vpop.xlane.xlu0 %2197
        %2199 = vmax.xlane.f32.xlu0 %v1029
        %v2200 = vpop.xlane.xlu0 %2199
        %2201 = vmax.xlane.f32.xlu0 %v1034
        %v2202 = vpop.xlane.xlu0 %2201
        %2203 = vmax.xlane.f32.xlu0 %v1039
        %v2204 = vpop.xlane.xlu0 %2203
        %2205 = vmax.xlane.f32.xlu0 %v1044
        %v2206 = vpop.xlane.xlu0 %2205
        %2207 = vmax.xlane.f32.xlu0 %v1049
        %v2208 = vpop.xlane.xlu0 %2207
        %2209 = vmax.xlane.f32.xlu0 %v1054
        %v2210 = vpop.xlane.xlu0 %2209
        %2211 = vmax.xlane.f32.xlu0 %v1059
        %v2212 = vpop.xlane.xlu0 %2211
        %2213 = vmax.xlane.f32.xlu0 %v1064
        %v2214 = vpop.xlane.xlu0 %2213
        %2215 = vmax.xlane.f32.xlu0 %v1069
        %v2216 = vpop.xlane.xlu0 %2215
        %2217 = vmax.xlane.f32.xlu0 %v1074
        %v2218 = vpop.xlane.xlu0 %2217
        %2219 = vmax.xlane.f32.xlu0 %v1079
        %v2220 = vpop.xlane.xlu0 %2219
        %2221 = vmax.xlane.f32.xlu0 %v1084
        %v2222 = vpop.xlane.xlu0 %2221
        %2223 = vmax.xlane.f32.xlu0 %v1089
        %v2224 = vpop.xlane.xlu0 %2223
        %2225 = vmax.xlane.f32.xlu0 %v1094
        %v2226 = vpop.xlane.xlu0 %2225
        %2227 = vmax.xlane.f32.xlu0 %v1099
        %v2228 = vpop.xlane.xlu0 %2227
        %2229 = vmax.xlane.f32.xlu0 %v1104
        %v2230 = vpop.xlane.xlu0 %2229
        %2231 = vmax.xlane.f32.xlu0 %v1109
        %v2232 = vpop.xlane.xlu0 %2231
        %2233 = vmax.xlane.f32.xlu0 %v1114
        %v2234 = vpop.xlane.xlu0 %2233
        %2235 = vmax.xlane.f32.xlu0 %v1119
        %v2236 = vpop.xlane.xlu0 %2235
        %2237 = vmax.xlane.f32.xlu0 %v1124
        %v2238 = vpop.xlane.xlu0 %2237
        %2239 = vmax.xlane.f32.xlu0 %v1129
        %v2240 = vpop.xlane.xlu0 %2239
        %2241 = vmax.xlane.f32.xlu0 %v1134
        %v2242 = vpop.xlane.xlu0 %2241
        %2243 = vmax.xlane.f32.xlu0 %v1139
        %v2244 = vpop.xlane.xlu0 %2243
        %2245 = vmax.xlane.f32.xlu0 %v1144
        %v2246 = vpop.xlane.xlu0 %2245
        %2247 = vmax.xlane.f32.xlu0 %v1149
        %v2248 = vpop.xlane.xlu0 %2247
        %2249 = vmax.xlane.f32.xlu0 %v1154
        %v2250 = vpop.xlane.xlu0 %2249
        %2251 = vmax.xlane.f32.xlu0 %v1159
        %v2252 = vpop.xlane.xlu0 %2251
        %2253 = vmax.xlane.f32.xlu0 %v1164
        %v2254 = vpop.xlane.xlu0 %2253
        %2255 = vmax.xlane.f32.xlu0 %v1169
        %v2256 = vpop.xlane.xlu0 %2255
        %2257 = vmax.xlane.f32.xlu0 %v1174
        %v2258 = vpop.xlane.xlu0 %2257
        %2259 = vmax.xlane.f32.xlu0 %v1179
        %v2260 = vpop.xlane.xlu0 %2259
        %2261 = vmax.xlane.f32.xlu0 %v1184
        %v2262 = vpop.xlane.xlu0 %2261
        %2263 = vmax.xlane.f32.xlu0 %v1189
        %v2264 = vpop.xlane.xlu0 %2263
        %2265 = vmax.xlane.f32.xlu0 %v1194
        %v2266 = vpop.xlane.xlu0 %2265
        %2267 = vmax.xlane.f32.xlu0 %v1199
        %v2268 = vpop.xlane.xlu0 %2267
        %2269 = vmax.xlane.f32.xlu0 %v1204
        %v2270 = vpop.xlane.xlu0 %2269
        %2271 = vmax.xlane.f32.xlu0 %v1209
        %v2272 = vpop.xlane.xlu0 %2271
        %2273 = vmax.xlane.f32.xlu0 %v1214
        %v2274 = vpop.xlane.xlu0 %2273
        %2275 = vmax.xlane.f32.xlu0 %v1219
        %v2276 = vpop.xlane.xlu0 %2275
        %2277 = vmax.xlane.f32.xlu0 %v1224
        %v2278 = vpop.xlane.xlu0 %2277
        %2279 = vmax.xlane.f32.xlu0 %v1229
        %v2280 = vpop.xlane.xlu0 %2279
        %2281 = vmax.xlane.f32.xlu0 %v1234
        %v2282 = vpop.xlane.xlu0 %2281
        %2283 = vmax.xlane.f32.xlu0 %v1239
        %v2284 = vpop.xlane.xlu0 %2283
        %2285 = vmax.xlane.f32.xlu0 %v1244
        %v2286 = vpop.xlane.xlu0 %2285
        %2287 = vmax.xlane.f32.xlu0 %v1249
        %v2288 = vpop.xlane.xlu0 %2287
        %2289 = vmax.xlane.f32.xlu0 %v1254
        %v2290 = vpop.xlane.xlu0 %2289
        %2291 = vmax.xlane.f32.xlu0 %v1259
        %v2292 = vpop.xlane.xlu0 %2291
        %2293 = vmax.xlane.f32.xlu0 %v1264
        %v2294 = vpop.xlane.xlu0 %2293
        %2295 = vmax.xlane.f32.xlu0 %v1269
        %v2296 = vpop.xlane.xlu0 %2295
        %2297 = vmax.xlane.f32.xlu0 %v1274
        %v2298 = vpop.xlane.xlu0 %2297
        %2299 = vmax.xlane.f32.xlu0 %v1279
        %v2300 = vpop.xlane.xlu0 %2299
        %2301 = vmax.xlane.f32.xlu0 %v1284
        %v2302 = vpop.xlane.xlu0 %2301
        %2303 = vmax.xlane.f32.xlu0 %v1289
        %v2304 = vpop.xlane.xlu0 %2303
        %2305 = vmax.xlane.f32.xlu0 %v1294
        %v2306 = vpop.xlane.xlu0 %2305
        %2307 = vmax.xlane.f32.xlu0 %v1299
        %v2308 = vpop.xlane.xlu0 %2307
        %2309 = vmax.xlane.f32.xlu0 %v1304
        %v2310 = vpop.xlane.xlu0 %2309
        %2311 = vmax.xlane.f32.xlu0 %v1309
        %v2312 = vpop.xlane.xlu0 %2311
        %2313 = vmax.xlane.f32.xlu0 %v1314
        %v2314 = vpop.xlane.xlu0 %2313
        %2315 = vmax.xlane.f32.xlu0 %v1319
        %v2316 = vpop.xlane.xlu0 %2315
        %2317 = vmax.xlane.f32.xlu0 %v1324
        %v2318 = vpop.xlane.xlu0 %2317
        %2319 = vmax.xlane.f32.xlu0 %v1329
        %v2320 = vpop.xlane.xlu0 %2319
        %2321 = vmax.xlane.f32.xlu0 %v1334
        %v2322 = vpop.xlane.xlu0 %2321
        %2323 = vmax.xlane.f32.xlu0 %v1339
        %v2324 = vpop.xlane.xlu0 %2323
        %2325 = vmax.xlane.f32.xlu0 %v1344
        %v2326 = vpop.xlane.xlu0 %2325
        %2327 = vmax.xlane.f32.xlu0 %v1349
        %v2328 = vpop.xlane.xlu0 %2327
        %2329 = vmax.xlane.f32.xlu0 %v1354
        %v2330 = vpop.xlane.xlu0 %2329
        %2331 = vmax.xlane.f32.xlu0 %v1359
        %v2332 = vpop.xlane.xlu0 %2331
        %2333 = vmax.xlane.f32.xlu0 %v1364
        %v2334 = vpop.xlane.xlu0 %2333
        %2335 = vmax.xlane.f32.xlu0 %v1369
        %v2336 = vpop.xlane.xlu0 %2335
        %2337 = vmax.xlane.f32.xlu0 %v1374
        %v2338 = vpop.xlane.xlu0 %2337
        %2339 = vmax.xlane.f32.xlu0 %v1379
        %v2340 = vpop.xlane.xlu0 %2339
        %2341 = vmax.xlane.f32.xlu0 %v1384
        %v2342 = vpop.xlane.xlu0 %2341
        %2343 = vmax.xlane.f32.xlu0 %v1389
        %v2344 = vpop.xlane.xlu0 %2343
        %2345 = vmax.xlane.f32.xlu0 %v1394
        %v2346 = vpop.xlane.xlu0 %2345
        %2347 = vmax.xlane.f32.xlu0 %v1399
        %v2348 = vpop.xlane.xlu0 %2347
        %2349 = vmax.xlane.f32.xlu0 %v1404
        %v2350 = vpop.xlane.xlu0 %2349
        %2351 = vmax.xlane.f32.xlu0 %v1409
        %v2352 = vpop.xlane.xlu0 %2351
        %2353 = vmax.xlane.f32.xlu0 %v1414
        %v2354 = vpop.xlane.xlu0 %2353
        %2355 = vmax.xlane.f32.xlu0 %v1419
        %v2356 = vpop.xlane.xlu0 %2355
        %2357 = vmax.xlane.f32.xlu0 %v1424
        %v2358 = vpop.xlane.xlu0 %2357
        %2359 = vmax.xlane.f32.xlu0 %v1429
        %v2360 = vpop.xlane.xlu0 %2359
        %2361 = vmax.xlane.f32.xlu0 %v1434
        %v2362 = vpop.xlane.xlu0 %2361
        %2363 = vmax.xlane.f32.xlu0 %v1439
        %v2364 = vpop.xlane.xlu0 %2363
        %2365 = vmax.xlane.f32.xlu0 %v1444
        %v2366 = vpop.xlane.xlu0 %2365
        %2367 = vmax.xlane.f32.xlu0 %v1449
        %v2368 = vpop.xlane.xlu0 %2367
        %2369 = vmax.xlane.f32.xlu0 %v1454
        %v2370 = vpop.xlane.xlu0 %2369
        %2371 = vmax.xlane.f32.xlu0 %v1459
        %v2372 = vpop.xlane.xlu0 %2371
        %2373 = vmax.xlane.f32.xlu0 %v1464
        %v2374 = vpop.xlane.xlu0 %2373
        %2375 = vmax.xlane.f32.xlu0 %v1469
        %v2376 = vpop.xlane.xlu0 %2375
        %2377 = vmax.xlane.f32.xlu0 %v1474
        %v2378 = vpop.xlane.xlu0 %2377
        %2379 = vmax.xlane.f32.xlu0 %v1479
        %v2380 = vpop.xlane.xlu0 %2379
        %2381 = vmax.xlane.f32.xlu0 %v1484
        %v2382 = vpop.xlane.xlu0 %2381
        %v2383 = vmax.f32 %v2256, %v2258
        %v2384 = vmax.f32 %v2383, %v2260
        %v2385 = vmax.f32 %v2384, %v2262
        %v2386 = vmax.f32 %v2385, %v2264
        %v2387 = vmax.f32 %v2386, %v2266
        %v2388 = vmax.f32 %v2387, %v2268
        %v2389 = vmax.f32 %v2388, %v2270
        %v2390 = vmax.f32 %v2389, %v2272
        %v2391 = vmax.f32 %v2390, %v2274
        %v2392 = vmax.f32 %v2391, %v2276
        %v2393 = vmax.f32 %v2392, %v2278
        %v2394 = vmax.f32 %v2393, %v2280
        %v2395 = vmax.f32 %v2394, %v2282
        %v2396 = vmax.f32 %v2395, %v2284
        %v2397 = vmax.f32 %v2396, %v2286
        %v2398 = vrot.slane %v2397, 4
        %v2399 = vmax.f32 %v2397, %v2398
        %v2400 = vrot.slane %v2399, 2
        %v2401 = vmax.f32 %v2399, %v2400
        %v2402 = vrot.slane %v2401, 1
        %v2403 = vmax.f32 %v2401, %v2402
        %v2404 = vmax.f32 %v2288, %v2290
        %v2405 = vmax.f32 %v2404, %v2292
        %v2406 = vmax.f32 %v2405, %v2294
        %v2407 = vmax.f32 %v2406, %v2296
        %v2408 = vmax.f32 %v2407, %v2298
        %v2409 = vmax.f32 %v2408, %v2300
        %v2410 = vmax.f32 %v2409, %v2302
        %v2411 = vmax.f32 %v2410, %v2304
        %v2412 = vmax.f32 %v2411, %v2306
        %v2413 = vmax.f32 %v2412, %v2308
        %v2414 = vmax.f32 %v2413, %v2310
        %v2415 = vmax.f32 %v2414, %v2312
        %v2416 = vmax.f32 %v2415, %v2314
        %v2417 = vmax.f32 %v2416, %v2316
        %v2418 = vmax.f32 %v2417, %v2318
        %v2419 = vrot.slane %v2418, 4
        %v2420 = vmax.f32 %v2418, %v2419
        %v2421 = vrot.slane %v2420, 2
        %v2422 = vmax.f32 %v2420, %v2421
        %v2423 = vrot.slane %v2422, 1
        %v2424 = vmax.f32 %v2422, %v2423
        %v2425 = vmax.f32 %v2320, %v2322
        %v2426 = vmax.f32 %v2425, %v2324
        %v2427 = vmax.f32 %v2426, %v2326
        %v2428 = vmax.f32 %v2427, %v2328
        %v2429 = vmax.f32 %v2428, %v2330
        %v2430 = vmax.f32 %v2429, %v2332
        %v2431 = vmax.f32 %v2430, %v2334
        %v2432 = vmax.f32 %v2431, %v2336
        %v2433 = vmax.f32 %v2432, %v2338
        %v2434 = vmax.f32 %v2433, %v2340
        %v2435 = vmax.f32 %v2434, %v2342
        %v2436 = vmax.f32 %v2435, %v2344
        %v2437 = vmax.f32 %v2436, %v2346
        %v2438 = vmax.f32 %v2437, %v2348
        %v2439 = vmax.f32 %v2438, %v2350
        %v2440 = vrot.slane %v2439, 4
        %v2441 = vmax.f32 %v2439, %v2440
        %v2442 = vrot.slane %v2441, 2
        %v2443 = vmax.f32 %v2441, %v2442
        %v2444 = vrot.slane %v2443, 1
        %v2445 = vmax.f32 %v2443, %v2444
        %v2446 = vmax.f32 %v2352, %v2354
        %v2447 = vmax.f32 %v2446, %v2356
        %v2448 = vmax.f32 %v2447, %v2358
        %v2449 = vmax.f32 %v2448, %v2360
        %v2450 = vmax.f32 %v2449, %v2362
        %v2451 = vmax.f32 %v2450, %v2364
        %v2452 = vmax.f32 %v2451, %v2366
        %v2453 = vmax.f32 %v2452, %v2368
        %v2454 = vmax.f32 %v2453, %v2370
        %v2455 = vmax.f32 %v2454, %v2372
        %v2456 = vmax.f32 %v2455, %v2374
        %v2457 = vmax.f32 %v2456, %v2376
        %v2458 = vmax.f32 %v2457, %v2378
        %v2459 = vmax.f32 %v2458, %v2380
        %v2460 = vmax.f32 %v2459, %v2382
        %v2461 = vrot.slane %v2460, 4
        %v2462 = vmax.f32 %v2460, %v2461
        %v2463 = vrot.slane %v2462, 2
        %v2464 = vmax.f32 %v2462, %v2463
        %v2465 = vrot.slane %v2464, 1
        %v2466 = vmax.f32 %v2464, %v2465
        %v2467 = vsub.f32 %v849, %v1743
        %v2468 = vsub.f32 %v854, %v1744
        %v2469 = vsub.f32 %v859, %v1745
        %v2470 = vsub.f32 %v864, %v1746
        %v2471 = vsub.f32 %v869, %v1747
        %v2472 = vsub.f32 %v874, %v1748
        %v2473 = vsub.f32 %v879, %v1749
        %v2474 = vsub.f32 %v884, %v1750
        %v2475 = vsub.f32 %v889, %v1751
        %v2476 = vsub.f32 %v894, %v1752
        %v2477 = vsub.f32 %v899, %v1753
        %v2478 = vsub.f32 %v904, %v1754
        %v2479 = vsub.f32 %v909, %v1755
        %v2480 = vsub.f32 %v914, %v1756
        %v2481 = vsub.f32 %v919, %v1757
        %v2482 = vsub.f32 %v924, %v1758
        %v2483 = vsub.f32 %v929, %v1759
        %v2484 = vsub.f32 %v934, %v1760
        %v2485 = vsub.f32 %v939, %v1761
        %v2486 = vsub.f32 %v944, %v1762
        %v2487 = vsub.f32 %v949, %v1763
        %v2488 = vsub.f32 %v954, %v1764
        %v2489 = vsub.f32 %v959, %v1765
        %v2490 = vsub.f32 %v964, %v1766
        %v2491 = vsub.f32 %v969, %v1767
        %v2492 = vsub.f32 %v974, %v1768
        %v2493 = vsub.f32 %v979, %v1769
        %v2494 = vsub.f32 %v984, %v1770
        %v2495 = vsub.f32 %v989, %v1771
        %v2496 = vsub.f32 %v994, %v1772
        %v2497 = vsub.f32 %v999, %v1773
        %v2498 = vsub.f32 %v1004, %v1774
        %v2499 = vsub.f32 %v1009, %v1775
        %v2500 = vsub.f32 %v1014, %v1776
        %v2501 = vsub.f32 %v1019, %v1777
        %v2502 = vsub.f32 %v1024, %v1778
        %v2503 = vsub.f32 %v1029, %v1779
        %v2504 = vsub.f32 %v1034, %v1780
        %v2505 = vsub.f32 %v1039, %v1781
        %v2506 = vsub.f32 %v1044, %v1782
        %v2507 = vsub.f32 %v1049, %v1783
        %v2508 = vsub.f32 %v1054, %v1784
        %v2509 = vsub.f32 %v1059, %v1785
        %v2510 = vsub.f32 %v1064, %v1786
        %v2511 = vsub.f32 %v1069, %v1787
        %v2512 = vsub.f32 %v1074, %v1788
        %v2513 = vsub.f32 %v1079, %v1789
        %v2514 = vsub.f32 %v1084, %v1790
        %v2515 = vsub.f32 %v1089, %v1791
        %v2516 = vsub.f32 %v1094, %v1792
        %v2517 = vsub.f32 %v1099, %v1793
        %v2518 = vsub.f32 %v1104, %v1794
        %v2519 = vsub.f32 %v1109, %v1795
        %v2520 = vsub.f32 %v1114, %v1796
        %v2521 = vsub.f32 %v1119, %v1797
        %v2522 = vsub.f32 %v1124, %v1798
        %v2523 = vsub.f32 %v1129, %v1799
        %v2524 = vsub.f32 %v1134, %v1800
        %v2525 = vsub.f32 %v1139, %v1801
        %v2526 = vsub.f32 %v1144, %v1802
        %v2527 = vsub.f32 %v1149, %v1803
        %v2528 = vsub.f32 %v1154, %v1804
        %v2529 = vsub.f32 %v1159, %v1805
        %v2530 = vsub.f32 %v1164, %v1806
        %v2531 = vsub.f32 %v2467, %v2128
        %v2532 = vsub.f32 %v2468, %v2130
        %v2533 = vsub.f32 %v2469, %v2132
        %v2534 = vsub.f32 %v2470, %v2134
        %v2535 = vsub.f32 %v2471, %v2136
        %v2536 = vsub.f32 %v2472, %v2138
        %v2537 = vsub.f32 %v2473, %v2140
        %v2538 = vsub.f32 %v2474, %v2142
        %v2539 = vsub.f32 %v2475, %v2144
        %v2540 = vsub.f32 %v2476, %v2146
        %v2541 = vsub.f32 %v2477, %v2148
        %v2542 = vsub.f32 %v2478, %v2150
        %v2543 = vsub.f32 %v2479, %v2152
        %v2544 = vsub.f32 %v2480, %v2154
        %v2545 = vsub.f32 %v2481, %v2156
        %v2546 = vsub.f32 %v2482, %v2158
        %v2547 = vsub.f32 %v2483, %v2160
        %v2548 = vsub.f32 %v2484, %v2162
        %v2549 = vsub.f32 %v2485, %v2164
        %v2550 = vsub.f32 %v2486, %v2166
        %v2551 = vsub.f32 %v2487, %v2168
        %v2552 = vsub.f32 %v2488, %v2170
        %v2553 = vsub.f32 %v2489, %v2172
        %v2554 = vsub.f32 %v2490, %v2174
        %v2555 = vsub.f32 %v2491, %v2176
        %v2556 = vsub.f32 %v2492, %v2178
        %v2557 = vsub.f32 %v2493, %v2180
        %v2558 = vsub.f32 %v2494, %v2182
        %v2559 = vsub.f32 %v2495, %v2184
        %v2560 = vsub.f32 %v2496, %v2186
        %v2561 = vsub.f32 %v2497, %v2188
        %v2562 = vsub.f32 %v2498, %v2190
        %v2563 = vsub.f32 %v2499, %v2192
        %v2564 = vsub.f32 %v2500, %v2194
        %v2565 = vsub.f32 %v2501, %v2196
        %v2566 = vsub.f32 %v2502, %v2198
        %v2567 = vsub.f32 %v2503, %v2200
        %v2568 = vsub.f32 %v2504, %v2202
        %v2569 = vsub.f32 %v2505, %v2204
        %v2570 = vsub.f32 %v2506, %v2206
        %v2571 = vsub.f32 %v2507, %v2208
        %v2572 = vsub.f32 %v2508, %v2210
        %v2573 = vsub.f32 %v2509, %v2212
        %v2574 = vsub.f32 %v2510, %v2214
        %v2575 = vsub.f32 %v2511, %v2216
        %v2576 = vsub.f32 %v2512, %v2218
        %v2577 = vsub.f32 %v2513, %v2220
        %v2578 = vsub.f32 %v2514, %v2222
        %v2579 = vsub.f32 %v2515, %v2224
        %v2580 = vsub.f32 %v2516, %v2226
        %v2581 = vsub.f32 %v2517, %v2228
        %v2582 = vsub.f32 %v2518, %v2230
        %v2583 = vsub.f32 %v2519, %v2232
        %v2584 = vsub.f32 %v2520, %v2234
        %v2585 = vsub.f32 %v2521, %v2236
        %v2586 = vsub.f32 %v2522, %v2238
        %v2587 = vsub.f32 %v2523, %v2240
        %v2588 = vsub.f32 %v2524, %v2242
        %v2589 = vsub.f32 %v2525, %v2244
        %v2590 = vsub.f32 %v2526, %v2246
        %v2591 = vsub.f32 %v2527, %v2248
        %v2592 = vsub.f32 %v2528, %v2250
        %v2593 = vsub.f32 %v2529, %v2252
        %v2594 = vsub.f32 %v2530, %v2254
        %v2595 = vmul.f32 %v2531, 1.442695
        %v2596 = vpow.pop %v2595
        %v2597 = vmul.f32 %v2532, 1.442695
        %v2598 = vpow.pop %v2597
        %v2599 = vmul.f32 %v2533, 1.442695
        %v2600 = vpow.pop %v2599
        %v2601 = vmul.f32 %v2534, 1.442695
        %v2602 = vpow.pop %v2601
        %v2603 = vmul.f32 %v2535, 1.442695
        %v2604 = vpow.pop %v2603
        %v2605 = vmul.f32 %v2536, 1.442695
        %v2606 = vpow.pop %v2605
        %v2607 = vmul.f32 %v2537, 1.442695
        %v2608 = vpow.pop %v2607
        %v2609 = vmul.f32 %v2538, 1.442695
        %v2610 = vpow.pop %v2609
        %v2611 = vmul.f32 %v2539, 1.442695
        %v2612 = vpow.pop %v2611
        %v2613 = vmul.f32 %v2540, 1.442695
        %v2614 = vpow.pop %v2613
        %v2615 = vmul.f32 %v2541, 1.442695
        %v2616 = vpow.pop %v2615
        %v2617 = vmul.f32 %v2542, 1.442695
        %v2618 = vpow.pop %v2617
        %v2619 = vmul.f32 %v2543, 1.442695
        %v2620 = vpow.pop %v2619
        %v2621 = vmul.f32 %v2544, 1.442695
        %v2622 = vpow.pop %v2621
        %v2623 = vmul.f32 %v2545, 1.442695
        %v2624 = vpow.pop %v2623
        %v2625 = vmul.f32 %v2546, 1.442695
        %v2626 = vpow.pop %v2625
        %v2627 = vmul.f32 %v2547, 1.442695
        %v2628 = vpow.pop %v2627
        %v2629 = vmul.f32 %v2548, 1.442695
        %v2630 = vpow.pop %v2629
        %v2631 = vmul.f32 %v2549, 1.442695
        %v2632 = vpow.pop %v2631
        %v2633 = vmul.f32 %v2550, 1.442695
        %v2634 = vpow.pop %v2633
        %v2635 = vmul.f32 %v2551, 1.442695
        %v2636 = vpow.pop %v2635
        %v2637 = vmul.f32 %v2552, 1.442695
        %v2638 = vpow.pop %v2637
        %v2639 = vmul.f32 %v2553, 1.442695
        %v2640 = vpow.pop %v2639
        %v2641 = vmul.f32 %v2554, 1.442695
        %v2642 = vpow.pop %v2641
        %v2643 = vmul.f32 %v2555, 1.442695
        %v2644 = vpow.pop %v2643
        %v2645 = vmul.f32 %v2556, 1.442695
        %v2646 = vpow.pop %v2645
        %v2647 = vmul.f32 %v2557, 1.442695
        %v2648 = vpow.pop %v2647
        %v2649 = vmul.f32 %v2558, 1.442695
        %v2650 = vpow.pop %v2649
        %v2651 = vmul.f32 %v2559, 1.442695
        %v2652 = vpow.pop %v2651
        %v2653 = vmul.f32 %v2560, 1.442695
        %v2654 = vpow.pop %v2653
        %v2655 = vmul.f32 %v2561, 1.442695
        %v2656 = vpow.pop %v2655
        %v2657 = vmul.f32 %v2562, 1.442695
        %v2658 = vpow.pop %v2657
        %v2659 = vmul.f32 %v2563, 1.442695
        %v2660 = vpow.pop %v2659
        %v2661 = vmul.f32 %v2564, 1.442695
        %v2662 = vpow.pop %v2661
        %v2663 = vmul.f32 %v2565, 1.442695
        %v2664 = vpow.pop %v2663
        %v2665 = vmul.f32 %v2566, 1.442695
        %v2666 = vpow.pop %v2665
        %v2667 = vmul.f32 %v2567, 1.442695
        %v2668 = vpow.pop %v2667
        %v2669 = vmul.f32 %v2568, 1.442695
        %v2670 = vpow.pop %v2669
        %v2671 = vmul.f32 %v2569, 1.442695
        %v2672 = vpow.pop %v2671
        %v2673 = vmul.f32 %v2570, 1.442695
        %v2674 = vpow.pop %v2673
        %v2675 = vmul.f32 %v2571, 1.442695
        %v2676 = vpow.pop %v2675
        %v2677 = vmul.f32 %v2572, 1.442695
        %v2678 = vpow.pop %v2677
        %v2679 = vmul.f32 %v2573, 1.442695
        %v2680 = vpow.pop %v2679
        %v2681 = vmul.f32 %v2574, 1.442695
        %v2682 = vpow.pop %v2681
        %v2683 = vmul.f32 %v2575, 1.442695
        %v2684 = vpow.pop %v2683
        %v2685 = vmul.f32 %v2576, 1.442695
        %v2686 = vpow.pop %v2685
        %v2687 = vmul.f32 %v2577, 1.442695
        %v2688 = vpow.pop %v2687
        %v2689 = vmul.f32 %v2578, 1.442695
        %v2690 = vpow.pop %v2689
        %v2691 = vmul.f32 %v2579, 1.442695
        %v2692 = vpow.pop %v2691
        %v2693 = vmul.f32 %v2580, 1.442695
        %v2694 = vpow.pop %v2693
        %v2695 = vmul.f32 %v2581, 1.442695
        %v2696 = vpow.pop %v2695
        %v2697 = vmul.f32 %v2582, 1.442695
        %v2698 = vpow.pop %v2697
        %v2699 = vmul.f32 %v2583, 1.442695
        %v2700 = vpow.pop %v2699
        %v2701 = vmul.f32 %v2584, 1.442695
        %v2702 = vpow.pop %v2701
        %v2703 = vmul.f32 %v2585, 1.442695
        %v2704 = vpow.pop %v2703
        %v2705 = vmul.f32 %v2586, 1.442695
        %v2706 = vpow.pop %v2705
        %v2707 = vmul.f32 %v2587, 1.442695
        %v2708 = vpow.pop %v2707
        %v2709 = vmul.f32 %v2588, 1.442695
        %v2710 = vpow.pop %v2709
        %v2711 = vmul.f32 %v2589, 1.442695
        %v2712 = vpow.pop %v2711
        %v2713 = vmul.f32 %v2590, 1.442695
        %v2714 = vpow.pop %v2713
        %v2715 = vmul.f32 %v2591, 1.442695
        %v2716 = vpow.pop %v2715
        %v2717 = vmul.f32 %v2592, 1.442695
        %v2718 = vpow.pop %v2717
        %v2719 = vmul.f32 %v2593, 1.442695
        %v2720 = vpow.pop %v2719
        %v2721 = vmul.f32 %v2594, 1.442695
        %v2722 = vpow.pop %v2721
        %v2723 = vadd.f32 %v2596, 0.0001
        %v2724 = vadd.f32 %v2598, 0.0001
        %v2725 = vadd.f32 %v2600, 0.0001
        %v2726 = vadd.f32 %v2602, 0.0001
        %v2727 = vadd.f32 %v2604, 0.0001
        %v2728 = vadd.f32 %v2606, 0.0001
        %v2729 = vadd.f32 %v2608, 0.0001
        %v2730 = vadd.f32 %v2610, 0.0001
        %v2731 = vadd.f32 %v2612, 0.0001
        %v2732 = vadd.f32 %v2614, 0.0001
        %v2733 = vadd.f32 %v2616, 0.0001
        %v2734 = vadd.f32 %v2618, 0.0001
        %v2735 = vadd.f32 %v2620, 0.0001
        %v2736 = vadd.f32 %v2622, 0.0001
        %v2737 = vadd.f32 %v2624, 0.0001
        %v2738 = vadd.f32 %v2626, 0.0001
        %v2739 = vadd.f32 %v2628, 0.0001
        %v2740 = vadd.f32 %v2630, 0.0001
        %v2741 = vadd.f32 %v2632, 0.0001
        %v2742 = vadd.f32 %v2634, 0.0001
        %v2743 = vadd.f32 %v2636, 0.0001
        %v2744 = vadd.f32 %v2638, 0.0001
        %v2745 = vadd.f32 %v2640, 0.0001
        %v2746 = vadd.f32 %v2642, 0.0001
        %v2747 = vadd.f32 %v2644, 0.0001
        %v2748 = vadd.f32 %v2646, 0.0001
        %v2749 = vadd.f32 %v2648, 0.0001
        %v2750 = vadd.f32 %v2650, 0.0001
        %v2751 = vadd.f32 %v2652, 0.0001
        %v2752 = vadd.f32 %v2654, 0.0001
        %v2753 = vadd.f32 %v2656, 0.0001
        %v2754 = vadd.f32 %v2658, 0.0001
        %v2755 = vadd.f32 %v2660, 0.0001
        %v2756 = vadd.f32 %v2662, 0.0001
        %v2757 = vadd.f32 %v2664, 0.0001
        %v2758 = vadd.f32 %v2666, 0.0001
        %v2759 = vadd.f32 %v2668, 0.0001
        %v2760 = vadd.f32 %v2670, 0.0001
        %v2761 = vadd.f32 %v2672, 0.0001
        %v2762 = vadd.f32 %v2674, 0.0001
        %v2763 = vadd.f32 %v2676, 0.0001
        %v2764 = vadd.f32 %v2678, 0.0001
        %v2765 = vadd.f32 %v2680, 0.0001
        %v2766 = vadd.f32 %v2682, 0.0001
        %v2767 = vadd.f32 %v2684, 0.0001
        %v2768 = vadd.f32 %v2686, 0.0001
        %v2769 = vadd.f32 %v2688, 0.0001
        %v2770 = vadd.f32 %v2690, 0.0001
        %v2771 = vadd.f32 %v2692, 0.0001
        %v2772 = vadd.f32 %v2694, 0.0001
        %v2773 = vadd.f32 %v2696, 0.0001
        %v2774 = vadd.f32 %v2698, 0.0001
        %v2775 = vadd.f32 %v2700, 0.0001
        %v2776 = vadd.f32 %v2702, 0.0001
        %v2777 = vadd.f32 %v2704, 0.0001
        %v2778 = vadd.f32 %v2706, 0.0001
        %v2779 = vadd.f32 %v2708, 0.0001
        %v2780 = vadd.f32 %v2710, 0.0001
        %v2781 = vadd.f32 %v2712, 0.0001
        %v2782 = vadd.f32 %v2714, 0.0001
        %v2783 = vadd.f32 %v2716, 0.0001
        %v2784 = vadd.f32 %v2718, 0.0001
        %v2785 = vadd.f32 %v2720, 0.0001
        %v2786 = vadd.f32 %v2722, 0.0001
        %v2787 = vmul.f32 %v2723, 0.088388346
        %v2788 = vmul.f32 %v2724, 0.088388346
        %v2789 = vmul.f32 %v2725, 0.088388346
        %v2790 = vmul.f32 %v2726, 0.088388346
        %v2791 = vmul.f32 %v2727, 0.088388346
        %v2792 = vmul.f32 %v2728, 0.088388346
        %v2793 = vmul.f32 %v2729, 0.088388346
        %v2794 = vmul.f32 %v2730, 0.088388346
        %v2795 = vmul.f32 %v2731, 0.088388346
        %v2796 = vmul.f32 %v2732, 0.088388346
        %v2797 = vmul.f32 %v2733, 0.088388346
        %v2798 = vmul.f32 %v2734, 0.088388346
        %v2799 = vmul.f32 %v2735, 0.088388346
        %v2800 = vmul.f32 %v2736, 0.088388346
        %v2801 = vmul.f32 %v2737, 0.088388346
        %v2802 = vmul.f32 %v2738, 0.088388346
        %v2803 = vmul.f32 %v2739, 0.088388346
        %v2804 = vmul.f32 %v2740, 0.088388346
        %v2805 = vmul.f32 %v2741, 0.088388346
        %v2806 = vmul.f32 %v2742, 0.088388346
        %v2807 = vmul.f32 %v2743, 0.088388346
        %v2808 = vmul.f32 %v2744, 0.088388346
        %v2809 = vmul.f32 %v2745, 0.088388346
        %v2810 = vmul.f32 %v2746, 0.088388346
        %v2811 = vmul.f32 %v2747, 0.088388346
        %v2812 = vmul.f32 %v2748, 0.088388346
        %v2813 = vmul.f32 %v2749, 0.088388346
        %v2814 = vmul.f32 %v2750, 0.088388346
        %v2815 = vmul.f32 %v2751, 0.088388346
        %v2816 = vmul.f32 %v2752, 0.088388346
        %v2817 = vmul.f32 %v2753, 0.088388346
        %v2818 = vmul.f32 %v2754, 0.088388346
        %v2819 = vmul.f32 %v2755, 0.088388346
        %v2820 = vmul.f32 %v2756, 0.088388346
        %v2821 = vmul.f32 %v2757, 0.088388346
        %v2822 = vmul.f32 %v2758, 0.088388346
        %v2823 = vmul.f32 %v2759, 0.088388346
        %v2824 = vmul.f32 %v2760, 0.088388346
        %v2825 = vmul.f32 %v2761, 0.088388346
        %v2826 = vmul.f32 %v2762, 0.088388346
        %v2827 = vmul.f32 %v2763, 0.088388346
        %v2828 = vmul.f32 %v2764, 0.088388346
        %v2829 = vmul.f32 %v2765, 0.088388346
        %v2830 = vmul.f32 %v2766, 0.088388346
        %v2831 = vmul.f32 %v2767, 0.088388346
        %v2832 = vmul.f32 %v2768, 0.088388346
        %v2833 = vmul.f32 %v2769, 0.088388346
        %v2834 = vmul.f32 %v2770, 0.088388346
        %v2835 = vmul.f32 %v2771, 0.088388346
        %v2836 = vmul.f32 %v2772, 0.088388346
        %v2837 = vmul.f32 %v2773, 0.088388346
        %v2838 = vmul.f32 %v2774, 0.088388346
        %v2839 = vmul.f32 %v2775, 0.088388346
        %v2840 = vmul.f32 %v2776, 0.088388346
        %v2841 = vmul.f32 %v2777, 0.088388346
        %v2842 = vmul.f32 %v2778, 0.088388346
        %v2843 = vmul.f32 %v2779, 0.088388346
        %v2844 = vmul.f32 %v2780, 0.088388346
        %v2845 = vmul.f32 %v2781, 0.088388346
        %v2846 = vmul.f32 %v2782, 0.088388346
        %v2847 = vmul.f32 %v2783, 0.088388346
        %v2848 = vmul.f32 %v2784, 0.088388346
        %v2849 = vmul.f32 %v2785, 0.088388346
        %v2850 = vmul.f32 %v2786, 0.088388346
        %v2851 = vsub.f32 %v1169, %v2063
        %v2852 = vsub.f32 %v1174, %v2064
        %v2853 = vsub.f32 %v1179, %v2065
        %v2854 = vsub.f32 %v1184, %v2066
        %v2855 = vsub.f32 %v1189, %v2067
        %v2856 = vsub.f32 %v1194, %v2068
        %v2857 = vsub.f32 %v1199, %v2069
        %v2858 = vsub.f32 %v1204, %v2070
        %v2859 = vsub.f32 %v1209, %v2071
        %v2860 = vsub.f32 %v1214, %v2072
        %v2861 = vsub.f32 %v1219, %v2073
        %v2862 = vsub.f32 %v1224, %v2074
        %v2863 = vsub.f32 %v1229, %v2075
        %v2864 = vsub.f32 %v1234, %v2076
        %v2865 = vsub.f32 %v1239, %v2077
        %v2866 = vsub.f32 %v1244, %v2078
        %v2867 = vsub.f32 %v1249, %v2079
        %v2868 = vsub.f32 %v1254, %v2080
        %v2869 = vsub.f32 %v1259, %v2081
        %v2870 = vsub.f32 %v1264, %v2082
        %v2871 = vsub.f32 %v1269, %v2083
        %v2872 = vsub.f32 %v1274, %v2084
        %v2873 = vsub.f32 %v1279, %v2085
        %v2874 = vsub.f32 %v1284, %v2086
        %v2875 = vsub.f32 %v1289, %v2087
        %v2876 = vsub.f32 %v1294, %v2088
        %v2877 = vsub.f32 %v1299, %v2089
        %v2878 = vsub.f32 %v1304, %v2090
        %v2879 = vsub.f32 %v1309, %v2091
        %v2880 = vsub.f32 %v1314, %v2092
        %v2881 = vsub.f32 %v1319, %v2093
        %v2882 = vsub.f32 %v1324, %v2094
        %v2883 = vsub.f32 %v1329, %v2095
        %v2884 = vsub.f32 %v1334, %v2096
        %v2885 = vsub.f32 %v1339, %v2097
        %v2886 = vsub.f32 %v1344, %v2098
        %v2887 = vsub.f32 %v1349, %v2099
        %v2888 = vsub.f32 %v1354, %v2100
        %v2889 = vsub.f32 %v1359, %v2101
        %v2890 = vsub.f32 %v1364, %v2102
        %v2891 = vsub.f32 %v1369, %v2103
        %v2892 = vsub.f32 %v1374, %v2104
        %v2893 = vsub.f32 %v1379, %v2105
        %v2894 = vsub.f32 %v1384, %v2106
        %v2895 = vsub.f32 %v1389, %v2107
        %v2896 = vsub.f32 %v1394, %v2108
        %v2897 = vsub.f32 %v1399, %v2109
        %v2898 = vsub.f32 %v1404, %v2110
        %v2899 = vsub.f32 %v1409, %v2111
        %v2900 = vsub.f32 %v1414, %v2112
        %v2901 = vsub.f32 %v1419, %v2113
        %v2902 = vsub.f32 %v1424, %v2114
        %v2903 = vsub.f32 %v1429, %v2115
        %v2904 = vsub.f32 %v1434, %v2116
        %v2905 = vsub.f32 %v1439, %v2117
        %v2906 = vsub.f32 %v1444, %v2118
        %v2907 = vsub.f32 %v1449, %v2119
        %v2908 = vsub.f32 %v1454, %v2120
        %v2909 = vsub.f32 %v1459, %v2121
        %v2910 = vsub.f32 %v1464, %v2122
        %v2911 = vsub.f32 %v1469, %v2123
        %v2912 = vsub.f32 %v1474, %v2124
        %v2913 = vsub.f32 %v1479, %v2125
        %v2914 = vsub.f32 %v1484, %v2126
        %v2915 = vsub.f32 %v2851, %v2403
        %v2916 = vsub.f32 %v2852, %v2403
        %v2917 = vsub.f32 %v2853, %v2403
        %v2918 = vsub.f32 %v2854, %v2403
        %v2919 = vsub.f32 %v2855, %v2403
        %v2920 = vsub.f32 %v2856, %v2403
        %v2921 = vsub.f32 %v2857, %v2403
        %v2922 = vsub.f32 %v2858, %v2403
        %v2923 = vsub.f32 %v2859, %v2403
        %v2924 = vsub.f32 %v2860, %v2403
        %v2925 = vsub.f32 %v2861, %v2403
        %v2926 = vsub.f32 %v2862, %v2403
        %v2927 = vsub.f32 %v2863, %v2403
        %v2928 = vsub.f32 %v2864, %v2403
        %v2929 = vsub.f32 %v2865, %v2403
        %v2930 = vsub.f32 %v2866, %v2403
        %v2931 = vsub.f32 %v2867, %v2424
        %v2932 = vsub.f32 %v2868, %v2424
        %v2933 = vsub.f32 %v2869, %v2424
        %v2934 = vsub.f32 %v2870, %v2424
        %v2935 = vsub.f32 %v2871, %v2424
        %v2936 = vsub.f32 %v2872, %v2424
        %v2937 = vsub.f32 %v2873, %v2424
        %v2938 = vsub.f32 %v2874, %v2424
        %v2939 = vsub.f32 %v2875, %v2424
        %v2940 = vsub.f32 %v2876, %v2424
        %v2941 = vsub.f32 %v2877, %v2424
        %v2942 = vsub.f32 %v2878, %v2424
        %v2943 = vsub.f32 %v2879, %v2424
        %v2944 = vsub.f32 %v2880, %v2424
        %v2945 = vsub.f32 %v2881, %v2424
        %v2946 = vsub.f32 %v2882, %v2424
        %v2947 = vsub.f32 %v2883, %v2445
        %v2948 = vsub.f32 %v2884, %v2445
        %v2949 = vsub.f32 %v2885, %v2445
        %v2950 = vsub.f32 %v2886, %v2445
        %v2951 = vsub.f32 %v2887, %v2445
        %v2952 = vsub.f32 %v2888, %v2445
        %v2953 = vsub.f32 %v2889, %v2445
        %v2954 = vsub.f32 %v2890, %v2445
        %v2955 = vsub.f32 %v2891, %v2445
        %v2956 = vsub.f32 %v2892, %v2445
        %v2957 = vsub.f32 %v2893, %v2445
        %v2958 = vsub.f32 %v2894, %v2445
        %v2959 = vsub.f32 %v2895, %v2445
        %v2960 = vsub.f32 %v2896, %v2445
        %v2961 = vsub.f32 %v2897, %v2445
        %v2962 = vsub.f32 %v2898, %v2445
        %v2963 = vsub.f32 %v2899, %v2466
        %v2964 = vsub.f32 %v2900, %v2466
        %v2965 = vsub.f32 %v2901, %v2466
        %v2966 = vsub.f32 %v2902, %v2466
        %v2967 = vsub.f32 %v2903, %v2466
        %v2968 = vsub.f32 %v2904, %v2466
        %v2969 = vsub.f32 %v2905, %v2466
        %v2970 = vsub.f32 %v2906, %v2466
        %v2971 = vsub.f32 %v2907, %v2466
        %v2972 = vsub.f32 %v2908, %v2466
        %v2973 = vsub.f32 %v2909, %v2466
        %v2974 = vsub.f32 %v2910, %v2466
        %v2975 = vsub.f32 %v2911, %v2466
        %v2976 = vsub.f32 %v2912, %v2466
        %v2977 = vsub.f32 %v2913, %v2466
        %v2978 = vsub.f32 %v2914, %v2466
        %v2979 = vmul.f32 %v2915, 1.442695
        %v2980 = vpow.pop %v2979
        %v2981 = vmul.f32 %v2916, 1.442695
        %v2982 = vpow.pop %v2981
        %v2983 = vmul.f32 %v2917, 1.442695
        %v2984 = vpow.pop %v2983
        %v2985 = vmul.f32 %v2918, 1.442695
        %v2986 = vpow.pop %v2985
        %v2987 = vmul.f32 %v2919, 1.442695
        %v2988 = vpow.pop %v2987
        %v2989 = vmul.f32 %v2920, 1.442695
        %v2990 = vpow.pop %v2989
        %v2991 = vmul.f32 %v2921, 1.442695
        %v2992 = vpow.pop %v2991
        %v2993 = vmul.f32 %v2922, 1.442695
        %v2994 = vpow.pop %v2993
        %v2995 = vmul.f32 %v2923, 1.442695
        %v2996 = vpow.pop %v2995
        %v2997 = vmul.f32 %v2924, 1.442695
        %v2998 = vpow.pop %v2997
        %v2999 = vmul.f32 %v2925, 1.442695
        %v3000 = vpow.pop %v2999
        %v3001 = vmul.f32 %v2926, 1.442695
        %v3002 = vpow.pop %v3001
        %v3003 = vmul.f32 %v2927, 1.442695
        %v3004 = vpow.pop %v3003
        %v3005 = vmul.f32 %v2928, 1.442695
        %v3006 = vpow.pop %v3005
        %v3007 = vmul.f32 %v2929, 1.442695
        %v3008 = vpow.pop %v3007
        %v3009 = vmul.f32 %v2930, 1.442695
        %v3010 = vpow.pop %v3009
        %v3011 = vmul.f32 %v2931, 1.442695
        %v3012 = vpow.pop %v3011
        %v3013 = vmul.f32 %v2932, 1.442695
        %v3014 = vpow.pop %v3013
        %v3015 = vmul.f32 %v2933, 1.442695
        %v3016 = vpow.pop %v3015
        %v3017 = vmul.f32 %v2934, 1.442695
        %v3018 = vpow.pop %v3017
        %v3019 = vmul.f32 %v2935, 1.442695
        %v3020 = vpow.pop %v3019
        %v3021 = vmul.f32 %v2936, 1.442695
        %v3022 = vpow.pop %v3021
        %v3023 = vmul.f32 %v2937, 1.442695
        %v3024 = vpow.pop %v3023
        %v3025 = vmul.f32 %v2938, 1.442695
        %v3026 = vpow.pop %v3025
        %v3027 = vmul.f32 %v2939, 1.442695
        %v3028 = vpow.pop %v3027
        %v3029 = vmul.f32 %v2940, 1.442695
        %v3030 = vpow.pop %v3029
        %v3031 = vmul.f32 %v2941, 1.442695
        %v3032 = vpow.pop %v3031
        %v3033 = vmul.f32 %v2942, 1.442695
        %v3034 = vpow.pop %v3033
        %v3035 = vmul.f32 %v2943, 1.442695
        %v3036 = vpow.pop %v3035
        %v3037 = vmul.f32 %v2944, 1.442695
        %v3038 = vpow.pop %v3037
        %v3039 = vmul.f32 %v2945, 1.442695
        %v3040 = vpow.pop %v3039
        %v3041 = vmul.f32 %v2946, 1.442695
        %v3042 = vpow.pop %v3041
        %v3043 = vmul.f32 %v2947, 1.442695
        %v3044 = vpow.pop %v3043
        %v3045 = vmul.f32 %v2948, 1.442695
        %v3046 = vpow.pop %v3045
        %v3047 = vmul.f32 %v2949, 1.442695
        %v3048 = vpow.pop %v3047
        %v3049 = vmul.f32 %v2950, 1.442695
        %v3050 = vpow.pop %v3049
        %v3051 = vmul.f32 %v2951, 1.442695
        %v3052 = vpow.pop %v3051
        %v3053 = vmul.f32 %v2952, 1.442695
        %v3054 = vpow.pop %v3053
        %v3055 = vmul.f32 %v2953, 1.442695
        %v3056 = vpow.pop %v3055
        %v3057 = vmul.f32 %v2954, 1.442695
        %v3058 = vpow.pop %v3057
        %v3059 = vmul.f32 %v2955, 1.442695
        %v3060 = vpow.pop %v3059
        %v3061 = vmul.f32 %v2956, 1.442695
        %v3062 = vpow.pop %v3061
        %v3063 = vmul.f32 %v2957, 1.442695
        %v3064 = vpow.pop %v3063
        %v3065 = vmul.f32 %v2958, 1.442695
        %v3066 = vpow.pop %v3065
        %v3067 = vmul.f32 %v2959, 1.442695
        %v3068 = vpow.pop %v3067
        %v3069 = vmul.f32 %v2960, 1.442695
        %v3070 = vpow.pop %v3069
        %v3071 = vmul.f32 %v2961, 1.442695
        %v3072 = vpow.pop %v3071
        %v3073 = vmul.f32 %v2962, 1.442695
        %v3074 = vpow.pop %v3073
        %v3075 = vmul.f32 %v2963, 1.442695
        %v3076 = vpow.pop %v3075
        %v3077 = vmul.f32 %v2964, 1.442695
        %v3078 = vpow.pop %v3077
        %v3079 = vmul.f32 %v2965, 1.442695
        %v3080 = vpow.pop %v3079
        %v3081 = vmul.f32 %v2966, 1.442695
        %v3082 = vpow.pop %v3081
        %v3083 = vmul.f32 %v2967, 1.442695
        %v3084 = vpow.pop %v3083
        %v3085 = vmul.f32 %v2968, 1.442695
        %v3086 = vpow.pop %v3085
        %v3087 = vmul.f32 %v2969, 1.442695
        %v3088 = vpow.pop %v3087
        %v3089 = vmul.f32 %v2970, 1.442695
        %v3090 = vpow.pop %v3089
        %v3091 = vmul.f32 %v2971, 1.442695
        %v3092 = vpow.pop %v3091
        %v3093 = vmul.f32 %v2972, 1.442695
        %v3094 = vpow.pop %v3093
        %v3095 = vmul.f32 %v2973, 1.442695
        %v3096 = vpow.pop %v3095
        %v3097 = vmul.f32 %v2974, 1.442695
        %v3098 = vpow.pop %v3097
        %v3099 = vmul.f32 %v2975, 1.442695
        %v3100 = vpow.pop %v3099
        %v3101 = vmul.f32 %v2976, 1.442695
        %v3102 = vpow.pop %v3101
        %v3103 = vmul.f32 %v2977, 1.442695
        %v3104 = vpow.pop %v3103
        %v3105 = vmul.f32 %v2978, 1.442695
        %v3106 = vpow.pop %v3105
        %v3107 = vadd.f32 %v2980, 0.0001
        %v3108 = vadd.f32 %v2982, 0.0001
        %v3109 = vadd.f32 %v2984, 0.0001
        %v3110 = vadd.f32 %v2986, 0.0001
        %v3111 = vadd.f32 %v2988, 0.0001
        %v3112 = vadd.f32 %v2990, 0.0001
        %v3113 = vadd.f32 %v2992, 0.0001
        %v3114 = vadd.f32 %v2994, 0.0001
        %v3115 = vadd.f32 %v2996, 0.0001
        %v3116 = vadd.f32 %v2998, 0.0001
        %v3117 = vadd.f32 %v3000, 0.0001
        %v3118 = vadd.f32 %v3002, 0.0001
        %v3119 = vadd.f32 %v3004, 0.0001
        %v3120 = vadd.f32 %v3006, 0.0001
        %v3121 = vadd.f32 %v3008, 0.0001
        %v3122 = vadd.f32 %v3010, 0.0001
        %v3123 = vadd.f32 %v3012, 0.0001
        %v3124 = vadd.f32 %v3014, 0.0001
        %v3125 = vadd.f32 %v3016, 0.0001
        %v3126 = vadd.f32 %v3018, 0.0001
        %v3127 = vadd.f32 %v3020, 0.0001
        %v3128 = vadd.f32 %v3022, 0.0001
        %v3129 = vadd.f32 %v3024, 0.0001
        %v3130 = vadd.f32 %v3026, 0.0001
        %v3131 = vadd.f32 %v3028, 0.0001
        %v3132 = vadd.f32 %v3030, 0.0001
        %v3133 = vadd.f32 %v3032, 0.0001
        %v3134 = vadd.f32 %v3034, 0.0001
        %v3135 = vadd.f32 %v3036, 0.0001
        %v3136 = vadd.f32 %v3038, 0.0001
        %v3137 = vadd.f32 %v3040, 0.0001
        %v3138 = vadd.f32 %v3042, 0.0001
        %v3139 = vadd.f32 %v3044, 0.0001
        %v3140 = vadd.f32 %v3046, 0.0001
        %v3141 = vadd.f32 %v3048, 0.0001
        %v3142 = vadd.f32 %v3050, 0.0001
        %v3143 = vadd.f32 %v3052, 0.0001
        %v3144 = vadd.f32 %v3054, 0.0001
        %v3145 = vadd.f32 %v3056, 0.0001
        %v3146 = vadd.f32 %v3058, 0.0001
        %v3147 = vadd.f32 %v3060, 0.0001
        %v3148 = vadd.f32 %v3062, 0.0001
        %v3149 = vadd.f32 %v3064, 0.0001
        %v3150 = vadd.f32 %v3066, 0.0001
        %v3151 = vadd.f32 %v3068, 0.0001
        %v3152 = vadd.f32 %v3070, 0.0001
        %v3153 = vadd.f32 %v3072, 0.0001
        %v3154 = vadd.f32 %v3074, 0.0001
        %v3155 = vadd.f32 %v3076, 0.0001
        %v3156 = vadd.f32 %v3078, 0.0001
        %v3157 = vadd.f32 %v3080, 0.0001
        %v3158 = vadd.f32 %v3082, 0.0001
        %v3159 = vadd.f32 %v3084, 0.0001
        %v3160 = vadd.f32 %v3086, 0.0001
        %v3161 = vadd.f32 %v3088, 0.0001
        %v3162 = vadd.f32 %v3090, 0.0001
        %v3163 = vadd.f32 %v3092, 0.0001
        %v3164 = vadd.f32 %v3094, 0.0001
        %v3165 = vadd.f32 %v3096, 0.0001
        %v3166 = vadd.f32 %v3098, 0.0001
        %v3167 = vadd.f32 %v3100, 0.0001
        %v3168 = vadd.f32 %v3102, 0.0001
        %v3169 = vadd.f32 %v3104, 0.0001
        %v3170 = vadd.f32 %v3106, 0.0001
        %v3171 = vmul.f32 %v3107, 0.088388346
        %v3172 = vmul.f32 %v3108, 0.088388346
        %v3173 = vmul.f32 %v3109, 0.088388346
        %v3174 = vmul.f32 %v3110, 0.088388346
        %v3175 = vmul.f32 %v3111, 0.088388346
        %v3176 = vmul.f32 %v3112, 0.088388346
        %v3177 = vmul.f32 %v3113, 0.088388346
        %v3178 = vmul.f32 %v3114, 0.088388346
        %v3179 = vmul.f32 %v3115, 0.088388346
        %v3180 = vmul.f32 %v3116, 0.088388346
        %v3181 = vmul.f32 %v3117, 0.088388346
        %v3182 = vmul.f32 %v3118, 0.088388346
        %v3183 = vmul.f32 %v3119, 0.088388346
        %v3184 = vmul.f32 %v3120, 0.088388346
        %v3185 = vmul.f32 %v3121, 0.088388346
        %v3186 = vmul.f32 %v3122, 0.088388346
        %v3187 = vmul.f32 %v3123, 0.088388346
        %v3188 = vmul.f32 %v3124, 0.088388346
        %v3189 = vmul.f32 %v3125, 0.088388346
        %v3190 = vmul.f32 %v3126, 0.088388346
        %v3191 = vmul.f32 %v3127, 0.088388346
        %v3192 = vmul.f32 %v3128, 0.088388346
        %v3193 = vmul.f32 %v3129, 0.088388346
        %v3194 = vmul.f32 %v3130, 0.088388346
        %v3195 = vmul.f32 %v3131, 0.088388346
        %v3196 = vmul.f32 %v3132, 0.088388346
        %v3197 = vmul.f32 %v3133, 0.088388346
        %v3198 = vmul.f32 %v3134, 0.088388346
        %v3199 = vmul.f32 %v3135, 0.088388346
        %v3200 = vmul.f32 %v3136, 0.088388346
        %v3201 = vmul.f32 %v3137, 0.088388346
        %v3202 = vmul.f32 %v3138, 0.088388346
        %v3203 = vmul.f32 %v3139, 0.088388346
        %v3204 = vmul.f32 %v3140, 0.088388346
        %v3205 = vmul.f32 %v3141, 0.088388346
        %v3206 = vmul.f32 %v3142, 0.088388346
        %v3207 = vmul.f32 %v3143, 0.088388346
        %v3208 = vmul.f32 %v3144, 0.088388346
        %v3209 = vmul.f32 %v3145, 0.088388346
        %v3210 = vmul.f32 %v3146, 0.088388346
        %v3211 = vmul.f32 %v3147, 0.088388346
        %v3212 = vmul.f32 %v3148, 0.088388346
        %v3213 = vmul.f32 %v3149, 0.088388346
        %v3214 = vmul.f32 %v3150, 0.088388346
        %v3215 = vmul.f32 %v3151, 0.088388346
        %v3216 = vmul.f32 %v3152, 0.088388346
        %v3217 = vmul.f32 %v3153, 0.088388346
        %v3218 = vmul.f32 %v3154, 0.088388346
        %v3219 = vmul.f32 %v3155, 0.088388346
        %v3220 = vmul.f32 %v3156, 0.088388346
        %v3221 = vmul.f32 %v3157, 0.088388346
        %v3222 = vmul.f32 %v3158, 0.088388346
        %v3223 = vmul.f32 %v3159, 0.088388346
        %v3224 = vmul.f32 %v3160, 0.088388346
        %v3225 = vmul.f32 %v3161, 0.088388346
        %v3226 = vmul.f32 %v3162, 0.088388346
        %v3227 = vmul.f32 %v3163, 0.088388346
        %v3228 = vmul.f32 %v3164, 0.088388346
        %v3229 = vmul.f32 %v3165, 0.088388346
        %v3230 = vmul.f32 %v3166, 0.088388346
        %v3231 = vmul.f32 %v3167, 0.088388346
        %v3232 = vmul.f32 %v3168, 0.088388346
        %v3233 = vmul.f32 %v3169, 0.088388346
        %v3234 = vmul.f32 %v3170, 0.088388346
        %3235 = vxpose.xlu0.b32.start [1/16] %v253, 128
        %3236 = vxpose.xlu0.b32.cont [2/16] %v254, 128
        %3237 = vxpose.xlu0.b32.cont [3/16] %v255, 128
        %3238 = vxpose.xlu0.b32.cont [4/16] %v256, 128
        %3239 = vxpose.xlu0.b32.cont [5/16] %v257, 128
        %3240 = vxpose.xlu0.b32.cont [6/16] %v258, 128
        %3241 = vxpose.xlu0.b32.cont [7/16] %v259, 128
        %3242 = vxpose.xlu0.b32.cont [8/16] %v260, 128
        %3243 = vxpose.xlu0.b32.cont [9/16] %v261, 128
        %3244 = vxpose.xlu0.b32.cont [10/16] %v262, 128
        %3245 = vxpose.xlu0.b32.cont [11/16] %v263, 128
        %3246 = vxpose.xlu0.b32.cont [12/16] %v264, 128
        %3247 = vxpose.xlu0.b32.cont [13/16] %v265, 128
        %3248 = vxpose.xlu0.b32.cont [14/16] %v266, 128
        %3249 = vxpose.xlu0.b32.cont [15/16] %v267, 128
        %3250 = vxpose.xlu0.b32.end [16/16] %v268, 128
        %v3251 = vpop.trf.xlu0
        %v3252 = vpop.trf.xlu0
        %v3253 = vpop.trf.xlu0
        %v3254 = vpop.trf.xlu0
        %v3255 = vpop.trf.xlu0
        %v3256 = vpop.trf.xlu0
        %v3257 = vpop.trf.xlu0
        %v3258 = vpop.trf.xlu0
        %v3259 = vpop.trf.xlu0
        %v3260 = vpop.trf.xlu0
        %v3261 = vpop.trf.xlu0
        %v3262 = vpop.trf.xlu0
        %v3263 = vpop.trf.xlu0
        %v3264 = vpop.trf.xlu0
        %v3265 = vpop.trf.xlu0
        %v3266 = vpop.trf.xlu0
        %3267 = vmatprep.subr.mxu0 0.0
        %3268 = vmatpush1.msra.mxu0 %v3186
        %3269 = vmatprep.subr.mxu0 0.0
        %3270 = vmatpush1.msra.mxu0 %v3185
        %3271 = vmatprep.subr.mxu0 0.0
        %3272 = vmatpush1.msra.mxu0 %v3184
        %3273 = vmatprep.subr.mxu0 0.0
        %3274 = vmatpush1.msra.mxu0 %v3183
        %3275 = vmatprep.subr.mxu0 0.0
        %3276 = vmatpush1.msra.mxu0 %v3182
        %3277 = vmatprep.subr.mxu0 0.0
        %3278 = vmatpush1.msra.mxu0 %v3181
        %3279 = vmatprep.subr.mxu0 0.0
        %3280 = vmatpush1.msra.mxu0 %v3180
        %3281 = vmatprep.subr.mxu0 0.0
        %3282 = vmatpush1.msra.mxu0 %v3179
        %3283 = vmatprep.subr.mxu0 0.0
        %3284 = vmatpush1.msra.mxu0 %v3178
        %3285 = vmatprep.subr.mxu0 0.0
        %3286 = vmatpush1.msra.mxu0 %v3177
        %3287 = vmatprep.subr.mxu0 0.0
        %3288 = vmatpush1.msra.mxu0 %v3176
        %3289 = vmatprep.subr.mxu0 0.0
        %3290 = vmatpush1.msra.mxu0 %v3175
        %3291 = vmatprep.subr.mxu0 0.0
        %3292 = vmatpush1.msra.mxu0 %v3174
        %3293 = vmatprep.subr.mxu0 0.0
        %3294 = vmatpush1.msra.mxu0 %v3173
        %3295 = vmatprep.subr.mxu0 0.0
        %3296 = vmatpush1.msra.mxu0 %v3172
        %3297 = vmatprep.subr.mxu0 0.0
        %3298 = vmatpush1.msra.mxu0 %v3171
        %3299 = vmatprep.subr.mxu0 0.0
        %3300 = vmatpush2.msra.mxu0 0.0
        %3301 = vmatprep.subr.mxu0 0.0
        %3302 = vmatpush2.msra.mxu0 0.0
        %3303 = vmatprep.subr.mxu0 0.0
        %3304 = vmatpush2.msra.mxu0 0.0
        %3305 = vmatprep.subr.mxu0 0.0
        %3306 = vmatpush2.msra.mxu0 0.0
        %3307 = vmatprep.subr.mxu0 0.0
        %3308 = vmatpush2.msra.mxu0 0.0
        %3309 = vmatprep.subr.mxu0 0.0
        %3310 = vmatpush2.msra.mxu0 0.0
        %3311 = vmatprep.subr.mxu0 0.0
        %3312 = vmatpush2.msra.mxu0 0.0
        %3313 = vmatprep.subr.mxu0 0.0
        %3314 = vmatpush2.msra.mxu0 0.0
        %3315 = vmatprep.subr.mxu0 0.0
        %3316 = vmatpush2.msra.mxu0 0.0
        %3317 = vmatprep.subr.mxu0 0.0
        %3318 = vmatpush2.msra.mxu0 0.0
        %3319 = vmatprep.subr.mxu0 0.0
        %3320 = vmatpush2.msra.mxu0 0.0
        %3321 = vmatprep.subr.mxu0 0.0
        %3322 = vmatpush2.msra.mxu0 0.0
        %3323 = vmatprep.subr.mxu0 0.0
        %3324 = vmatpush2.msra.mxu0 0.0
        %3325 = vmatprep.subr.mxu0 0.0
        %3326 = vmatpush2.msra.mxu0 0.0
        %3327 = vmatprep.subr.mxu0 0.0
        %3328 = vmatpush2.msra.mxu0 0.0
        %3329 = vmatprep.subr.mxu0 0.0
        %3330 = vmatpush2.msra.mxu0 0.0
        %3331 = vmatprep.mubr.f32.mxu0 0.0
        %3332 = vmatmul.mubr.f32.gmra.mxu0 %v3251
        %v3333 = vpop.f32.mrf.mxu0
        %v3334 = vadd.f32 0.0, %v3333
        %v3335 = vpop.f32.mrf.mxu0
        %3336 = vmatprep.mubr.f32.mxu0 0.0
        %3337 = vmatmul.mubr.f32.gmra.mxu0 %v3252
        %v3338 = vpop.f32.mrf.mxu0
        %v3339 = vadd.f32 0.0, %v3338
        %v3340 = vpop.f32.mrf.mxu0
        %3341 = vmatprep.mubr.f32.mxu0 0.0
        %3342 = vmatmul.mubr.f32.gmra.mxu0 %v3253
        %v3343 = vpop.f32.mrf.mxu0
        %v3344 = vadd.f32 0.0, %v3343
        %v3345 = vpop.f32.mrf.mxu0
        %3346 = vmatprep.mubr.f32.mxu0 0.0
        %3347 = vmatmul.mubr.f32.gmra.mxu0 %v3254
        %v3348 = vpop.f32.mrf.mxu0
        %v3349 = vadd.f32 0.0, %v3348
        %v3350 = vpop.f32.mrf.mxu0
        %3351 = vdwg.mxu0
        %v3352 = vadd.f32 %v3171, %v3172
        %v3353 = vadd.f32 %v3352, %v3173
        %v3354 = vadd.f32 %v3353, %v3174
        %v3355 = vadd.f32 %v3354, %v3175
        %v3356 = vadd.f32 %v3355, %v3176
        %v3357 = vadd.f32 %v3356, %v3177
        %v3358 = vadd.f32 %v3357, %v3178
        %v3359 = vadd.f32 %v3358, %v3179
        %v3360 = vadd.f32 %v3359, %v3180
        %v3361 = vadd.f32 %v3360, %v3181
        %v3362 = vadd.f32 %v3361, %v3182
        %v3363 = vadd.f32 %v3362, %v3183
        %v3364 = vadd.f32 %v3363, %v3184
        %v3365 = vadd.f32 %v3364, %v3185
        %v3366 = vadd.f32 %v3365, %v3186
        %v3367 = vrot.slane %v3366, 4
        %v3368 = vadd.f32 %v3366, %v3367
        %v3369 = vrot.slane %v3368, 2
        %v3370 = vadd.f32 %v3368, %v3369
        %v3371 = vrot.slane %v3370, 1
        %v3372 = vadd.f32 %v3370, %v3371
        %3373 = vmatprep.subr.mxu0 0.0
        %3374 = vmatpush1.xpose.msra.mxu0 %v2802
        %3375 = vmatprep.subr.mxu0 0.0
        %3376 = vmatpush1.xpose.msra.mxu0 %v2801
        %3377 = vmatprep.subr.mxu0 0.0
        %3378 = vmatpush1.xpose.msra.mxu0 %v2800
        %3379 = vmatprep.subr.mxu0 0.0
        %3380 = vmatpush1.xpose.msra.mxu0 %v2799
        %3381 = vmatprep.subr.mxu0 0.0
        %3382 = vmatpush1.xpose.msra.mxu0 %v2798
        %3383 = vmatprep.subr.mxu0 0.0
        %3384 = vmatpush1.xpose.msra.mxu0 %v2797
        %3385 = vmatprep.subr.mxu0 0.0
        %3386 = vmatpush1.xpose.msra.mxu0 %v2796
        %3387 = vmatprep.subr.mxu0 0.0
        %3388 = vmatpush1.xpose.msra.mxu0 %v2795
        %3389 = vmatprep.subr.mxu0 0.0
        %3390 = vmatpush1.xpose.msra.mxu0 %v2794
        %3391 = vmatprep.subr.mxu0 0.0
        %3392 = vmatpush1.xpose.msra.mxu0 %v2793
        %3393 = vmatprep.subr.mxu0 0.0
        %3394 = vmatpush1.xpose.msra.mxu0 %v2792
        %3395 = vmatprep.subr.mxu0 0.0
        %3396 = vmatpush1.xpose.msra.mxu0 %v2791
        %3397 = vmatprep.subr.mxu0 0.0
        %3398 = vmatpush1.xpose.msra.mxu0 %v2790
        %3399 = vmatprep.subr.mxu0 0.0
        %3400 = vmatpush1.xpose.msra.mxu0 %v2789
        %3401 = vmatprep.subr.mxu0 0.0
        %3402 = vmatpush1.xpose.msra.mxu0 %v2788
        %3403 = vmatprep.subr.mxu0 0.0
        %3404 = vmatpush1.xpose.msra.mxu0 %v2787
        %3405 = vmatprep.subr.mxu0 0.0
        %3406 = vmatpush2.xpose.msra.mxu0 0.0
        %3407 = vmatprep.subr.mxu0 0.0
        %3408 = vmatpush2.xpose.msra.mxu0 0.0
        %3409 = vmatprep.subr.mxu0 0.0
        %3410 = vmatpush2.xpose.msra.mxu0 0.0
        %3411 = vmatprep.subr.mxu0 0.0
        %3412 = vmatpush2.xpose.msra.mxu0 0.0
        %3413 = vmatprep.subr.mxu0 0.0
        %3414 = vmatpush2.xpose.msra.mxu0 0.0
        %3415 = vmatprep.subr.mxu0 0.0
        %3416 = vmatpush2.xpose.msra.mxu0 0.0
        %3417 = vmatprep.subr.mxu0 0.0
        %3418 = vmatpush2.xpose.msra.mxu0 0.0
        %3419 = vmatprep.subr.mxu0 0.0
        %3420 = vmatpush2.xpose.msra.mxu0 0.0
        %3421 = vmatprep.subr.mxu0 0.0
        %3422 = vmatpush2.xpose.msra.mxu0 0.0
        %3423 = vmatprep.subr.mxu0 0.0
        %3424 = vmatpush2.xpose.msra.mxu0 0.0
        %3425 = vmatprep.subr.mxu0 0.0
        %3426 = vmatpush2.xpose.msra.mxu0 0.0
        %3427 = vmatprep.subr.mxu0 0.0
        %3428 = vmatpush2.xpose.msra.mxu0 0.0
        %3429 = vmatprep.subr.mxu0 0.0
        %3430 = vmatpush2.xpose.msra.mxu0 0.0
        %3431 = vmatprep.subr.mxu0 0.0
        %3432 = vmatpush2.xpose.msra.mxu0 0.0
        %3433 = vmatprep.subr.mxu0 0.0
        %3434 = vmatpush2.xpose.msra.mxu0 0.0
        %3435 = vmatprep.subr.mxu0 0.0
        %3436 = vmatpush2.xpose.msra.mxu0 0.0
        %3437 = vmatprep.mubr.f32.mxu0 0.0
        %3438 = vmatmul.mubr.f32.gmra.mxu0 %v3334
        %v3439 = vpop.f32.mrf.mxu0
        %v3440 = vadd.f32 0.0, %v3439
        %v3441 = vpop.f32.mrf.mxu0
        %3442 = vmatprep.mubr.f32.mxu0 0.0
        %3443 = vmatmul.mubr.f32.gmra.mxu0 %v3339
        %v3444 = vpop.f32.mrf.mxu0
        %v3445 = vadd.f32 0.0, %v3444
        %v3446 = vpop.f32.mrf.mxu0
        %3447 = vmatprep.mubr.f32.mxu0 0.0
        %3448 = vmatmul.mubr.f32.gmra.mxu0 %v3344
        %v3449 = vpop.f32.mrf.mxu0
        %v3450 = vadd.f32 0.0, %v3449
        %v3451 = vpop.f32.mrf.mxu0
        %3452 = vmatprep.mubr.f32.mxu0 0.0
        %3453 = vmatmul.mubr.f32.gmra.mxu0 %v3349
        %v3454 = vpop.f32.mrf.mxu0
        %v3455 = vadd.f32 0.0, %v3454
        %v3456 = vpop.f32.mrf.mxu0
        %3457 = vmatprep.mubr.f32.mxu0 0.0
        %3458 = vmatmul.mubr.f32.gmra.mxu0 %v3372
        %v3459 = vpop.f32.mrf.mxu0
        %v3460 = vadd.f32 0.0, %v3459
        %v3461 = vpop.f32.mrf.mxu0
        %3462 = vdwg.mxu0
        %v3463 = vrcp.pop %v3460
        %v3464 = vmul.f32 %v3460, %v3463
        %v3465 = vsub.f32 2.0, %v3464
        %v3466 = vmul.f32 %v3463, %v3465
        %v3467 = vlaneseq
        %v3468 = vshrl.u32 %v3467, 7
        %v3469 = vsub.s32 0, %v3468
        %v3470 = vrot.slane %v3466, %v3469
        %v3471 = vmul.f32 %v3440, %v3470
        %v3472 = vmul.f32 %v3445, %v3470
        %v3473 = vmul.f32 %v3450, %v3470
        %v3474 = vmul.f32 %v3455, %v3470
        %3475 = vst [vmem:[%s178] sm:$0xff] %v3471
        %3476 = vst [vmem:[%s178 + $0x8] sm:$0xff] %v3472
        %3477 = vst [vmem:[%s178 + $0x10] sm:$0xff] %v3473
        %3478 = vst [vmem:[%s178 + $0x18] sm:$0xff] %v3474
        %3479 = vxpose.xlu0.b32.start [1/16] %v269, 128
        %3480 = vxpose.xlu0.b32.cont [2/16] %v270, 128
        %3481 = vxpose.xlu0.b32.cont [3/16] %v271, 128
        %3482 = vxpose.xlu0.b32.cont [4/16] %v272, 128
        %3483 = vxpose.xlu0.b32.cont [5/16] %v273, 128
        %3484 = vxpose.xlu0.b32.cont [6/16] %v274, 128
        %3485 = vxpose.xlu0.b32.cont [7/16] %v275, 128
        %3486 = vxpose.xlu0.b32.cont [8/16] %v276, 128
        %3487 = vxpose.xlu0.b32.cont [9/16] %v277, 128
        %3488 = vxpose.xlu0.b32.cont [10/16] %v278, 128
        %3489 = vxpose.xlu0.b32.cont [11/16] %v279, 128
        %3490 = vxpose.xlu0.b32.cont [12/16] %v280, 128
        %3491 = vxpose.xlu0.b32.cont [13/16] %v281, 128
        %3492 = vxpose.xlu0.b32.cont [14/16] %v282, 128
        %3493 = vxpose.xlu0.b32.cont [15/16] %v283, 128
        %3494 = vxpose.xlu0.b32.end [16/16] %v284, 128
        %v3495 = vpop.trf.xlu0
        %v3496 = vpop.trf.xlu0
        %v3497 = vpop.trf.xlu0
        %v3498 = vpop.trf.xlu0
        %v3499 = vpop.trf.xlu0
        %v3500 = vpop.trf.xlu0
        %v3501 = vpop.trf.xlu0
        %v3502 = vpop.trf.xlu0
        %v3503 = vpop.trf.xlu0
        %v3504 = vpop.trf.xlu0
        %v3505 = vpop.trf.xlu0
        %v3506 = vpop.trf.xlu0
        %v3507 = vpop.trf.xlu0
        %v3508 = vpop.trf.xlu0
        %v3509 = vpop.trf.xlu0
        %v3510 = vpop.trf.xlu0
        %3511 = vmatprep.subr.mxu0 0.0
        %3512 = vmatpush1.msra.mxu0 %v3202
        %3513 = vmatprep.subr.mxu0 0.0
        %3514 = vmatpush1.msra.mxu0 %v3201
        %3515 = vmatprep.subr.mxu0 0.0
        %3516 = vmatpush1.msra.mxu0 %v3200
        %3517 = vmatprep.subr.mxu0 0.0
        %3518 = vmatpush1.msra.mxu0 %v3199
        %3519 = vmatprep.subr.mxu0 0.0
        %3520 = vmatpush1.msra.mxu0 %v3198
        %3521 = vmatprep.subr.mxu0 0.0
        %3522 = vmatpush1.msra.mxu0 %v3197
        %3523 = vmatprep.subr.mxu0 0.0
        %3524 = vmatpush1.msra.mxu0 %v3196
        %3525 = vmatprep.subr.mxu0 0.0
        %3526 = vmatpush1.msra.mxu0 %v3195
        %3527 = vmatprep.subr.mxu0 0.0
        %3528 = vmatpush1.msra.mxu0 %v3194
        %3529 = vmatprep.subr.mxu0 0.0
        %3530 = vmatpush1.msra.mxu0 %v3193
        %3531 = vmatprep.subr.mxu0 0.0
        %3532 = vmatpush1.msra.mxu0 %v3192
        %3533 = vmatprep.subr.mxu0 0.0
        %3534 = vmatpush1.msra.mxu0 %v3191
        %3535 = vmatprep.subr.mxu0 0.0
        %3536 = vmatpush1.msra.mxu0 %v3190
        %3537 = vmatprep.subr.mxu0 0.0
        %3538 = vmatpush1.msra.mxu0 %v3189
        %3539 = vmatprep.subr.mxu0 0.0
        %3540 = vmatpush1.msra.mxu0 %v3188
        %3541 = vmatprep.subr.mxu0 0.0
        %3542 = vmatpush1.msra.mxu0 %v3187
        %3543 = vmatprep.subr.mxu0 0.0
        %3544 = vmatpush2.msra.mxu0 0.0
        %3545 = vmatprep.subr.mxu0 0.0
        %3546 = vmatpush2.msra.mxu0 0.0
        %3547 = vmatprep.subr.mxu0 0.0
        %3548 = vmatpush2.msra.mxu0 0.0
        %3549 = vmatprep.subr.mxu0 0.0
        %3550 = vmatpush2.msra.mxu0 0.0
        %3551 = vmatprep.subr.mxu0 0.0
        %3552 = vmatpush2.msra.mxu0 0.0
        %3553 = vmatprep.subr.mxu0 0.0
        %3554 = vmatpush2.msra.mxu0 0.0
        %3555 = vmatprep.subr.mxu0 0.0
        %3556 = vmatpush2.msra.mxu0 0.0
        %3557 = vmatprep.subr.mxu0 0.0
        %3558 = vmatpush2.msra.mxu0 0.0
        %3559 = vmatprep.subr.mxu0 0.0
        %3560 = vmatpush2.msra.mxu0 0.0
        %3561 = vmatprep.subr.mxu0 0.0
        %3562 = vmatpush2.msra.mxu0 0.0
        %3563 = vmatprep.subr.mxu0 0.0
        %3564 = vmatpush2.msra.mxu0 0.0
        %3565 = vmatprep.subr.mxu0 0.0
        %3566 = vmatpush2.msra.mxu0 0.0
        %3567 = vmatprep.subr.mxu0 0.0
        %3568 = vmatpush2.msra.mxu0 0.0
        %3569 = vmatprep.subr.mxu0 0.0
        %3570 = vmatpush2.msra.mxu0 0.0
        %3571 = vmatprep.subr.mxu0 0.0
        %3572 = vmatpush2.msra.mxu0 0.0
        %3573 = vmatprep.subr.mxu0 0.0
        %3574 = vmatpush2.msra.mxu0 0.0
        %3575 = vmatprep.mubr.f32.mxu0 0.0
        %3576 = vmatmul.mubr.f32.gmra.mxu0 %v3495
        %v3577 = vpop.f32.mrf.mxu0
        %v3578 = vadd.f32 0.0, %v3577
        %v3579 = vpop.f32.mrf.mxu0
        %3580 = vmatprep.mubr.f32.mxu0 0.0
        %3581 = vmatmul.mubr.f32.gmra.mxu0 %v3496
        %v3582 = vpop.f32.mrf.mxu0
        %v3583 = vadd.f32 0.0, %v3582
        %v3584 = vpop.f32.mrf.mxu0
        %3585 = vmatprep.mubr.f32.mxu0 0.0
        %3586 = vmatmul.mubr.f32.gmra.mxu0 %v3497
        %v3587 = vpop.f32.mrf.mxu0
        %v3588 = vadd.f32 0.0, %v3587
        %v3589 = vpop.f32.mrf.mxu0
        %3590 = vmatprep.mubr.f32.mxu0 0.0
        %3591 = vmatmul.mubr.f32.gmra.mxu0 %v3498
        %v3592 = vpop.f32.mrf.mxu0
        %v3593 = vadd.f32 0.0, %v3592
        %v3594 = vpop.f32.mrf.mxu0
        %3595 = vdwg.mxu0
        %v3596 = vadd.f32 %v3187, %v3188
        %v3597 = vadd.f32 %v3596, %v3189
        %v3598 = vadd.f32 %v3597, %v3190
        %v3599 = vadd.f32 %v3598, %v3191
        %v3600 = vadd.f32 %v3599, %v3192
        %v3601 = vadd.f32 %v3600, %v3193
        %v3602 = vadd.f32 %v3601, %v3194
        %v3603 = vadd.f32 %v3602, %v3195
        %v3604 = vadd.f32 %v3603, %v3196
        %v3605 = vadd.f32 %v3604, %v3197
        %v3606 = vadd.f32 %v3605, %v3198
        %v3607 = vadd.f32 %v3606, %v3199
        %v3608 = vadd.f32 %v3607, %v3200
        %v3609 = vadd.f32 %v3608, %v3201
        %v3610 = vadd.f32 %v3609, %v3202
        %v3611 = vrot.slane %v3610, 4
        %v3612 = vadd.f32 %v3610, %v3611
        %v3613 = vrot.slane %v3612, 2
        %v3614 = vadd.f32 %v3612, %v3613
        %v3615 = vrot.slane %v3614, 1
        %v3616 = vadd.f32 %v3614, %v3615
        %3617 = vmatprep.subr.mxu0 0.0
        %3618 = vmatpush1.xpose.msra.mxu0 %v2818
        %3619 = vmatprep.subr.mxu0 0.0
        %3620 = vmatpush1.xpose.msra.mxu0 %v2817
        %3621 = vmatprep.subr.mxu0 0.0
        %3622 = vmatpush1.xpose.msra.mxu0 %v2816
        %3623 = vmatprep.subr.mxu0 0.0
        %3624 = vmatpush1.xpose.msra.mxu0 %v2815
        %3625 = vmatprep.subr.mxu0 0.0
        %3626 = vmatpush1.xpose.msra.mxu0 %v2814
        %3627 = vmatprep.subr.mxu0 0.0
        %3628 = vmatpush1.xpose.msra.mxu0 %v2813
        %3629 = vmatprep.subr.mxu0 0.0
        %3630 = vmatpush1.xpose.msra.mxu0 %v2812
        %3631 = vmatprep.subr.mxu0 0.0
        %3632 = vmatpush1.xpose.msra.mxu0 %v2811
        %3633 = vmatprep.subr.mxu0 0.0
        %3634 = vmatpush1.xpose.msra.mxu0 %v2810
        %3635 = vmatprep.subr.mxu0 0.0
        %3636 = vmatpush1.xpose.msra.mxu0 %v2809
        %3637 = vmatprep.subr.mxu0 0.0
        %3638 = vmatpush1.xpose.msra.mxu0 %v2808
        %3639 = vmatprep.subr.mxu0 0.0
        %3640 = vmatpush1.xpose.msra.mxu0 %v2807
        %3641 = vmatprep.subr.mxu0 0.0
        %3642 = vmatpush1.xpose.msra.mxu0 %v2806
        %3643 = vmatprep.subr.mxu0 0.0
        %3644 = vmatpush1.xpose.msra.mxu0 %v2805
        %3645 = vmatprep.subr.mxu0 0.0
        %3646 = vmatpush1.xpose.msra.mxu0 %v2804
        %3647 = vmatprep.subr.mxu0 0.0
        %3648 = vmatpush1.xpose.msra.mxu0 %v2803
        %3649 = vmatprep.subr.mxu0 0.0
        %3650 = vmatpush2.xpose.msra.mxu0 0.0
        %3651 = vmatprep.subr.mxu0 0.0
        %3652 = vmatpush2.xpose.msra.mxu0 0.0
        %3653 = vmatprep.subr.mxu0 0.0
        %3654 = vmatpush2.xpose.msra.mxu0 0.0
        %3655 = vmatprep.subr.mxu0 0.0
        %3656 = vmatpush2.xpose.msra.mxu0 0.0
        %3657 = vmatprep.subr.mxu0 0.0
        %3658 = vmatpush2.xpose.msra.mxu0 0.0
        %3659 = vmatprep.subr.mxu0 0.0
        %3660 = vmatpush2.xpose.msra.mxu0 0.0
        %3661 = vmatprep.subr.mxu0 0.0
        %3662 = vmatpush2.xpose.msra.mxu0 0.0
        %3663 = vmatprep.subr.mxu0 0.0
        %3664 = vmatpush2.xpose.msra.mxu0 0.0
        %3665 = vmatprep.subr.mxu0 0.0
        %3666 = vmatpush2.xpose.msra.mxu0 0.0
        %3667 = vmatprep.subr.mxu0 0.0
        %3668 = vmatpush2.xpose.msra.mxu0 0.0
        %3669 = vmatprep.subr.mxu0 0.0
        %3670 = vmatpush2.xpose.msra.mxu0 0.0
        %3671 = vmatprep.subr.mxu0 0.0
        %3672 = vmatpush2.xpose.msra.mxu0 0.0
        %3673 = vmatprep.subr.mxu0 0.0
        %3674 = vmatpush2.xpose.msra.mxu0 0.0
        %3675 = vmatprep.subr.mxu0 0.0
        %3676 = vmatpush2.xpose.msra.mxu0 0.0
        %3677 = vmatprep.subr.mxu0 0.0
        %3678 = vmatpush2.xpose.msra.mxu0 0.0
        %3679 = vmatprep.subr.mxu0 0.0
        %3680 = vmatpush2.xpose.msra.mxu0 0.0
        %3681 = vmatprep.mubr.f32.mxu0 0.0
        %3682 = vmatmul.mubr.f32.gmra.mxu0 %v3578
        %v3683 = vpop.f32.mrf.mxu0
        %v3684 = vadd.f32 0.0, %v3683
        %v3685 = vpop.f32.mrf.mxu0
        %3686 = vmatprep.mubr.f32.mxu0 0.0
        %3687 = vmatmul.mubr.f32.gmra.mxu0 %v3583
        %v3688 = vpop.f32.mrf.mxu0
        %v3689 = vadd.f32 0.0, %v3688
        %v3690 = vpop.f32.mrf.mxu0
        %3691 = vmatprep.mubr.f32.mxu0 0.0
        %3692 = vmatmul.mubr.f32.gmra.mxu0 %v3588
        %v3693 = vpop.f32.mrf.mxu0
        %v3694 = vadd.f32 0.0, %v3693
        %v3695 = vpop.f32.mrf.mxu0
        %3696 = vmatprep.mubr.f32.mxu0 0.0
        %3697 = vmatmul.mubr.f32.gmra.mxu0 %v3593
        %v3698 = vpop.f32.mrf.mxu0
        %v3699 = vadd.f32 0.0, %v3698
        %v3700 = vpop.f32.mrf.mxu0
        %3701 = vmatprep.mubr.f32.mxu0 0.0
        %3702 = vmatmul.mubr.f32.gmra.mxu0 %v3616
        %v3703 = vpop.f32.mrf.mxu0
        %v3704 = vadd.f32 0.0, %v3703
        %v3705 = vpop.f32.mrf.mxu0
        %3706 = vdwg.mxu0
        %v3707 = vrcp.pop %v3704
        %v3708 = vmul.f32 %v3704, %v3707
        %v3709 = vsub.f32 2.0, %v3708
        %v3710 = vmul.f32 %v3707, %v3709
        %v3711 = vlaneseq
        %v3712 = vshrl.u32 %v3711, 7
        %v3713 = vsub.s32 0, %v3712
        %v3714 = vrot.slane %v3710, %v3713
        %v3715 = vmul.f32 %v3684, %v3714
        %v3716 = vmul.f32 %v3689, %v3714
        %v3717 = vmul.f32 %v3694, %v3714
        %v3718 = vmul.f32 %v3699, %v3714
        %s3719 = scalar_lea.vmem %s178, 32 [#allocation2]
        %3720 = vst [vmem:[%s3719] sm:$0xff] %v3715
        %3721 = vst [vmem:[%s3719 + $0x8] sm:$0xff] %v3716
        %3722 = vst [vmem:[%s3719 + $0x10] sm:$0xff] %v3717
        %3723 = vst [vmem:[%s3719 + $0x18] sm:$0xff] %v3718
        %3724 = vxpose.xlu0.b32.start [1/16] %v285, 128
        %3725 = vxpose.xlu0.b32.cont [2/16] %v286, 128
        %3726 = vxpose.xlu0.b32.cont [3/16] %v287, 128
        %3727 = vxpose.xlu0.b32.cont [4/16] %v288, 128
        %3728 = vxpose.xlu0.b32.cont [5/16] %v289, 128
        %3729 = vxpose.xlu0.b32.cont [6/16] %v290, 128
        %3730 = vxpose.xlu0.b32.cont [7/16] %v291, 128
        %3731 = vxpose.xlu0.b32.cont [8/16] %v292, 128
        %3732 = vxpose.xlu0.b32.cont [9/16] %v293, 128
        %3733 = vxpose.xlu0.b32.cont [10/16] %v294, 128
        %3734 = vxpose.xlu0.b32.cont [11/16] %v295, 128
        %3735 = vxpose.xlu0.b32.cont [12/16] %v296, 128
        %3736 = vxpose.xlu0.b32.cont [13/16] %v297, 128
        %3737 = vxpose.xlu0.b32.cont [14/16] %v298, 128
        %3738 = vxpose.xlu0.b32.cont [15/16] %v299, 128
        %3739 = vxpose.xlu0.b32.end [16/16] %v300, 128
        %v3740 = vpop.trf.xlu0
        %v3741 = vpop.trf.xlu0
        %v3742 = vpop.trf.xlu0
        %v3743 = vpop.trf.xlu0
        %v3744 = vpop.trf.xlu0
        %v3745 = vpop.trf.xlu0
        %v3746 = vpop.trf.xlu0
        %v3747 = vpop.trf.xlu0
        %v3748 = vpop.trf.xlu0
        %v3749 = vpop.trf.xlu0
        %v3750 = vpop.trf.xlu0
        %v3751 = vpop.trf.xlu0
        %v3752 = vpop.trf.xlu0
        %v3753 = vpop.trf.xlu0
        %v3754 = vpop.trf.xlu0
        %v3755 = vpop.trf.xlu0
        %3756 = vmatprep.subr.mxu0 0.0
        %3757 = vmatpush1.msra.mxu0 %v3218
        %3758 = vmatprep.subr.mxu0 0.0
        %3759 = vmatpush1.msra.mxu0 %v3217
        %3760 = vmatprep.subr.mxu0 0.0
        %3761 = vmatpush1.msra.mxu0 %v3216
        %3762 = vmatprep.subr.mxu0 0.0
        %3763 = vmatpush1.msra.mxu0 %v3215
        %3764 = vmatprep.subr.mxu0 0.0
        %3765 = vmatpush1.msra.mxu0 %v3214
        %3766 = vmatprep.subr.mxu0 0.0
        %3767 = vmatpush1.msra.mxu0 %v3213
        %3768 = vmatprep.subr.mxu0 0.0
        %3769 = vmatpush1.msra.mxu0 %v3212
        %3770 = vmatprep.subr.mxu0 0.0
        %3771 = vmatpush1.msra.mxu0 %v3211
        %3772 = vmatprep.subr.mxu0 0.0
        %3773 = vmatpush1.msra.mxu0 %v3210
        %3774 = vmatprep.subr.mxu0 0.0
        %3775 = vmatpush1.msra.mxu0 %v3209
        %3776 = vmatprep.subr.mxu0 0.0
        %3777 = vmatpush1.msra.mxu0 %v3208
        %3778 = vmatprep.subr.mxu0 0.0
        %3779 = vmatpush1.msra.mxu0 %v3207
        %3780 = vmatprep.subr.mxu0 0.0
        %3781 = vmatpush1.msra.mxu0 %v3206
        %3782 = vmatprep.subr.mxu0 0.0
        %3783 = vmatpush1.msra.mxu0 %v3205
        %3784 = vmatprep.subr.mxu0 0.0
        %3785 = vmatpush1.msra.mxu0 %v3204
        %3786 = vmatprep.subr.mxu0 0.0
        %3787 = vmatpush1.msra.mxu0 %v3203
        %3788 = vmatprep.subr.mxu0 0.0
        %3789 = vmatpush2.msra.mxu0 0.0
        %3790 = vmatprep.subr.mxu0 0.0
        %3791 = vmatpush2.msra.mxu0 0.0
        %3792 = vmatprep.subr.mxu0 0.0
        %3793 = vmatpush2.msra.mxu0 0.0
        %3794 = vmatprep.subr.mxu0 0.0
        %3795 = vmatpush2.msra.mxu0 0.0
        %3796 = vmatprep.subr.mxu0 0.0
        %3797 = vmatpush2.msra.mxu0 0.0
        %3798 = vmatprep.subr.mxu0 0.0
        %3799 = vmatpush2.msra.mxu0 0.0
        %3800 = vmatprep.subr.mxu0 0.0
        %3801 = vmatpush2.msra.mxu0 0.0
        %3802 = vmatprep.subr.mxu0 0.0
        %3803 = vmatpush2.msra.mxu0 0.0
        %3804 = vmatprep.subr.mxu0 0.0
        %3805 = vmatpush2.msra.mxu0 0.0
        %3806 = vmatprep.subr.mxu0 0.0
        %3807 = vmatpush2.msra.mxu0 0.0
        %3808 = vmatprep.subr.mxu0 0.0
        %3809 = vmatpush2.msra.mxu0 0.0
        %3810 = vmatprep.subr.mxu0 0.0
        %3811 = vmatpush2.msra.mxu0 0.0
        %3812 = vmatprep.subr.mxu0 0.0
        %3813 = vmatpush2.msra.mxu0 0.0
        %3814 = vmatprep.subr.mxu0 0.0
        %3815 = vmatpush2.msra.mxu0 0.0
        %3816 = vmatprep.subr.mxu0 0.0
        %3817 = vmatpush2.msra.mxu0 0.0
        %3818 = vmatprep.subr.mxu0 0.0
        %3819 = vmatpush2.msra.mxu0 0.0
        %3820 = vmatprep.mubr.f32.mxu0 0.0
        %3821 = vmatmul.mubr.f32.gmra.mxu0 %v3740
        %v3822 = vpop.f32.mrf.mxu0
        %v3823 = vadd.f32 0.0, %v3822
        %v3824 = vpop.f32.mrf.mxu0
        %3825 = vmatprep.mubr.f32.mxu0 0.0
        %3826 = vmatmul.mubr.f32.gmra.mxu0 %v3741
        %v3827 = vpop.f32.mrf.mxu0
        %v3828 = vadd.f32 0.0, %v3827
        %v3829 = vpop.f32.mrf.mxu0
        %3830 = vmatprep.mubr.f32.mxu0 0.0
        %3831 = vmatmul.mubr.f32.gmra.mxu0 %v3742
        %v3832 = vpop.f32.mrf.mxu0
        %v3833 = vadd.f32 0.0, %v3832
        %v3834 = vpop.f32.mrf.mxu0
        %3835 = vmatprep.mubr.f32.mxu0 0.0
        %3836 = vmatmul.mubr.f32.gmra.mxu0 %v3743
        %v3837 = vpop.f32.mrf.mxu0
        %v3838 = vadd.f32 0.0, %v3837
        %v3839 = vpop.f32.mrf.mxu0
        %3840 = vdwg.mxu0
        %v3841 = vadd.f32 %v3203, %v3204
        %v3842 = vadd.f32 %v3841, %v3205
        %v3843 = vadd.f32 %v3842, %v3206
        %v3844 = vadd.f32 %v3843, %v3207
        %v3845 = vadd.f32 %v3844, %v3208
        %v3846 = vadd.f32 %v3845, %v3209
        %v3847 = vadd.f32 %v3846, %v3210
        %v3848 = vadd.f32 %v3847, %v3211
        %v3849 = vadd.f32 %v3848, %v3212
        %v3850 = vadd.f32 %v3849, %v3213
        %v3851 = vadd.f32 %v3850, %v3214
        %v3852 = vadd.f32 %v3851, %v3215
        %v3853 = vadd.f32 %v3852, %v3216
        %v3854 = vadd.f32 %v3853, %v3217
        %v3855 = vadd.f32 %v3854, %v3218
        %v3856 = vrot.slane %v3855, 4
        %v3857 = vadd.f32 %v3855, %v3856
        %v3858 = vrot.slane %v3857, 2
        %v3859 = vadd.f32 %v3857, %v3858
        %v3860 = vrot.slane %v3859, 1
        %v3861 = vadd.f32 %v3859, %v3860
        %3862 = vmatprep.subr.mxu0 0.0
        %3863 = vmatpush1.xpose.msra.mxu0 %v2834
        %3864 = vmatprep.subr.mxu0 0.0
        %3865 = vmatpush1.xpose.msra.mxu0 %v2833
        %3866 = vmatprep.subr.mxu0 0.0
        %3867 = vmatpush1.xpose.msra.mxu0 %v2832
        %3868 = vmatprep.subr.mxu0 0.0
        %3869 = vmatpush1.xpose.msra.mxu0 %v2831
        %3870 = vmatprep.subr.mxu0 0.0
        %3871 = vmatpush1.xpose.msra.mxu0 %v2830
        %3872 = vmatprep.subr.mxu0 0.0
        %3873 = vmatpush1.xpose.msra.mxu0 %v2829
        %3874 = vmatprep.subr.mxu0 0.0
        %3875 = vmatpush1.xpose.msra.mxu0 %v2828
        %3876 = vmatprep.subr.mxu0 0.0
        %3877 = vmatpush1.xpose.msra.mxu0 %v2827
        %3878 = vmatprep.subr.mxu0 0.0
        %3879 = vmatpush1.xpose.msra.mxu0 %v2826
        %3880 = vmatprep.subr.mxu0 0.0
        %3881 = vmatpush1.xpose.msra.mxu0 %v2825
        %3882 = vmatprep.subr.mxu0 0.0
        %3883 = vmatpush1.xpose.msra.mxu0 %v2824
        %3884 = vmatprep.subr.mxu0 0.0
        %3885 = vmatpush1.xpose.msra.mxu0 %v2823
        %3886 = vmatprep.subr.mxu0 0.0
        %3887 = vmatpush1.xpose.msra.mxu0 %v2822
        %3888 = vmatprep.subr.mxu0 0.0
        %3889 = vmatpush1.xpose.msra.mxu0 %v2821
        %3890 = vmatprep.subr.mxu0 0.0
        %3891 = vmatpush1.xpose.msra.mxu0 %v2820
        %3892 = vmatprep.subr.mxu0 0.0
        %3893 = vmatpush1.xpose.msra.mxu0 %v2819
        %3894 = vmatprep.subr.mxu0 0.0
        %3895 = vmatpush2.xpose.msra.mxu0 0.0
        %3896 = vmatprep.subr.mxu0 0.0
        %3897 = vmatpush2.xpose.msra.mxu0 0.0
        %3898 = vmatprep.subr.mxu0 0.0
        %3899 = vmatpush2.xpose.msra.mxu0 0.0
        %3900 = vmatprep.subr.mxu0 0.0
        %3901 = vmatpush2.xpose.msra.mxu0 0.0
        %3902 = vmatprep.subr.mxu0 0.0
        %3903 = vmatpush2.xpose.msra.mxu0 0.0
        %3904 = vmatprep.subr.mxu0 0.0
        %3905 = vmatpush2.xpose.msra.mxu0 0.0
        %3906 = vmatprep.subr.mxu0 0.0
        %3907 = vmatpush2.xpose.msra.mxu0 0.0
        %3908 = vmatprep.subr.mxu0 0.0
        %3909 = vmatpush2.xpose.msra.mxu0 0.0
        %3910 = vmatprep.subr.mxu0 0.0
        %3911 = vmatpush2.xpose.msra.mxu0 0.0
        %3912 = vmatprep.subr.mxu0 0.0
        %3913 = vmatpush2.xpose.msra.mxu0 0.0
        %3914 = vmatprep.subr.mxu0 0.0
        %3915 = vmatpush2.xpose.msra.mxu0 0.0
        %3916 = vmatprep.subr.mxu0 0.0
        %3917 = vmatpush2.xpose.msra.mxu0 0.0
        %3918 = vmatprep.subr.mxu0 0.0
        %3919 = vmatpush2.xpose.msra.mxu0 0.0
        %3920 = vmatprep.subr.mxu0 0.0
        %3921 = vmatpush2.xpose.msra.mxu0 0.0
        %3922 = vmatprep.subr.mxu0 0.0
        %3923 = vmatpush2.xpose.msra.mxu0 0.0
        %3924 = vmatprep.subr.mxu0 0.0
        %3925 = vmatpush2.xpose.msra.mxu0 0.0
        %3926 = vmatprep.mubr.f32.mxu0 0.0
        %3927 = vmatmul.mubr.f32.gmra.mxu0 %v3823
        %v3928 = vpop.f32.mrf.mxu0
        %v3929 = vadd.f32 0.0, %v3928
        %v3930 = vpop.f32.mrf.mxu0
        %3931 = vmatprep.mubr.f32.mxu0 0.0
        %3932 = vmatmul.mubr.f32.gmra.mxu0 %v3828
        %v3933 = vpop.f32.mrf.mxu0
        %v3934 = vadd.f32 0.0, %v3933
        %v3935 = vpop.f32.mrf.mxu0
        %3936 = vmatprep.mubr.f32.mxu0 0.0
        %3937 = vmatmul.mubr.f32.gmra.mxu0 %v3833
        %v3938 = vpop.f32.mrf.mxu0
        %v3939 = vadd.f32 0.0, %v3938
        %v3940 = vpop.f32.mrf.mxu0
        %3941 = vmatprep.mubr.f32.mxu0 0.0
        %3942 = vmatmul.mubr.f32.gmra.mxu0 %v3838
        %v3943 = vpop.f32.mrf.mxu0
        %v3944 = vadd.f32 0.0, %v3943
        %v3945 = vpop.f32.mrf.mxu0
        %3946 = vmatprep.mubr.f32.mxu0 0.0
        %3947 = vmatmul.mubr.f32.gmra.mxu0 %v3861
        %v3948 = vpop.f32.mrf.mxu0
        %v3949 = vadd.f32 0.0, %v3948
        %v3950 = vpop.f32.mrf.mxu0
        %3951 = vdwg.mxu0
        %v3952 = vrcp.pop %v3949
        %v3953 = vmul.f32 %v3949, %v3952
        %v3954 = vsub.f32 2.0, %v3953
        %v3955 = vmul.f32 %v3952, %v3954
        %v3956 = vlaneseq
        %v3957 = vshrl.u32 %v3956, 7
        %v3958 = vsub.s32 0, %v3957
        %v3959 = vrot.slane %v3955, %v3958
        %v3960 = vmul.f32 %v3929, %v3959
        %v3961 = vmul.f32 %v3934, %v3959
        %v3962 = vmul.f32 %v3939, %v3959
        %v3963 = vmul.f32 %v3944, %v3959
        %s3964 = scalar_lea.vmem %s178, 64 [#allocation2]
        %3965 = vst [vmem:[%s3964] sm:$0xff] %v3960
        %3966 = vst [vmem:[%s3964 + $0x8] sm:$0xff] %v3961
        %3967 = vst [vmem:[%s3964 + $0x10] sm:$0xff] %v3962
        %3968 = vst [vmem:[%s3964 + $0x18] sm:$0xff] %v3963
        %3969 = vxpose.xlu0.b32.start [1/16] %v301, 128
        %3970 = vxpose.xlu0.b32.cont [2/16] %v302, 128
        %3971 = vxpose.xlu0.b32.cont [3/16] %v303, 128
        %3972 = vxpose.xlu0.b32.cont [4/16] %v304, 128
        %3973 = vxpose.xlu0.b32.cont [5/16] %v305, 128
        %3974 = vxpose.xlu0.b32.cont [6/16] %v306, 128
        %3975 = vxpose.xlu0.b32.cont [7/16] %v307, 128
        %3976 = vxpose.xlu0.b32.cont [8/16] %v308, 128
        %3977 = vxpose.xlu0.b32.cont [9/16] %v309, 128
        %3978 = vxpose.xlu0.b32.cont [10/16] %v310, 128
        %3979 = vxpose.xlu0.b32.cont [11/16] %v311, 128
        %3980 = vxpose.xlu0.b32.cont [12/16] %v312, 128
        %3981 = vxpose.xlu0.b32.cont [13/16] %v313, 128
        %3982 = vxpose.xlu0.b32.cont [14/16] %v314, 128
        %3983 = vxpose.xlu0.b32.cont [15/16] %v315, 128
        %3984 = vxpose.xlu0.b32.end [16/16] %v316, 128
        %v3985 = vpop.trf.xlu0
        %v3986 = vpop.trf.xlu0
        %v3987 = vpop.trf.xlu0
        %v3988 = vpop.trf.xlu0
        %v3989 = vpop.trf.xlu0
        %v3990 = vpop.trf.xlu0
        %v3991 = vpop.trf.xlu0
        %v3992 = vpop.trf.xlu0
        %v3993 = vpop.trf.xlu0
        %v3994 = vpop.trf.xlu0
        %v3995 = vpop.trf.xlu0
        %v3996 = vpop.trf.xlu0
        %v3997 = vpop.trf.xlu0
        %v3998 = vpop.trf.xlu0
        %v3999 = vpop.trf.xlu0
        %v4000 = vpop.trf.xlu0
        %4001 = vmatprep.subr.mxu0 0.0
        %4002 = vmatpush1.msra.mxu0 %v3234
        %4003 = vmatprep.subr.mxu0 0.0
        %4004 = vmatpush1.msra.mxu0 %v3233
        %4005 = vmatprep.subr.mxu0 0.0
        %4006 = vmatpush1.msra.mxu0 %v3232
        %4007 = vmatprep.subr.mxu0 0.0
        %4008 = vmatpush1.msra.mxu0 %v3231
        %4009 = vmatprep.subr.mxu0 0.0
        %4010 = vmatpush1.msra.mxu0 %v3230
        %4011 = vmatprep.subr.mxu0 0.0
        %4012 = vmatpush1.msra.mxu0 %v3229
        %4013 = vmatprep.subr.mxu0 0.0
        %4014 = vmatpush1.msra.mxu0 %v3228
        %4015 = vmatprep.subr.mxu0 0.0
        %4016 = vmatpush1.msra.mxu0 %v3227
        %4017 = vmatprep.subr.mxu0 0.0
        %4018 = vmatpush1.msra.mxu0 %v3226
        %4019 = vmatprep.subr.mxu0 0.0
        %4020 = vmatpush1.msra.mxu0 %v3225
        %4021 = vmatprep.subr.mxu0 0.0
        %4022 = vmatpush1.msra.mxu0 %v3224
        %4023 = vmatprep.subr.mxu0 0.0
        %4024 = vmatpush1.msra.mxu0 %v3223
        %4025 = vmatprep.subr.mxu0 0.0
        %4026 = vmatpush1.msra.mxu0 %v3222
        %4027 = vmatprep.subr.mxu0 0.0
        %4028 = vmatpush1.msra.mxu0 %v3221
        %4029 = vmatprep.subr.mxu0 0.0
        %4030 = vmatpush1.msra.mxu0 %v3220
        %4031 = vmatprep.subr.mxu0 0.0
        %4032 = vmatpush1.msra.mxu0 %v3219
        %4033 = vmatprep.subr.mxu0 0.0
        %4034 = vmatpush2.msra.mxu0 0.0
        %4035 = vmatprep.subr.mxu0 0.0
        %4036 = vmatpush2.msra.mxu0 0.0
        %4037 = vmatprep.subr.mxu0 0.0
        %4038 = vmatpush2.msra.mxu0 0.0
        %4039 = vmatprep.subr.mxu0 0.0
        %4040 = vmatpush2.msra.mxu0 0.0
        %4041 = vmatprep.subr.mxu0 0.0
        %4042 = vmatpush2.msra.mxu0 0.0
        %4043 = vmatprep.subr.mxu0 0.0
        %4044 = vmatpush2.msra.mxu0 0.0
        %4045 = vmatprep.subr.mxu0 0.0
        %4046 = vmatpush2.msra.mxu0 0.0
        %4047 = vmatprep.subr.mxu0 0.0
        %4048 = vmatpush2.msra.mxu0 0.0
        %4049 = vmatprep.subr.mxu0 0.0
        %4050 = vmatpush2.msra.mxu0 0.0
        %4051 = vmatprep.subr.mxu0 0.0
        %4052 = vmatpush2.msra.mxu0 0.0
        %4053 = vmatprep.subr.mxu0 0.0
        %4054 = vmatpush2.msra.mxu0 0.0
        %4055 = vmatprep.subr.mxu0 0.0
        %4056 = vmatpush2.msra.mxu0 0.0
        %4057 = vmatprep.subr.mxu0 0.0
        %4058 = vmatpush2.msra.mxu0 0.0
        %4059 = vmatprep.subr.mxu0 0.0
        %4060 = vmatpush2.msra.mxu0 0.0
        %4061 = vmatprep.subr.mxu0 0.0
        %4062 = vmatpush2.msra.mxu0 0.0
        %4063 = vmatprep.subr.mxu0 0.0
        %4064 = vmatpush2.msra.mxu0 0.0
        %4065 = vmatprep.mubr.f32.mxu0 0.0
        %4066 = vmatmul.mubr.f32.gmra.mxu0 %v3985
        %v4067 = vpop.f32.mrf.mxu0
        %v4068 = vadd.f32 0.0, %v4067
        %v4069 = vpop.f32.mrf.mxu0
        %4070 = vmatprep.mubr.f32.mxu0 0.0
        %4071 = vmatmul.mubr.f32.gmra.mxu0 %v3986
        %v4072 = vpop.f32.mrf.mxu0
        %v4073 = vadd.f32 0.0, %v4072
        %v4074 = vpop.f32.mrf.mxu0
        %4075 = vmatprep.mubr.f32.mxu0 0.0
        %4076 = vmatmul.mubr.f32.gmra.mxu0 %v3987
        %v4077 = vpop.f32.mrf.mxu0
        %v4078 = vadd.f32 0.0, %v4077
        %v4079 = vpop.f32.mrf.mxu0
        %4080 = vmatprep.mubr.f32.mxu0 0.0
        %4081 = vmatmul.mubr.f32.gmra.mxu0 %v3988
        %v4082 = vpop.f32.mrf.mxu0
        %v4083 = vadd.f32 0.0, %v4082
        %v4084 = vpop.f32.mrf.mxu0
        %4085 = vdwg.mxu0
        %v4086 = vadd.f32 %v3219, %v3220
        %v4087 = vadd.f32 %v4086, %v3221
        %v4088 = vadd.f32 %v4087, %v3222
        %v4089 = vadd.f32 %v4088, %v3223
        %v4090 = vadd.f32 %v4089, %v3224
        %v4091 = vadd.f32 %v4090, %v3225
        %v4092 = vadd.f32 %v4091, %v3226
        %v4093 = vadd.f32 %v4092, %v3227
        %v4094 = vadd.f32 %v4093, %v3228
        %v4095 = vadd.f32 %v4094, %v3229
        %v4096 = vadd.f32 %v4095, %v3230
        %v4097 = vadd.f32 %v4096, %v3231
        %v4098 = vadd.f32 %v4097, %v3232
        %v4099 = vadd.f32 %v4098, %v3233
        %v4100 = vadd.f32 %v4099, %v3234
        %v4101 = vrot.slane %v4100, 4
        %v4102 = vadd.f32 %v4100, %v4101
        %v4103 = vrot.slane %v4102, 2
        %v4104 = vadd.f32 %v4102, %v4103
        %v4105 = vrot.slane %v4104, 1
        %v4106 = vadd.f32 %v4104, %v4105
        %4107 = vmatprep.subr.mxu0 0.0
        %4108 = vmatpush1.xpose.msra.mxu0 %v2850
        %4109 = vmatprep.subr.mxu0 0.0
        %4110 = vmatpush1.xpose.msra.mxu0 %v2849
        %4111 = vmatprep.subr.mxu0 0.0
        %4112 = vmatpush1.xpose.msra.mxu0 %v2848
        %4113 = vmatprep.subr.mxu0 0.0
        %4114 = vmatpush1.xpose.msra.mxu0 %v2847
        %4115 = vmatprep.subr.mxu0 0.0
        %4116 = vmatpush1.xpose.msra.mxu0 %v2846
        %4117 = vmatprep.subr.mxu0 0.0
        %4118 = vmatpush1.xpose.msra.mxu0 %v2845
        %4119 = vmatprep.subr.mxu0 0.0
        %4120 = vmatpush1.xpose.msra.mxu0 %v2844
        %4121 = vmatprep.subr.mxu0 0.0
        %4122 = vmatpush1.xpose.msra.mxu0 %v2843
        %4123 = vmatprep.subr.mxu0 0.0
        %4124 = vmatpush1.xpose.msra.mxu0 %v2842
        %4125 = vmatprep.subr.mxu0 0.0
        %4126 = vmatpush1.xpose.msra.mxu0 %v2841
        %4127 = vmatprep.subr.mxu0 0.0
        %4128 = vmatpush1.xpose.msra.mxu0 %v2840
        %4129 = vmatprep.subr.mxu0 0.0
        %4130 = vmatpush1.xpose.msra.mxu0 %v2839
        %4131 = vmatprep.subr.mxu0 0.0
        %4132 = vmatpush1.xpose.msra.mxu0 %v2838
        %4133 = vmatprep.subr.mxu0 0.0
        %4134 = vmatpush1.xpose.msra.mxu0 %v2837
        %4135 = vmatprep.subr.mxu0 0.0
        %4136 = vmatpush1.xpose.msra.mxu0 %v2836
        %4137 = vmatprep.subr.mxu0 0.0
        %4138 = vmatpush1.xpose.msra.mxu0 %v2835
        %4139 = vmatprep.subr.mxu0 0.0
        %4140 = vmatpush2.xpose.msra.mxu0 0.0
        %4141 = vmatprep.subr.mxu0 0.0
        %4142 = vmatpush2.xpose.msra.mxu0 0.0
        %4143 = vmatprep.subr.mxu0 0.0
        %4144 = vmatpush2.xpose.msra.mxu0 0.0
        %4145 = vmatprep.subr.mxu0 0.0
        %4146 = vmatpush2.xpose.msra.mxu0 0.0
        %4147 = vmatprep.subr.mxu0 0.0
        %4148 = vmatpush2.xpose.msra.mxu0 0.0
        %4149 = vmatprep.subr.mxu0 0.0
        %4150 = vmatpush2.xpose.msra.mxu0 0.0
        %4151 = vmatprep.subr.mxu0 0.0
        %4152 = vmatpush2.xpose.msra.mxu0 0.0
        %4153 = vmatprep.subr.mxu0 0.0
        %4154 = vmatpush2.xpose.msra.mxu0 0.0
        %4155 = vmatprep.subr.mxu0 0.0
        %4156 = vmatpush2.xpose.msra.mxu0 0.0
        %4157 = vmatprep.subr.mxu0 0.0
        %4158 = vmatpush2.xpose.msra.mxu0 0.0
        %4159 = vmatprep.subr.mxu0 0.0
        %4160 = vmatpush2.xpose.msra.mxu0 0.0
        %4161 = vmatprep.subr.mxu0 0.0
        %4162 = vmatpush2.xpose.msra.mxu0 0.0
        %4163 = vmatprep.subr.mxu0 0.0
        %4164 = vmatpush2.xpose.msra.mxu0 0.0
        %4165 = vmatprep.subr.mxu0 0.0
        %4166 = vmatpush2.xpose.msra.mxu0 0.0
        %4167 = vmatprep.subr.mxu0 0.0
        %4168 = vmatpush2.xpose.msra.mxu0 0.0
        %4169 = vmatprep.subr.mxu0 0.0
        %4170 = vmatpush2.xpose.msra.mxu0 0.0
        %4171 = vmatprep.mubr.f32.mxu0 0.0
        %4172 = vmatmul.mubr.f32.gmra.mxu0 %v4068
        %v4173 = vpop.f32.mrf.mxu0
        %v4174 = vadd.f32 0.0, %v4173
        %v4175 = vpop.f32.mrf.mxu0
        %4176 = vmatprep.mubr.f32.mxu0 0.0
        %4177 = vmatmul.mubr.f32.gmra.mxu0 %v4073
        %v4178 = vpop.f32.mrf.mxu0
        %v4179 = vadd.f32 0.0, %v4178
        %v4180 = vpop.f32.mrf.mxu0
        %4181 = vmatprep.mubr.f32.mxu0 0.0
        %4182 = vmatmul.mubr.f32.gmra.mxu0 %v4078
        %v4183 = vpop.f32.mrf.mxu0
        %v4184 = vadd.f32 0.0, %v4183
        %v4185 = vpop.f32.mrf.mxu0
        %4186 = vmatprep.mubr.f32.mxu0 0.0
        %4187 = vmatmul.mubr.f32.gmra.mxu0 %v4083
        %v4188 = vpop.f32.mrf.mxu0
        %v4189 = vadd.f32 0.0, %v4188
        %v4190 = vpop.f32.mrf.mxu0
        %4191 = vmatprep.mubr.f32.mxu0 0.0
        %4192 = vmatmul.mubr.f32.gmra.mxu0 %v4106
        %v4193 = vpop.f32.mrf.mxu0
        %v4194 = vadd.f32 0.0, %v4193
        %v4195 = vpop.f32.mrf.mxu0
        %4196 = vdwg.mxu0
        %v4197 = vrcp.pop %v4194
        %v4198 = vmul.f32 %v4194, %v4197
        %v4199 = vsub.f32 2.0, %v4198
        %v4200 = vmul.f32 %v4197, %v4199
        %v4201 = vlaneseq
        %v4202 = vshrl.u32 %v4201, 7
        %v4203 = vsub.s32 0, %v4202
        %v4204 = vrot.slane %v4200, %v4203
        %v4205 = vmul.f32 %v4174, %v4204
        %v4206 = vmul.f32 %v4179, %v4204
        %v4207 = vmul.f32 %v4184, %v4204
        %v4208 = vmul.f32 %v4189, %v4204
        %s4209 = scalar_lea.vmem %s178, 96 [#allocation2]
        %4210 = vst [vmem:[%s4209] sm:$0xff] %v4205
        %4211 = vst [vmem:[%s4209 + $0x8] sm:$0xff] %v4206
        %4212 = vst [vmem:[%s4209 + $0x10] sm:$0xff] %v4207
        %4213 = vst [vmem:[%s4209 + $0x18] sm:$0xff] %v4208
        %s4214 = sand.u32 %s98, 1
        %s4215 = scalar_lea.sflag [#allocation3], %s4214
        %s4216 = sand.u32 %s98, 1
        %s4217 = smul.addr %s4216, 128
        %s4218 = scalar_lea.vmem [#allocation2], %s4217
        // Predicated region
        $region33: #{tpu_custom_call.1} parent=31 // pred_check
          %p4219 = pneg %p108
        $region34: #{tpu_custom_call.1} parent=31 // pred_check_branch
          %4221 = sbr.rel (%p4219) target = $region36
        $region35: #{tpu_custom_call.1} parent=31 // pred_region
          %s4223 = ssub.s32 2048, 2048
          %4224 = vsyncadd %s4215, %s4223
          %s4225 = smul.addr %s17, 16
          %s4226 = smul.addr %s4225, 128
          %s4227 = scalar_lea.hbm %s3, %s4226
          %s4228 = sshll.u32 %s4218, 4
          %s4229 = int_to_ptr.vmem [resolvable:$true] %s4228
          %4234 = dma.vmem_to_hbm [thread:$0]  %s4229, 2048, %s4227, %s4215, 128, 128, 8
        $region36: #{tpu_custom_call.1} parent=31 // pred_fallthru
          _
      $region32: #{tpu_custom_call.1} parent=5 // pred_fallthru
        _
      %p4235 = scmp.le.s32.totalorder 2, %s12
      // Predicated region
      $region37: #{tpu_custom_call.1} parent=5 // pred_check
        %p4236 = pneg %p4235
      $region38: #{tpu_custom_call.1} parent=5 // pred_check_branch
        %4238 = sbr.rel (%p4236) target = $region40
      $region39: #{tpu_custom_call.1} parent=5 // pred_region
        %s4239 = ssub.s32 %s12, 2
        // Predicated region
        $region41: #{tpu_custom_call.1} parent=39 // pred_check
          %p4240 = pneg %p114
        $region42: #{tpu_custom_call.1} parent=39 // pred_check_branch
          %4242 = sbr.rel (%p4240) target = $region44
        $region43: #{tpu_custom_call.1} parent=39 // pred_region
          %s4243 = sand.u32 %s99, 1
          %s4244 = scalar_lea.sflag [#allocation3], %s4243
          %s4245 = sand.u32 %s99, 1
          %s4246 = smul.addr %s4245, 128
          %s4247 = scalar_lea.vmem [#allocation2], %s4246
          %4248 = dma.done %s4244, 2048
        $region44: #{tpu_custom_call.1} parent=39 // pred_fallthru
          _
      $region40: #{tpu_custom_call.1} parent=5 // pred_fallthru
        _
    $region6: #{tpu_custom_call.1} parent=1 // loop_footer
      %s16 = sadd.s32 1, %s12
    $region7: #{tpu_custom_call.1} parent=1 // loop_footer_branch
      %11 = sbr.rel target = $region3
    $region8: #{tpu_custom_call.1} parent=1 // loop_exit
      _
    %4249 = vsyncpa [#allocation3], 1
    %s4250 = scalar_lea.sflag [#allocation3], 1
    %4251 = vsyncpa %s4250, 1

</llo_original>
